<compile_context>
chip_gen: v5e
topology: v5e:2x2
jax: 0.10.0
libtpu: 0.0.40
codegen_flags: <defaults>
</compile_context>

<pallas_src>
import jax
import jax.numpy as jnp
from jax.experimental import pallas as pl
from jax.experimental.pallas import tpu as pltpu

EPS = 1e-5
LANE = 128


def _round_up(x, m):
    return (x + m - 1) // m * m


# ----------------------------- Pallas kernel --------------------------------

def _residual_kernel(p1_ref, wcat_ref, w2_ref, bnp_ref, o_ref, y1pad_ref):
    m_rows, cp = o_ref.shape
    nb, hp, wp, _ = y1pad_ref.shape
    ho, wo = hp - 2, wp - 2
    inv_m = 1.0 / m_rows

    bnp = bnp_ref[...]                       # (8, Cp): g1, be1, g2, be2, b_skip, pad...

    # conv1 + skip (1x1 projection or identity) in ONE lane-dense bf16 MXU matmul.
    y = jnp.dot(p1_ref[...], wcat_ref[...], preferred_element_type=jnp.float32)
    y1 = y[:, :cp]                           # conv1 pre-BN (bias dropped: BN cancels it)
    skip = y[:, cp:] + bnp[4:5, :]           # skip path (+ conv3 bias, 0 for identity)

    # BN1 (training-mode batch stats) folded to per-channel scale/shift, then ReLU.
    s1 = jnp.sum(y1, axis=0, keepdims=True) * inv_m
    q1 = jnp.sum(y1 * y1, axis=0, keepdims=True) * inv_m
    v1 = jnp.maximum(q1 - s1 * s1, 0.0)
    sc1 = bnp[0:1, :] * jax.lax.rsqrt(v1 + EPS)
    sh1 = bnp[1:2, :] - sc1 * s1
    a1 = jnp.maximum(y1 * sc1 + sh1, 0.0)    # ReLU(BN1(conv1)), f32, (M, Cp)

    # Stage a1 into a spatially zero-padded VMEM scratch (conv2 padding=1 halo).
    y1pad_ref[...] = jnp.zeros(y1pad_ref.shape, y1pad_ref.dtype)
    y1pad_ref[:, 1:1 + ho, 1:1 + wo, :] = a1.reshape(nb, ho, wo, cp)
    y1pad = y1pad_ref[...]

    # conv2: 9 shifted-slice bf16 matmuls accumulated in f32 (y1 never leaves VMEM).
    acc = None
    for t in range(9):
        kh, kw = t // 3, t % 3
        tap = y1pad[:, kh:kh + ho, kw:kw + wo, :].reshape(m_rows, cp)
        part = jnp.dot(tap.astype(w2_ref.dtype), w2_ref[t],
                       preferred_element_type=jnp.float32)
        acc = part if acc is None else acc + part

    # BN2 folded + skip add + ReLU; output store is lane-dense (Cp multiple of 128).
    s2 = jnp.sum(acc, axis=0, keepdims=True) * inv_m
    q2 = jnp.sum(acc * acc, axis=0, keepdims=True) * inv_m
    v2 = jnp.maximum(q2 - s2 * s2, 0.0)
    sc2 = bnp[2:3, :] * jax.lax.rsqrt(v2 + EPS)
    sh2 = bnp[3:4, :] - sc2 * s2
    o_ref[...] = jnp.maximum(acc * sc2 + sh2 + skip, 0.0)


# ------------------------------ JAX glue -------------------------------------

def _im2col(x, ksize, stride, padding):
    """x: (N, H, W, C) -> patches (N*Ho*Wo, ksize*ksize*C), tap order (kh, kw, c)."""
    n, h, w, c = x.shape
    xp = jnp.pad(x, ((0, 0), (padding, padding), (padding, padding), (0, 0)))
    ho = (h + 2 * padding - ksize) // stride + 1
    wo = (w + 2 * padding - ksize) // stride + 1
    cols = []
    for kh in range(ksize):
        for kw in range(ksize):
            cols.append(xp[:, kh:kh + (ho - 1) * stride + 1:stride,
                           kw:kw + (wo - 1) * stride + 1:stride, :])
    patches = jnp.stack(cols, axis=3)                      # (N, Ho, Wo, k*k, C)
    return patches.reshape(n * ho * wo, ksize * ksize * c), ho, wo


def residual_forward(x_nchw, params, use_1x1conv, stride):
    x = jnp.transpose(x_nchw, (0, 2, 3, 1)).astype(jnp.float32)   # NCHW -> NHWC
    n, h, w, cin = x.shape
    cout = params["w1"].shape[-1]
    cp = _round_up(cout, LANE)               # lane-dense channel count
    k1 = 9 * cin
    kp = _round_up(k1, LANE)                 # lane-dense conv1 reduction dim

    p1, ho, wo = _im2col(x, 3, stride, 1)    # only x is im2col'ed (not y1)
    m = n * ho * wo

    # conv1 weight, K- and Cout-zero-padded.
    w1p = jnp.zeros((kp, cp), jnp.float32).at[:k1, :cout].set(
        params["w1"].reshape(k1, cout))
    # Skip "weight": acts on the centre-tap columns [4*cin : 5*cin] of p1, which equal
    # x[:, ::stride, ::stride, :] for a 3x3/pad-1/stride-s conv.
    wskip = jnp.zeros((kp, cp), jnp.float32)
    bskip = jnp.zeros((cp,), jnp.float32)
    if use_1x1conv:
        wskip = wskip.at[4 * cin:5 * cin, :cout].set(params["w3"].reshape(cin, cout))
        bskip = bskip.at[:cout].set(params["b3"])
    else:
        assert cin == cout, "identity skip requires in_channels == out_channels"
        wskip = wskip.at[4 * cin + jnp.arange(cin), jnp.arange(cin)].set(1.0)
    wcat = jnp.concatenate([w1p, wskip], axis=1).astype(jnp.bfloat16)   # (Kp, 2*Cp)

    w2p = jnp.zeros((9, cp, cp), jnp.float32).at[:, :cout, :cout].set(
        params["w2"].reshape(9, cout, cout)).astype(jnp.bfloat16)

    # Packed BN / skip-bias params (padded channels get 0 scale/shift -> stay 0).
    bnp = jnp.zeros((8, cp), jnp.float32)
    bnp = bnp.at[0, :cout].set(params["g1"])
    bnp = bnp.at[1, :cout].set(params["be1"])
    bnp = bnp.at[2, :cout].set(params["g2"])
    bnp = bnp.at[3, :cout].set(params["be2"])
    bnp = bnp.at[4, :].set(bskip)

    p1p = jnp.pad(p1, ((0, 0), (0, kp - k1))).astype(jnp.bfloat16)      # (M, Kp)

    # Advisory cost model for XLA's scheduler around the custom call.
    flops = 2 * m * kp * (2 * cp) + 9 * 2 * m * cp * cp + 12 * m * cp
    bytes_accessed = (p1p.size + wcat.size + w2p.size) * 2 + bnp.size * 4 + m * cp * 4
    cost = pl.CostEstimate(flops=flops, transcendentals=2 * cp,
                           bytes_accessed=bytes_accessed)

    vmem = pl.BlockSpec(memory_space=pltpu.MemorySpace.VMEM)
    out_p = pl.pallas_call(
        _residual_kernel,
        out_shape=jax.ShapeDtypeStruct((m, cp), jnp.float32),
        in_specs=[vmem, vmem, vmem, vmem],
        out_specs=vmem,
        scratch_shapes=[pltpu.VMEM((n, ho + 2, wo + 2, cp), jnp.float32)],
        cost_estimate=cost,
    )(p1p, wcat, w2p, bnp)

    out = out_p[:, :cout].reshape(n, ho, wo, cout)
    return jnp.transpose(out, (0, 3, 1, 2))                              # NHWC -> NCHW


# ------------------------- parameters & reference ----------------------------

def init_residual_params(key, in_channels, out_channels, use_1x1conv):
    ks = jax.random.split(key, 10)
    p = {
        "w1": 0.2 * jax.random.normal(ks[0], (3, 3, in_channels, out_channels), jnp.float32),
        "b1": 0.1 * jax.random.normal(ks[1], (out_channels,), jnp.float32),
        "w2": 0.2 * jax.random.normal(ks[2], (3, 3, out_channels, out_channels), jnp.float32),
        "b2": 0.1 * jax.random.normal(ks[3], (out_channels,), jnp.float32),
        "g1": 1.0 + 0.1 * jax.random.normal(ks[4], (out_channels,), jnp.float32),
        "be1": 0.1 * jax.random.normal(ks[5], (out_channels,), jnp.float32),
        "g2": 1.0 + 0.1 * jax.random.normal(ks[6], (out_channels,), jnp.float32),
        "be2": 0.1 * jax.random.normal(ks[7], (out_channels,), jnp.float32),
    }
    if use_1x1conv:
        p["w3"] = 0.2 * jax.random.normal(ks[8], (1, 1, in_channels, out_channels), jnp.float32)
        p["b3"] = 0.1 * jax.random.normal(ks[9], (out_channels,), jnp.float32)
    return p


def residual_reference(x_nchw, params, use_1x1conv, stride):
    x = jnp.transpose(x_nchw, (0, 2, 3, 1)).astype(jnp.float32)

    def conv(xx, w, b, s, pad):
        y = jax.lax.conv_general_dilated(
            xx, w, (s, s), [(pad, pad), (pad, pad)],
            dimension_numbers=("NHWC", "HWIO", "NHWC"))
        return y + b.reshape(1, 1, 1, -1)

    def bn(y, g, be):
        mu = jnp.mean(y, axis=(0, 1, 2), keepdims=True)
        va = jnp.mean((y - mu) ** 2, axis=(0, 1, 2), keepdims=True)
        return g.reshape(1, 1, 1, -1) * (y - mu) / jnp.sqrt(va + EPS) + be.reshape(1, 1, 1, -1)

    y = jax.nn.relu(bn(conv(x, params["w1"], params["b1"], stride, 1),
                       params["g1"], params["be1"]))
    y = bn(conv(y, params["w2"], params["b2"], 1, 1), params["g2"], params["be2"])
    if use_1x1conv:
        x = conv(x, params["w3"], params["b3"], stride, 0)
    return jnp.transpose(jax.nn.relu(y + x), (0, 3, 1, 2))


# ---------------------------------- main --------------------------------------

if __name__ == "__main__":
    key = jax.random.PRNGKey(0)
    k_x, k_p = jax.random.split(key)

    N, CIN, H, W = 2, 4, 16, 16
    COUT, USE_1X1, STRIDE = 8, True, 1

    x = jax.random.normal(k_x, (N, CIN, H, W), jnp.float32)          # NCHW, like PyTorch
    params = init_residual_params(k_p, CIN, COUT, USE_1X1)

    out = jax.block_until_ready(residual_forward(x, params, USE_1X1, STRIDE))
    ref = jax.block_until_ready(residual_reference(x, params, USE_1X1, STRIDE))

    assert out.shape == ref.shape, (out.shape, ref.shape)
    max_err = float(jnp.max(jnp.abs(out - ref)))
    # bf16 MXU operands (f32 accumulation / f32 BN math) vs. full-f32 reference.
    assert max_err < 1e-1, f"max abs error too large: {max_err}"

    print("KERNEL_OK")
</pallas_src>

<mosaic_0001>
module attributes {stable_mosaic.version = 11 : i64} {
  func.func @_residual_kernel(%arg0: memref<512x128xbf16, #tpu.memory_space<vmem>>, %arg1: memref<128x256xbf16, #tpu.memory_space<vmem>>, %arg2: memref<9x128x128xbf16, #tpu.memory_space<vmem>>, %arg3: memref<8x128xf32, #tpu.memory_space<vmem>>, %arg4: memref<512x128xf32, #tpu.memory_space<vmem>>, %arg5: memref<2x18x18x128xf32, #tpu.memory_space<vmem>>) attributes {dimension_semantics = [], scalar_prefetch = 0 : i64, scratch_operands = 1 : i64, tpu.core_type = #tpu.core_type<tc>} {
    %c0 = arith.constant 0 : index
    %c0_0 = arith.constant 0 : index
    %0 = vector.load %arg3[%c0, %c0_0] : memref<8x128xf32, #tpu.memory_space<vmem>>, vector<8x128xf32>
    %c0_1 = arith.constant 0 : index
    %c0_2 = arith.constant 0 : index
    %1 = vector.load %arg0[%c0_1, %c0_2] : memref<512x128xbf16, #tpu.memory_space<vmem>>, vector<512x128xbf16>
    %c0_3 = arith.constant 0 : index
    %c0_4 = arith.constant 0 : index
    %2 = vector.load %arg1[%c0_3, %c0_4] : memref<128x256xbf16, #tpu.memory_space<vmem>>, vector<128x256xbf16>
    %cst = arith.constant dense<0.000000e+00> : vector<512x256xf32>
    %3 = tpu.matmul %1, %2, %cst {dimension_numbers = #tpu.dot_dimension_numbers<[1], [0], [0], [1], [0, 0, 1, 1], [], []>} : vector<512x128xbf16>, vector<128x256xbf16>, vector<512x256xf32> -> vector<512x256xf32>
    %4 = vector.extract_strided_slice %3 {offsets = [0, 0], sizes = [512, 128], strides = [1, 1]} : vector<512x256xf32> to vector<512x128xf32>
    %5 = vector.extract_strided_slice %3 {offsets = [0, 128], sizes = [512, 128], strides = [1, 1]} : vector<512x256xf32> to vector<512x128xf32>
    %6 = vector.extract_strided_slice %0 {offsets = [4, 0], sizes = [1, 128], strides = [1, 1]} : vector<8x128xf32> to vector<1x128xf32>
    %7 = vector.broadcast %6 : vector<1x128xf32> to vector<512x128xf32>
    %8 = arith.addf %5, %7 : vector<512x128xf32>
    %cst_5 = arith.constant dense<0.000000e+00> : vector<128xf32>
    %9 = vector.multi_reduction <add>, %4, %cst_5 [0] : vector<512x128xf32> to vector<128xf32>
    %10 = vector.shape_cast %9 : vector<128xf32> to vector<1x128xf32>
    %cst_6 = arith.constant 0.001953125 : f32
    %11 = vector.broadcast %cst_6 : f32 to vector<1x128xf32>
    %12 = arith.mulf %10, %11 : vector<1x128xf32>
    %13 = arith.mulf %4, %4 : vector<512x128xf32>
    %cst_7 = arith.constant dense<0.000000e+00> : vector<128xf32>
    %14 = vector.multi_reduction <add>, %13, %cst_7 [0] : vector<512x128xf32> to vector<128xf32>
    %15 = vector.shape_cast %14 : vector<128xf32> to vector<1x128xf32>
    %cst_8 = arith.constant 0.001953125 : f32
    %16 = vector.broadcast %cst_8 : f32 to vector<1x128xf32>
    %17 = arith.mulf %15, %16 : vector<1x128xf32>
    %18 = arith.mulf %12, %12 : vector<1x128xf32>
    %19 = arith.subf %17, %18 : vector<1x128xf32>
    %cst_9 = arith.constant 0.000000e+00 : f32
    %20 = vector.broadcast %cst_9 : f32 to vector<1x128xf32>
    %21 = arith.maximumf %19, %20 : vector<1x128xf32>
    %22 = vector.extract_strided_slice %0 {offsets = [0, 0], sizes = [1, 128], strides = [1, 1]} : vector<8x128xf32> to vector<1x128xf32>
    %cst_10 = arith.constant 9.99999974E-6 : f32
    %23 = vector.broadcast %cst_10 : f32 to vector<1x128xf32>
    %24 = arith.addf %21, %23 : vector<1x128xf32>
    %25 = math.rsqrt %24 : vector<1x128xf32>
    %26 = arith.mulf %22, %25 : vector<1x128xf32>
    %27 = vector.extract_strided_slice %0 {offsets = [1, 0], sizes = [1, 128], strides = [1, 1]} : vector<8x128xf32> to vector<1x128xf32>
    %28 = arith.mulf %26, %12 : vector<1x128xf32>
    %29 = arith.subf %27, %28 : vector<1x128xf32>
    %30 = vector.broadcast %26 : vector<1x128xf32> to vector<512x128xf32>
    %31 = arith.mulf %4, %30 : vector<512x128xf32>
    %32 = vector.broadcast %29 : vector<1x128xf32> to vector<512x128xf32>
    %33 = arith.addf %31, %32 : vector<512x128xf32>
    %cst_11 = arith.constant 0.000000e+00 : f32
    %34 = vector.broadcast %cst_11 : f32 to vector<512x128xf32>
    %35 = arith.maximumf %33, %34 : vector<512x128xf32>
    %cst_12 = arith.constant 0.000000e+00 : f32
    %36 = vector.broadcast %cst_12 : f32 to vector<2x18x18x128xf32>
    %c0_13 = arith.constant 0 : index
    %c0_14 = arith.constant 0 : index
    %c0_15 = arith.constant 0 : index
    %c0_16 = arith.constant 0 : index
    %37 = vector.load %arg5[%c0_13, %c0_14, %c0_15, %c0_16] : memref<2x18x18x128xf32, #tpu.memory_space<vmem>>, vector<2x18x18x128xf32>
    tpu.vector_store %arg5[%c0_13, %c0_14, %c0_15, %c0_16], %36 {strides = array<i32>} : memref<2x18x18x128xf32, #tpu.memory_space<vmem>>, vector<2x18x18x128xf32>,
    %38 = vector.shape_cast %35 : vector<512x128xf32> to vector<2x16x16x128xf32>
    %c0_17 = arith.constant 0 : index
    %c1 = arith.constant 1 : index
    %c1_18 = arith.constant 1 : index
    %c0_19 = arith.constant 0 : index
    %39 = vector.load %arg5[%c0_17, %c1, %c1_18, %c0_19] : memref<2x18x18x128xf32, #tpu.memory_space<vmem>>, vector<2x16x16x128xf32>
    tpu.vector_store %arg5[%c0_17, %c1, %c1_18, %c0_19], %38 {strides = array<i32>} : memref<2x18x18x128xf32, #tpu.memory_space<vmem>>, vector<2x16x16x128xf32>,
    %c0_20 = arith.constant 0 : index
    %c0_21 = arith.constant 0 : index
    %c0_22 = arith.constant 0 : index
    %c0_23 = arith.constant 0 : index
    %40 = vector.load %arg5[%c0_20, %c0_21, %c0_22, %c0_23] : memref<2x18x18x128xf32, #tpu.memory_space<vmem>>, vector<2x18x18x128xf32>
    %41 = vector.extract_strided_slice %40 {offsets = [0, 0, 0, 0], sizes = [2, 16, 16, 128], strides = [1, 1, 1, 1]} : vector<2x18x18x128xf32> to vector<2x16x16x128xf32>
    %42 = vector.shape_cast %41 : vector<2x16x16x128xf32> to vector<512x128xf32>
    %43 = arith.truncf %42 : vector<512x128xf32> to vector<512x128xbf16>
    %c0_24 = arith.constant 0 : index
    %c0_25 = arith.constant 0 : index
    %c0_26 = arith.constant 0 : index
    %44 = vector.load %arg2[%c0_24, %c0_25, %c0_26] : memref<9x128x128xbf16, #tpu.memory_space<vmem>>, vector<1x128x128xbf16>
    %45 = vector.shape_cast %44 : vector<1x128x128xbf16> to vector<128x128xbf16>
    %cst_27 = arith.constant dense<0.000000e+00> : vector<512x128xf32>
    %46 = tpu.matmul %43, %45, %cst_27 {dimension_numbers = #tpu.dot_dimension_numbers<[1], [0], [0], [1], [0, 0, 1, 1], [], []>} : vector<512x128xbf16>, vector<128x128xbf16>, vector<512x128xf32> -> vector<512x128xf32>
    %47 = vector.extract_strided_slice %40 {offsets = [0, 0, 1, 0], sizes = [2, 16, 16, 128], strides = [1, 1, 1, 1]} : vector<2x18x18x128xf32> to vector<2x16x16x128xf32>
    %48 = vector.shape_cast %47 : vector<2x16x16x128xf32> to vector<512x128xf32>
    %49 = arith.truncf %48 : vector<512x128xf32> to vector<512x128xbf16>
    %c1_28 = arith.constant 1 : index
    %c0_29 = arith.constant 0 : index
    %c0_30 = arith.constant 0 : index
    %50 = vector.load %arg2[%c1_28, %c0_29, %c0_30] : memref<9x128x128xbf16, #tpu.memory_space<vmem>>, vector<1x128x128xbf16>
    %51 = vector.shape_cast %50 : vector<1x128x128xbf16> to vector<128x128xbf16>
    %cst_31 = arith.constant dense<0.000000e+00> : vector<512x128xf32>
    %52 = tpu.matmul %49, %51, %cst_31 {dimension_numbers = #tpu.dot_dimension_numbers<[1], [0], [0], [1], [0, 0, 1, 1], [], []>} : vector<512x128xbf16>, vector<128x128xbf16>, vector<512x128xf32> -> vector<512x128xf32>
    %53 = arith.addf %46, %52 : vector<512x128xf32>
    %54 = vector.extract_strided_slice %40 {offsets = [0, 0, 2, 0], sizes = [2, 16, 16, 128], strides = [1, 1, 1, 1]} : vector<2x18x18x128xf32> to vector<2x16x16x128xf32>
    %55 = vector.shape_cast %54 : vector<2x16x16x128xf32> to vector<512x128xf32>
    %56 = arith.truncf %55 : vector<512x128xf32> to vector<512x128xbf16>
    %c2 = arith.constant 2 : index
    %c0_32 = arith.constant 0 : index
    %c0_33 = arith.constant 0 : index
    %57 = vector.load %arg2[%c2, %c0_32, %c0_33] : memref<9x128x128xbf16, #tpu.memory_space<vmem>>, vector<1x128x128xbf16>
    %58 = vector.shape_cast %57 : vector<1x128x128xbf16> to vector<128x128xbf16>
    %cst_34 = arith.constant dense<0.000000e+00> : vector<512x128xf32>
    %59 = tpu.matmul %56, %58, %cst_34 {dimension_numbers = #tpu.dot_dimension_numbers<[1], [0], [0], [1], [0, 0, 1, 1], [], []>} : vector<512x128xbf16>, vector<128x128xbf16>, vector<512x128xf32> -> vector<512x128xf32>
    %60 = arith.addf %53, %59 : vector<512x128xf32>
    %61 = vector.extract_strided_slice %40 {offsets = [0, 1, 0, 0], sizes = [2, 16, 16, 128], strides = [1, 1, 1, 1]} : vector<2x18x18x128xf32> to vector<2x16x16x128xf32>
    %62 = vector.shape_cast %61 : vector<2x16x16x128xf32> to vector<512x128xf32>
    %63 = arith.truncf %62 : vector<512x128xf32> to vector<512x128xbf16>
    %c3 = arith.constant 3 : index
    %c0_35 = arith.constant 0 : index
    %c0_36 = arith.constant 0 : index
    %64 = vector.load %arg2[%c3, %c0_35, %c0_36] : memref<9x128x128xbf16, #tpu.memory_space<vmem>>, vector<1x128x128xbf16>
    %65 = vector.shape_cast %64 : vector<1x128x128xbf16> to vector<128x128xbf16>
    %cst_37 = arith.constant dense<0.000000e+00> : vector<512x128xf32>
    %66 = tpu.matmul %63, %65, %cst_37 {dimension_numbers = #tpu.dot_dimension_numbers<[1], [0], [0], [1], [0, 0, 1, 1], [], []>} : vector<512x128xbf16>, vector<128x128xbf16>, vector<512x128xf32> -> vector<512x128xf32>
    %67 = arith.addf %60, %66 : vector<512x128xf32>
    %68 = vector.extract_strided_slice %40 {offsets = [0, 1, 1, 0], sizes = [2, 16, 16, 128], strides = [1, 1, 1, 1]} : vector<2x18x18x128xf32> to vector<2x16x16x128xf32>
    %69 = vector.shape_cast %68 : vector<2x16x16x128xf32> to vector<512x128xf32>
    %70 = arith.truncf %69 : vector<512x128xf32> to vector<512x128xbf16>
    %c4 = arith.constant 4 : index
    %c0_38 = arith.constant 0 : index
    %c0_39 = arith.constant 0 : index
    %71 = vector.load %arg2[%c4, %c0_38, %c0_39] : memref<9x128x128xbf16, #tpu.memory_space<vmem>>, vector<1x128x128xbf16>
    %72 = vector.shape_cast %71 : vector<1x128x128xbf16> to vector<128x128xbf16>
    %cst_40 = arith.constant dense<0.000000e+00> : vector<512x128xf32>
    %73 = tpu.matmul %70, %72, %cst_40 {dimension_numbers = #tpu.dot_dimension_numbers<[1], [0], [0], [1], [0, 0, 1, 1], [], []>} : vector<512x128xbf16>, vector<128x128xbf16>, vector<512x128xf32> -> vector<512x128xf32>
    %74 = arith.addf %67, %73 : vector<512x128xf32>
    %75 = vector.extract_strided_slice %40 {offsets = [0, 1, 2, 0], sizes = [2, 16, 16, 128], strides = [1, 1, 1, 1]} : vector<2x18x18x128xf32> to vector<2x16x16x128xf32>
    %76 = vector.shape_cast %75 : vector<2x16x16x128xf32> to vector<512x128xf32>
    %77 = arith.truncf %76 : vector<512x128xf32> to vector<512x128xbf16>
    %c5 = arith.constant 5 : index
    %c0_41 = arith.constant 0 : index
    %c0_42 = arith.constant 0 : index
    %78 = vector.load %arg2[%c5, %c0_41, %c0_42] : memref<9x128x128xbf16, #tpu.memory_space<vmem>>, vector<1x128x128xbf16>
    %79 = vector.shape_cast %78 : vector<1x128x128xbf16> to vector<128x128xbf16>
    %cst_43 = arith.constant dense<0.000000e+00> : vector<512x128xf32>
    %80 = tpu.matmul %77, %79, %cst_43 {dimension_numbers = #tpu.dot_dimension_numbers<[1], [0], [0], [1], [0, 0, 1, 1], [], []>} : vector<512x128xbf16>, vector<128x128xbf16>, vector<512x128xf32> -> vector<512x128xf32>
    %81 = arith.addf %74, %80 : vector<512x128xf32>
    %82 = vector.extract_strided_slice %40 {offsets = [0, 2, 0, 0], sizes = [2, 16, 16, 128], strides = [1, 1, 1, 1]} : vector<2x18x18x128xf32> to vector<2x16x16x128xf32>
    %83 = vector.shape_cast %82 : vector<2x16x16x128xf32> to vector<512x128xf32>
    %84 = arith.truncf %83 : vector<512x128xf32> to vector<512x128xbf16>
    %c6 = arith.constant 6 : index
    %c0_44 = arith.constant 0 : index
    %c0_45 = arith.constant 0 : index
    %85 = vector.load %arg2[%c6, %c0_44, %c0_45] : memref<9x128x128xbf16, #tpu.memory_space<vmem>>, vector<1x128x128xbf16>
    %86 = vector.shape_cast %85 : vector<1x128x128xbf16> to vector<128x128xbf16>
    %cst_46 = arith.constant dense<0.000000e+00> : vector<512x128xf32>
    %87 = tpu.matmul %84, %86, %cst_46 {dimension_numbers = #tpu.dot_dimension_numbers<[1], [0], [0], [1], [0, 0, 1, 1], [], []>} : vector<512x128xbf16>, vector<128x128xbf16>, vector<512x128xf32> -> vector<512x128xf32>
    %88 = arith.addf %81, %87 : vector<512x128xf32>
    %89 = vector.extract_strided_slice %40 {offsets = [0, 2, 1, 0], sizes = [2, 16, 16, 128], strides = [1, 1, 1, 1]} : vector<2x18x18x128xf32> to vector<2x16x16x128xf32>
    %90 = vector.shape_cast %89 : vector<2x16x16x128xf32> to vector<512x128xf32>
    %91 = arith.truncf %90 : vector<512x128xf32> to vector<512x128xbf16>
    %c7 = arith.constant 7 : index
    %c0_47 = arith.constant 0 : index
    %c0_48 = arith.constant 0 : index
    %92 = vector.load %arg2[%c7, %c0_47, %c0_48] : memref<9x128x128xbf16, #tpu.memory_space<vmem>>, vector<1x128x128xbf16>
    %93 = vector.shape_cast %92 : vector<1x128x128xbf16> to vector<128x128xbf16>
    %cst_49 = arith.constant dense<0.000000e+00> : vector<512x128xf32>
    %94 = tpu.matmul %91, %93, %cst_49 {dimension_numbers = #tpu.dot_dimension_numbers<[1], [0], [0], [1], [0, 0, 1, 1], [], []>} : vector<512x128xbf16>, vector<128x128xbf16>, vector<512x128xf32> -> vector<512x128xf32>
    %95 = arith.addf %88, %94 : vector<512x128xf32>
    %96 = vector.extract_strided_slice %40 {offsets = [0, 2, 2, 0], sizes = [2, 16, 16, 128], strides = [1, 1, 1, 1]} : vector<2x18x18x128xf32> to vector<2x16x16x128xf32>
    %97 = vector.shape_cast %96 : vector<2x16x16x128xf32> to vector<512x128xf32>
    %98 = arith.truncf %97 : vector<512x128xf32> to vector<512x128xbf16>
    %c8 = arith.constant 8 : index
    %c0_50 = arith.constant 0 : index
    %c0_51 = arith.constant 0 : index
    %99 = vector.load %arg2[%c8, %c0_50, %c0_51] : memref<9x128x128xbf16, #tpu.memory_space<vmem>>, vector<1x128x128xbf16>
    %100 = vector.shape_cast %99 : vector<1x128x128xbf16> to vector<128x128xbf16>
    %cst_52 = arith.constant dense<0.000000e+00> : vector<512x128xf32>
    %101 = tpu.matmul %98, %100, %cst_52 {dimension_numbers = #tpu.dot_dimension_numbers<[1], [0], [0], [1], [0, 0, 1, 1], [], []>} : vector<512x128xbf16>, vector<128x128xbf16>, vector<512x128xf32> -> vector<512x128xf32>
    %102 = arith.addf %95, %101 : vector<512x128xf32>
    %cst_53 = arith.constant dense<0.000000e+00> : vector<128xf32>
    %103 = vector.multi_reduction <add>, %102, %cst_53 [0] : vector<512x128xf32> to vector<128xf32>
    %104 = vector.shape_cast %103 : vector<128xf32> to vector<1x128xf32>
    %cst_54 = arith.constant 0.001953125 : f32
    %105 = vector.broadcast %cst_54 : f32 to vector<1x128xf32>
    %106 = arith.mulf %104, %105 : vector<1x128xf32>
    %107 = arith.mulf %102, %102 : vector<512x128xf32>
    %cst_55 = arith.constant dense<0.000000e+00> : vector<128xf32>
    %108 = vector.multi_reduction <add>, %107, %cst_55 [0] : vector<512x128xf32> to vector<128xf32>
    %109 = vector.shape_cast %108 : vector<128xf32> to vector<1x128xf32>
    %cst_56 = arith.constant 0.001953125 : f32
    %110 = vector.broadcast %cst_56 : f32 to vector<1x128xf32>
    %111 = arith.mulf %109, %110 : vector<1x128xf32>
    %112 = arith.mulf %106, %106 : vector<1x128xf32>
    %113 = arith.subf %111, %112 : vector<1x128xf32>
    %cst_57 = arith.constant 0.000000e+00 : f32
    %114 = vector.broadcast %cst_57 : f32 to vector<1x128xf32>
    %115 = arith.maximumf %113, %114 : vector<1x128xf32>
    %116 = vector.extract_strided_slice %0 {offsets = [2, 0], sizes = [1, 128], strides = [1, 1]} : vector<8x128xf32> to vector<1x128xf32>
    %cst_58 = arith.constant 9.99999974E-6 : f32
    %117 = vector.broadcast %cst_58 : f32 to vector<1x128xf32>
    %118 = arith.addf %115, %117 : vector<1x128xf32>
    %119 = math.rsqrt %118 : vector<1x128xf32>
    %120 = arith.mulf %116, %119 : vector<1x128xf32>
    %121 = vector.extract_strided_slice %0 {offsets = [3, 0], sizes = [1, 128], strides = [1, 1]} : vector<8x128xf32> to vector<1x128xf32>
    %122 = arith.mulf %120, %106 : vector<1x128xf32>
    %123 = arith.subf %121, %122 : vector<1x128xf32>
    %124 = vector.broadcast %120 : vector<1x128xf32> to vector<512x128xf32>
    %125 = arith.mulf %102, %124 : vector<512x128xf32>
    %126 = vector.broadcast %123 : vector<1x128xf32> to vector<512x128xf32>
    %127 = arith.addf %125, %126 : vector<512x128xf32>
    %128 = arith.addf %127, %8 : vector<512x128xf32>
    %cst_59 = arith.constant 0.000000e+00 : f32
    %129 = vector.broadcast %cst_59 : f32 to vector<512x128xf32>
    %130 = arith.maximumf %128, %129 : vector<512x128xf32>
    %c0_60 = arith.constant 0 : index
    %c0_61 = arith.constant 0 : index
    %131 = vector.load %arg4[%c0_60, %c0_61] : memref<512x128xf32, #tpu.memory_space<vmem>>, vector<512x128xf32>
    tpu.vector_store %arg4[%c0_60, %c0_61], %130 {strides = array<i32>} : memref<512x128xf32, #tpu.memory_space<vmem>>, vector<512x128xf32>,
    return
  }
}

</mosaic_0001>

<llo_original>
// kernel: tpu_custom_call.1
$region0: #{tpu_custom_call.1}
  #allocation0 [shape = 'u32[]', space=smem, size = 0x4, offset = 0x4, fixed_abs, tag = 'smem constant byte address 0x4 - core index']
  #allocation1 [shape = 'u32[72,128]{1,0:T(1,128)}', space=vmem, size = 0x9000, scoped, tag = 'internal scratch']
  #allocation2 [shape = 'f32[2,18,18,128]{3,2,1,0:T(8,128)}', space=vmem, size = 0x6c000, scoped, tag = 'scratch operand']
  %s0 = inlined_call_operand.hbm [shape: bf16[512,128], index: 0, kind: input, shape index: {}]
  %s1 = inlined_call_operand.hbm [shape: bf16[128,256], index: 1, kind: input, shape index: {}]
  %s2 = inlined_call_operand.hbm [shape: bf16[9,128,128], index: 2, kind: input, shape index: {}]
  %s3 = inlined_call_operand.hbm [shape: f32[8,128], index: 3, kind: input, shape index: {}]
  %s4 = inlined_call_operand.hbm [shape: f32[512,128], index: 4, kind: output, shape index: {}]
  %s5 = sld [smem:[#allocation0]]
  $region42: #{tpu_custom_call.1} parent=0
    _
  %s7 = ssub.s32 1, %s5
  %s8 = scalar_select 0, %s7, %s5
  $region1: #{tpu_custom_call.1} parent=0
    #allocation3 [shape = 'u8[131072]{0}', space=vmem, size = 0x20000, scoped, tag = 'input window, operand 0, single buffered']
    #allocation4 [shape = 's32[1]{0}', space=sflag, size = 0x4, scoped, tag = 'scoped memory for tpu_custom_call.1']
    #allocation5 [shape = 's32[1]{0}', space=sflag, size = 0x4, scoped, tag = 'scoped memory for tpu_custom_call.1']
    #allocation6 [shape = 'u8[65536]{0}', space=vmem, size = 0x10000, scoped, tag = 'input window, operand 1, single buffered']
    #allocation7 [shape = 's32[1]{0}', space=sflag, size = 0x4, scoped, tag = 'scoped memory for tpu_custom_call.1']
    #allocation8 [shape = 'u8[294912]{0}', space=vmem, size = 0x48000, scoped, tag = 'input window, operand 2, single buffered']
    #allocation9 [shape = 'u8[4096]{0}', space=vmem, size = 0x1000, scoped, tag = 'input window, operand 3, single buffered']
    #allocation10 [shape = 's32[1]{0}', space=sflag, size = 0x4, scoped, tag = 'scoped memory for tpu_custom_call.1']
    #allocation11 [shape = 'u8[262144]{0}', space=vmem, size = 0x40000, scoped, tag = 'output window, operand 0, single buffered']
    %9 = vsyncpa [#allocation4], 0
    %10 = vsyncpa [#allocation7], 0
    %11 = vsyncpa [#allocation10], 0
    %12 = vsyncpa [#allocation5], 0
    // Predicated region
    $region2: #{tpu_custom_call.1} parent=1 // pred_check
      _
    $region3: #{tpu_custom_call.1} parent=1 // pred_check_branch
      %14 = sbr.rel (0) target = $region5
    $region4: #{tpu_custom_call.1} parent=1 // pred_region
      %16 = vsyncadd [#allocation4], 0
      %s17 = sshll.u32 %s0, 4
      %s18 = int_to_ptr.hbm [resolvable:$true] %s17
      %s19 = sshll.u32 [#allocation3], 4
      %s20 = int_to_ptr.vmem [resolvable:$true] %s19
      %25 = dma.hbm_to_vmem [thread:$0]  %s18, 4096, %s20, [#allocation4], 64, 64, 4
    $region5: #{tpu_custom_call.1} parent=1 // pred_fallthru
      _
    // Predicated region
    $region6: #{tpu_custom_call.1} parent=1 // pred_check
      _
    $region7: #{tpu_custom_call.1} parent=1 // pred_check_branch
      %27 = sbr.rel (0) target = $region9
    $region8: #{tpu_custom_call.1} parent=1 // pred_region
      %29 = vsyncadd [#allocation7], 0
      %s30 = sshll.u32 %s1, 4
      %s31 = int_to_ptr.hbm [resolvable:$true] %s30
      %s32 = sshll.u32 [#allocation6], 4
      %s33 = int_to_ptr.vmem [resolvable:$true] %s32
      %38 = dma.hbm_to_vmem [thread:$0]  %s31, 2048, %s33, [#allocation7], 128, 128, 8
    $region9: #{tpu_custom_call.1} parent=1 // pred_fallthru
      _
    // Predicated region
    $region10: #{tpu_custom_call.1} parent=1 // pred_check
      _
    $region11: #{tpu_custom_call.1} parent=1 // pred_check_branch
      %40 = sbr.rel (0) target = $region13
    $region12: #{tpu_custom_call.1} parent=1 // pred_region
      %42 = vsyncadd [#allocation7], 0
      %s43 = sshll.u32 %s2, 4
      %s44 = int_to_ptr.hbm [resolvable:$true] %s43
      %s45 = sshll.u32 [#allocation8], 4
      %s46 = int_to_ptr.vmem [resolvable:$true] %s45
      %51 = dma.hbm_to_vmem [thread:$0]  %s44, 9216, %s46, [#allocation7], 64, 64, 4
    $region13: #{tpu_custom_call.1} parent=1 // pred_fallthru
      _
    // Predicated region
    $region14: #{tpu_custom_call.1} parent=1 // pred_check
      _
    $region15: #{tpu_custom_call.1} parent=1 // pred_check_branch
      %53 = sbr.rel (0) target = $region17
    $region16: #{tpu_custom_call.1} parent=1 // pred_region
      %55 = vsyncadd [#allocation10], 0
      %s57 = sshll.u32 %s3, 4
      %s58 = int_to_ptr.hbm [resolvable:$true] %s57
      %s59 = sshll.u32 [#allocation9], 4
      %s60 = int_to_ptr.vmem [resolvable:$true] %s59
      %62 = dma.hbm_to_vmem [thread:$0]  %s58, 128, %s60, [#allocation10]
    $region17: #{tpu_custom_call.1} parent=1 // pred_fallthru
      _
    // Predicated region
    $region18: #{tpu_custom_call.1} parent=1 // pred_check
      _
    $region19: #{tpu_custom_call.1} parent=1 // pred_check_branch
      %64 = sbr.rel (0) target = $region21
    $region20: #{tpu_custom_call.1} parent=1 // pred_region
      %66 = dma.done [#allocation4], 4096
    $region21: #{tpu_custom_call.1} parent=1 // pred_fallthru
      _
    // Predicated region
    $region22: #{tpu_custom_call.1} parent=1 // pred_check
      _
    $region23: #{tpu_custom_call.1} parent=1 // pred_check_branch
      %68 = sbr.rel (0) target = $region25
    $region24: #{tpu_custom_call.1} parent=1 // pred_region
      %70 = dma.done [#allocation7], 2048
    $region25: #{tpu_custom_call.1} parent=1 // pred_fallthru
      _
    // Predicated region
    $region26: #{tpu_custom_call.1} parent=1 // pred_check
      _
    $region27: #{tpu_custom_call.1} parent=1 // pred_check_branch
      %72 = sbr.rel (0) target = $region29
    $region28: #{tpu_custom_call.1} parent=1 // pred_region
      %74 = dma.done [#allocation7], 9216
    $region29: #{tpu_custom_call.1} parent=1 // pred_fallthru
      _
    // Predicated region
    $region30: #{tpu_custom_call.1} parent=1 // pred_check
      _
    $region31: #{tpu_custom_call.1} parent=1 // pred_check_branch
      %76 = sbr.rel (0) target = $region33
    $region32: #{tpu_custom_call.1} parent=1 // pred_region
      %78 = dma.done [#allocation10], 128
    $region33: #{tpu_custom_call.1} parent=1 // pred_fallthru
      _
    %v79 = vld [vmem:[#allocation9] sm:$0xff]
    %v80 = vld [vmem:[#allocation3] sm:$0xf]
    %v81 = vld [vmem:[#allocation3 + $0x4] sm:$0xf]
    %v82 = vld [vmem:[#allocation3 + $0x8] sm:$0xf]
    %v83 = vld [vmem:[#allocation3 + $0xc] sm:$0xf]
    %v84 = vld [vmem:[#allocation3 + $0x10] sm:$0xf]
    %v85 = vld [vmem:[#allocation3 + $0x14] sm:$0xf]
    %v86 = vld [vmem:[#allocation3 + $0x18] sm:$0xf]
    %v87 = vld [vmem:[#allocation3 + $0x1c] sm:$0xf]
    %v88 = vld [vmem:[#allocation3 + $0x20] sm:$0xf]
    %v89 = vld [vmem:[#allocation3 + $0x24] sm:$0xf]
    %v90 = vld [vmem:[#allocation3 + $0x28] sm:$0xf]
    %v91 = vld [vmem:[#allocation3 + $0x2c] sm:$0xf]
    %v92 = vld [vmem:[#allocation3 + $0x30] sm:$0xf]
    %v93 = vld [vmem:[#allocation3 + $0x34] sm:$0xf]
    %v94 = vld [vmem:[#allocation3 + $0x38] sm:$0xf]
    %v95 = vld [vmem:[#allocation3 + $0x3c] sm:$0xf]
    %v96 = vld [vmem:[#allocation3 + $0x40] sm:$0xf]
    %v97 = vld [vmem:[#allocation3 + $0x44] sm:$0xf]
    %v98 = vld [vmem:[#allocation3 + $0x48] sm:$0xf]
    %v99 = vld [vmem:[#allocation3 + $0x4c] sm:$0xf]
    %v100 = vld [vmem:[#allocation3 + $0x50] sm:$0xf]
    %v101 = vld [vmem:[#allocation3 + $0x54] sm:$0xf]
    %v102 = vld [vmem:[#allocation3 + $0x58] sm:$0xf]
    %v103 = vld [vmem:[#allocation3 + $0x5c] sm:$0xf]
    %v104 = vld [vmem:[#allocation3 + $0x60] sm:$0xf]
    %v105 = vld [vmem:[#allocation3 + $0x64] sm:$0xf]
    %v106 = vld [vmem:[#allocation3 + $0x68] sm:$0xf]
    %v107 = vld [vmem:[#allocation3 + $0x6c] sm:$0xf]
    %v108 = vld [vmem:[#allocation3 + $0x70] sm:$0xf]
    %v109 = vld [vmem:[#allocation3 + $0x74] sm:$0xf]
    %v110 = vld [vmem:[#allocation3 + $0x78] sm:$0xf]
    %v111 = vld [vmem:[#allocation3 + $0x7c] sm:$0xf]
    %v112 = vld [vmem:[#allocation3 + $0x80] sm:$0xf]
    %v113 = vld [vmem:[#allocation3 + $0x84] sm:$0xf]
    %v114 = vld [vmem:[#allocation3 + $0x88] sm:$0xf]
    %v115 = vld [vmem:[#allocation3 + $0x8c] sm:$0xf]
    %v116 = vld [vmem:[#allocation3 + $0x90] sm:$0xf]
    %v117 = vld [vmem:[#allocation3 + $0x94] sm:$0xf]
    %v118 = vld [vmem:[#allocation3 + $0x98] sm:$0xf]
    %v119 = vld [vmem:[#allocation3 + $0x9c] sm:$0xf]
    %v120 = vld [vmem:[#allocation3 + $0xa0] sm:$0xf]
    %v121 = vld [vmem:[#allocation3 + $0xa4] sm:$0xf]
    %v122 = vld [vmem:[#allocation3 + $0xa8] sm:$0xf]
    %v123 = vld [vmem:[#allocation3 + $0xac] sm:$0xf]
    %v124 = vld [vmem:[#allocation3 + $0xb0] sm:$0xf]
    %v125 = vld [vmem:[#allocation3 + $0xb4] sm:$0xf]
    %v126 = vld [vmem:[#allocation3 + $0xb8] sm:$0xf]
    %v127 = vld [vmem:[#allocation3 + $0xbc] sm:$0xf]
    %v128 = vld [vmem:[#allocation3 + $0xc0] sm:$0xf]
    %v129 = vld [vmem:[#allocation3 + $0xc4] sm:$0xf]
    %v130 = vld [vmem:[#allocation3 + $0xc8] sm:$0xf]
    %v131 = vld [vmem:[#allocation3 + $0xcc] sm:$0xf]
    %v132 = vld [vmem:[#allocation3 + $0xd0] sm:$0xf]
    %v133 = vld [vmem:[#allocation3 + $0xd4] sm:$0xf]
    %v134 = vld [vmem:[#allocation3 + $0xd8] sm:$0xf]
    %v135 = vld [vmem:[#allocation3 + $0xdc] sm:$0xf]
    %v136 = vld [vmem:[#allocation3 + $0xe0] sm:$0xf]
    %v137 = vld [vmem:[#allocation3 + $0xe4] sm:$0xf]
    %v138 = vld [vmem:[#allocation3 + $0xe8] sm:$0xf]
    %v139 = vld [vmem:[#allocation3 + $0xec] sm:$0xf]
    %v140 = vld [vmem:[#allocation3 + $0xf0] sm:$0xf]
    %v141 = vld [vmem:[#allocation3 + $0xf4] sm:$0xf]
    %v142 = vld [vmem:[#allocation3 + $0xf8] sm:$0xf]
    %v143 = vld [vmem:[#allocation3 + $0xfc] sm:$0xf]
    %v144 = vld [vmem:[#allocation6] sm:$0xff]
    %v145 = vld [vmem:[#allocation6 + $0x8] sm:$0xff]
    %v146 = vld [vmem:[#allocation6 + $0x10] sm:$0xff]
    %v147 = vld [vmem:[#allocation6 + $0x18] sm:$0xff]
    %v148 = vld [vmem:[#allocation6 + $0x20] sm:$0xff]
    %v149 = vld [vmem:[#allocation6 + $0x28] sm:$0xff]
    %v150 = vld [vmem:[#allocation6 + $0x30] sm:$0xff]
    %v151 = vld [vmem:[#allocation6 + $0x38] sm:$0xff]
    %v152 = vld [vmem:[#allocation6 + $0x40] sm:$0xff]
    %v153 = vld [vmem:[#allocation6 + $0x48] sm:$0xff]
    %v154 = vld [vmem:[#allocation6 + $0x50] sm:$0xff]
    %v155 = vld [vmem:[#allocation6 + $0x58] sm:$0xff]
    %v156 = vld [vmem:[#allocation6 + $0x60] sm:$0xff]
    %v157 = vld [vmem:[#allocation6 + $0x68] sm:$0xff]
    %v158 = vld [vmem:[#allocation6 + $0x70] sm:$0xff]
    %v159 = vld [vmem:[#allocation6 + $0x78] sm:$0xff]
    %v224 = vunpack.c.l.b16 %v80
    %v225 = vunpack.c.l.b16 %v81
    %v226 = vunpack.c.l.b16 %v82
    %v227 = vunpack.c.l.b16 %v83
    %v228 = vunpack.c.l.b16 %v84
    %v229 = vunpack.c.l.b16 %v85
    %v230 = vunpack.c.l.b16 %v86
    %v231 = vunpack.c.l.b16 %v87
    %v232 = vunpack.c.l.b16 %v88
    %v233 = vunpack.c.l.b16 %v89
    %v234 = vunpack.c.l.b16 %v90
    %v235 = vunpack.c.l.b16 %v91
    %v236 = vunpack.c.l.b16 %v92
    %v237 = vunpack.c.l.b16 %v93
    %v238 = vunpack.c.l.b16 %v94
    %v239 = vunpack.c.l.b16 %v95
    %v240 = vunpack.c.l.b16 %v96
    %v241 = vunpack.c.l.b16 %v97
    %v242 = vunpack.c.l.b16 %v98
    %v243 = vunpack.c.l.b16 %v99
    %v244 = vunpack.c.l.b16 %v100
    %v245 = vunpack.c.l.b16 %v101
    %v246 = vunpack.c.l.b16 %v102
    %v247 = vunpack.c.l.b16 %v103
    %v248 = vunpack.c.l.b16 %v104
    %v249 = vunpack.c.l.b16 %v105
    %v250 = vunpack.c.l.b16 %v106
    %v251 = vunpack.c.l.b16 %v107
    %v252 = vunpack.c.l.b16 %v108
    %v253 = vunpack.c.l.b16 %v109
    %v254 = vunpack.c.l.b16 %v110
    %v255 = vunpack.c.l.b16 %v111
    %v256 = vunpack.c.l.b16 %v112
    %v257 = vunpack.c.l.b16 %v113
    %v258 = vunpack.c.l.b16 %v114
    %v259 = vunpack.c.l.b16 %v115
    %v260 = vunpack.c.l.b16 %v116
    %v261 = vunpack.c.l.b16 %v117
    %v262 = vunpack.c.l.b16 %v118
    %v263 = vunpack.c.l.b16 %v119
    %v264 = vunpack.c.l.b16 %v120
    %v265 = vunpack.c.l.b16 %v121
    %v266 = vunpack.c.l.b16 %v122
    %v267 = vunpack.c.l.b16 %v123
    %v268 = vunpack.c.l.b16 %v124
    %v269 = vunpack.c.l.b16 %v125
    %v270 = vunpack.c.l.b16 %v126
    %v271 = vunpack.c.l.b16 %v127
    %v272 = vunpack.c.l.b16 %v128
    %v273 = vunpack.c.l.b16 %v129
    %v274 = vunpack.c.l.b16 %v130
    %v275 = vunpack.c.l.b16 %v131
    %v276 = vunpack.c.l.b16 %v132
    %v277 = vunpack.c.l.b16 %v133
    %v278 = vunpack.c.l.b16 %v134
    %v279 = vunpack.c.l.b16 %v135
    %v280 = vunpack.c.l.b16 %v136
    %v281 = vunpack.c.l.b16 %v137
    %v282 = vunpack.c.l.b16 %v138
    %v283 = vunpack.c.l.b16 %v139
    %v284 = vunpack.c.l.b16 %v140
    %v285 = vunpack.c.l.b16 %v141
    %v286 = vunpack.c.l.b16 %v142
    %v287 = vunpack.c.l.b16 %v143
    %v288 = vpack.c.b16 %v225, %v224
    %v289 = vpack.c.b16 %v227, %v226
    %v290 = vpack.c.b16 %v229, %v228
    %v291 = vpack.c.b16 %v231, %v230
    %v292 = vpack.c.b16 %v233, %v232
    %v293 = vpack.c.b16 %v235, %v234
    %v294 = vpack.c.b16 %v237, %v236
    %v295 = vpack.c.b16 %v239, %v238
    %v296 = vpack.c.b16 %v241, %v240
    %v297 = vpack.c.b16 %v243, %v242
    %v298 = vpack.c.b16 %v245, %v244
    %v299 = vpack.c.b16 %v247, %v246
    %v300 = vpack.c.b16 %v249, %v248
    %v301 = vpack.c.b16 %v251, %v250
    %v302 = vpack.c.b16 %v253, %v252
    %v303 = vpack.c.b16 %v255, %v254
    %v304 = vpack.c.b16 %v257, %v256
    %v305 = vpack.c.b16 %v259, %v258
    %v306 = vpack.c.b16 %v261, %v260
    %v307 = vpack.c.b16 %v263, %v262
    %v308 = vpack.c.b16 %v265, %v264
    %v309 = vpack.c.b16 %v267, %v266
    %v310 = vpack.c.b16 %v269, %v268
    %v311 = vpack.c.b16 %v271, %v270
    %v312 = vpack.c.b16 %v273, %v272
    %v313 = vpack.c.b16 %v275, %v274
    %v314 = vpack.c.b16 %v277, %v276
    %v315 = vpack.c.b16 %v279, %v278
    %v316 = vpack.c.b16 %v281, %v280
    %v317 = vpack.c.b16 %v283, %v282
    %v318 = vpack.c.b16 %v285, %v284
    %v319 = vpack.c.b16 %v287, %v286
    %v368 = vunpack.c.l.b16 %v144
    %v369 = vunpack.c.h.b16 %v144
    %v370 = vunpack.c.l.b16 %v145
    %v371 = vunpack.c.h.b16 %v145
    %v372 = vunpack.c.l.b16 %v146
    %v373 = vunpack.c.h.b16 %v146
    %v374 = vunpack.c.l.b16 %v147
    %v375 = vunpack.c.h.b16 %v147
    %v376 = vunpack.c.l.b16 %v148
    %v377 = vunpack.c.h.b16 %v148
    %v378 = vunpack.c.l.b16 %v149
    %v379 = vunpack.c.h.b16 %v149
    %v380 = vunpack.c.l.b16 %v150
    %v381 = vunpack.c.h.b16 %v150
    %v382 = vunpack.c.l.b16 %v151
    %v383 = vunpack.c.h.b16 %v151
    %v384 = vunpack.c.l.b16 %v152
    %v385 = vunpack.c.h.b16 %v152
    %v386 = vunpack.c.l.b16 %v153
    %v387 = vunpack.c.h.b16 %v153
    %v388 = vunpack.c.l.b16 %v154
    %v389 = vunpack.c.h.b16 %v154
    %v390 = vunpack.c.l.b16 %v155
    %v391 = vunpack.c.h.b16 %v155
    %v392 = vunpack.c.l.b16 %v156
    %v393 = vunpack.c.h.b16 %v156
    %v394 = vunpack.c.l.b16 %v157
    %v395 = vunpack.c.h.b16 %v157
    %v396 = vunpack.c.l.b16 %v158
    %v397 = vunpack.c.h.b16 %v158
    %v398 = vunpack.c.l.b16 %v159
    %v399 = vunpack.c.h.b16 %v159
    %v400 = vpack.c.b16 %v370, %v368
    %v401 = vpack.c.b16 %v371, %v369
    %v402 = vpack.c.b16 %v374, %v372
    %v403 = vpack.c.b16 %v375, %v373
    %v404 = vpack.c.b16 %v378, %v376
    %v405 = vpack.c.b16 %v379, %v377
    %v406 = vpack.c.b16 %v382, %v380
    %v407 = vpack.c.b16 %v383, %v381
    %v408 = vpack.c.b16 %v386, %v384
    %v409 = vpack.c.b16 %v387, %v385
    %v410 = vpack.c.b16 %v390, %v388
    %v411 = vpack.c.b16 %v391, %v389
    %v412 = vpack.c.b16 %v394, %v392
    %v413 = vpack.c.b16 %v395, %v393
    %v414 = vpack.c.b16 %v398, %v396
    %v415 = vpack.c.b16 %v399, %v397
    %432 = vmatpush.bf16.msra.mxu0 %v414
    %433 = vmatpush.bf16.msra.mxu0 %v412
    %434 = vmatpush.bf16.msra.mxu0 %v410
    %435 = vmatpush.bf16.msra.mxu0 %v408
    %436 = vmatpush.bf16.msra.mxu0 %v406
    %437 = vmatpush.bf16.msra.mxu0 %v404
    %438 = vmatpush.bf16.msra.mxu0 %v402
    %439 = vmatpush.bf16.msra.mxu0 %v400
    %440 = vmatmul.bf16.gmra.mxu0 %v288
    %v441 = vpop.f32.mrf.mxu0
    %v442 = vadd.f32 0.0, %v441
    %v443 = vpop.f32.mrf.mxu0
    %v444 = vadd.f32 0.0, %v443
    %445 = vmatmul.bf16.gmra.mxu0 %v289
    %v446 = vpop.f32.mrf.mxu0
    %v447 = vadd.f32 0.0, %v446
    %v448 = vpop.f32.mrf.mxu0
    %v449 = vadd.f32 0.0, %v448
    %450 = vmatmul.bf16.gmra.mxu0 %v290
    %v451 = vpop.f32.mrf.mxu0
    %v452 = vadd.f32 0.0, %v451
    %v453 = vpop.f32.mrf.mxu0
    %v454 = vadd.f32 0.0, %v453
    %455 = vmatmul.bf16.gmra.mxu0 %v291
    %v456 = vpop.f32.mrf.mxu0
    %v457 = vadd.f32 0.0, %v456
    %v458 = vpop.f32.mrf.mxu0
    %v459 = vadd.f32 0.0, %v458
    %460 = vmatmul.bf16.gmra.mxu0 %v292
    %v461 = vpop.f32.mrf.mxu0
    %v462 = vadd.f32 0.0, %v461
    %v463 = vpop.f32.mrf.mxu0
    %v464 = vadd.f32 0.0, %v463
    %465 = vmatmul.bf16.gmra.mxu0 %v293
    %v466 = vpop.f32.mrf.mxu0
    %v467 = vadd.f32 0.0, %v466
    %v468 = vpop.f32.mrf.mxu0
    %v469 = vadd.f32 0.0, %v468
    %470 = vmatmul.bf16.gmra.mxu0 %v294
    %v471 = vpop.f32.mrf.mxu0
    %v472 = vadd.f32 0.0, %v471
    %v473 = vpop.f32.mrf.mxu0
    %v474 = vadd.f32 0.0, %v473
    %475 = vmatmul.bf16.gmra.mxu0 %v295
    %v476 = vpop.f32.mrf.mxu0
    %v477 = vadd.f32 0.0, %v476
    %v478 = vpop.f32.mrf.mxu0
    %v479 = vadd.f32 0.0, %v478
    %480 = vmatmul.bf16.gmra.mxu0 %v296
    %v481 = vpop.f32.mrf.mxu0
    %v482 = vadd.f32 0.0, %v481
    %v483 = vpop.f32.mrf.mxu0
    %v484 = vadd.f32 0.0, %v483
    %485 = vmatmul.bf16.gmra.mxu0 %v297
    %v486 = vpop.f32.mrf.mxu0
    %v487 = vadd.f32 0.0, %v486
    %v488 = vpop.f32.mrf.mxu0
    %v489 = vadd.f32 0.0, %v488
    %490 = vmatmul.bf16.gmra.mxu0 %v298
    %v491 = vpop.f32.mrf.mxu0
    %v492 = vadd.f32 0.0, %v491
    %v493 = vpop.f32.mrf.mxu0
    %v494 = vadd.f32 0.0, %v493
    %495 = vmatmul.bf16.gmra.mxu0 %v299
    %v496 = vpop.f32.mrf.mxu0
    %v497 = vadd.f32 0.0, %v496
    %v498 = vpop.f32.mrf.mxu0
    %v499 = vadd.f32 0.0, %v498
    %500 = vmatmul.bf16.gmra.mxu0 %v300
    %v501 = vpop.f32.mrf.mxu0
    %v502 = vadd.f32 0.0, %v501
    %v503 = vpop.f32.mrf.mxu0
    %v504 = vadd.f32 0.0, %v503
    %505 = vmatmul.bf16.gmra.mxu0 %v301
    %v506 = vpop.f32.mrf.mxu0
    %v507 = vadd.f32 0.0, %v506
    %v508 = vpop.f32.mrf.mxu0
    %v509 = vadd.f32 0.0, %v508
    %510 = vmatmul.bf16.gmra.mxu0 %v302
    %v511 = vpop.f32.mrf.mxu0
    %v512 = vadd.f32 0.0, %v511
    %v513 = vpop.f32.mrf.mxu0
    %v514 = vadd.f32 0.0, %v513
    %515 = vmatmul.bf16.gmra.mxu0 %v303
    %v516 = vpop.f32.mrf.mxu0
    %v517 = vadd.f32 0.0, %v516
    %v518 = vpop.f32.mrf.mxu0
    %v519 = vadd.f32 0.0, %v518
    %520 = vmatmul.bf16.gmra.mxu0 %v304
    %v521 = vpop.f32.mrf.mxu0
    %v522 = vadd.f32 0.0, %v521
    %v523 = vpop.f32.mrf.mxu0
    %v524 = vadd.f32 0.0, %v523
    %525 = vmatmul.bf16.gmra.mxu0 %v305
    %v526 = vpop.f32.mrf.mxu0
    %v527 = vadd.f32 0.0, %v526
    %v528 = vpop.f32.mrf.mxu0
    %v529 = vadd.f32 0.0, %v528
    %530 = vmatmul.bf16.gmra.mxu0 %v306
    %v531 = vpop.f32.mrf.mxu0
    %v532 = vadd.f32 0.0, %v531
    %v533 = vpop.f32.mrf.mxu0
    %v534 = vadd.f32 0.0, %v533
    %535 = vmatmul.bf16.gmra.mxu0 %v307
    %v536 = vpop.f32.mrf.mxu0
    %v537 = vadd.f32 0.0, %v536
    %v538 = vpop.f32.mrf.mxu0
    %v539 = vadd.f32 0.0, %v538
    %540 = vmatmul.bf16.gmra.mxu0 %v308
    %v541 = vpop.f32.mrf.mxu0
    %v542 = vadd.f32 0.0, %v541
    %v543 = vpop.f32.mrf.mxu0
    %v544 = vadd.f32 0.0, %v543
    %545 = vmatmul.bf16.gmra.mxu0 %v309
    %v546 = vpop.f32.mrf.mxu0
    %v547 = vadd.f32 0.0, %v546
    %v548 = vpop.f32.mrf.mxu0
    %v549 = vadd.f32 0.0, %v548
    %550 = vmatmul.bf16.gmra.mxu0 %v310
    %v551 = vpop.f32.mrf.mxu0
    %v552 = vadd.f32 0.0, %v551
    %v553 = vpop.f32.mrf.mxu0
    %v554 = vadd.f32 0.0, %v553
    %555 = vmatmul.bf16.gmra.mxu0 %v311
    %v556 = vpop.f32.mrf.mxu0
    %v557 = vadd.f32 0.0, %v556
    %v558 = vpop.f32.mrf.mxu0
    %v559 = vadd.f32 0.0, %v558
    %560 = vmatmul.bf16.gmra.mxu0 %v312
    %v561 = vpop.f32.mrf.mxu0
    %v562 = vadd.f32 0.0, %v561
    %v563 = vpop.f32.mrf.mxu0
    %v564 = vadd.f32 0.0, %v563
    %565 = vmatmul.bf16.gmra.mxu0 %v313
    %v566 = vpop.f32.mrf.mxu0
    %v567 = vadd.f32 0.0, %v566
    %v568 = vpop.f32.mrf.mxu0
    %v569 = vadd.f32 0.0, %v568
    %570 = vmatmul.bf16.gmra.mxu0 %v314
    %v571 = vpop.f32.mrf.mxu0
    %v572 = vadd.f32 0.0, %v571
    %v573 = vpop.f32.mrf.mxu0
    %v574 = vadd.f32 0.0, %v573
    %575 = vmatmul.bf16.gmra.mxu0 %v315
    %v576 = vpop.f32.mrf.mxu0
    %v577 = vadd.f32 0.0, %v576
    %v578 = vpop.f32.mrf.mxu0
    %v579 = vadd.f32 0.0, %v578
    %580 = vmatmul.bf16.gmra.mxu0 %v316
    %v581 = vpop.f32.mrf.mxu0
    %v582 = vadd.f32 0.0, %v581
    %v583 = vpop.f32.mrf.mxu0
    %v584 = vadd.f32 0.0, %v583
    %585 = vmatmul.bf16.gmra.mxu0 %v317
    %v586 = vpop.f32.mrf.mxu0
    %v587 = vadd.f32 0.0, %v586
    %v588 = vpop.f32.mrf.mxu0
    %v589 = vadd.f32 0.0, %v588
    %590 = vmatmul.bf16.gmra.mxu0 %v318
    %v591 = vpop.f32.mrf.mxu0
    %v592 = vadd.f32 0.0, %v591
    %v593 = vpop.f32.mrf.mxu0
    %v594 = vadd.f32 0.0, %v593
    %595 = vmatmul.bf16.gmra.mxu0 %v319
    %v596 = vpop.f32.mrf.mxu0
    %v597 = vadd.f32 0.0, %v596
    %v598 = vpop.f32.mrf.mxu0
    %v599 = vadd.f32 0.0, %v598
    %600 = vdwg.mxu0
    %601 = vmatpush.bf16.msra.mxu0 %v415
    %602 = vmatpush.bf16.msra.mxu0 %v413
    %603 = vmatpush.bf16.msra.mxu0 %v411
    %604 = vmatpush.bf16.msra.mxu0 %v409
    %605 = vmatpush.bf16.msra.mxu0 %v407
    %606 = vmatpush.bf16.msra.mxu0 %v405
    %607 = vmatpush.bf16.msra.mxu0 %v403
    %608 = vmatpush.bf16.msra.mxu0 %v401
    %609 = vmatmul.bf16.gmra.mxu0 %v288
    %v610 = vpop.f32.mrf.mxu0
    %v611 = vadd.f32 0.0, %v610
    %v612 = vpop.f32.mrf.mxu0
    %v613 = vadd.f32 0.0, %v612
    %614 = vmatmul.bf16.gmra.mxu0 %v289
    %v615 = vpop.f32.mrf.mxu0
    %v616 = vadd.f32 0.0, %v615
    %v617 = vpop.f32.mrf.mxu0
    %v618 = vadd.f32 0.0, %v617
    %619 = vmatmul.bf16.gmra.mxu0 %v290
    %v620 = vpop.f32.mrf.mxu0
    %v621 = vadd.f32 0.0, %v620
    %v622 = vpop.f32.mrf.mxu0
    %v623 = vadd.f32 0.0, %v622
    %624 = vmatmul.bf16.gmra.mxu0 %v291
    %v625 = vpop.f32.mrf.mxu0
    %v626 = vadd.f32 0.0, %v625
    %v627 = vpop.f32.mrf.mxu0
    %v628 = vadd.f32 0.0, %v627
    %629 = vmatmul.bf16.gmra.mxu0 %v292
    %v630 = vpop.f32.mrf.mxu0
    %v631 = vadd.f32 0.0, %v630
    %v632 = vpop.f32.mrf.mxu0
    %v633 = vadd.f32 0.0, %v632
    %634 = vmatmul.bf16.gmra.mxu0 %v293
    %v635 = vpop.f32.mrf.mxu0
    %v636 = vadd.f32 0.0, %v635
    %v637 = vpop.f32.mrf.mxu0
    %v638 = vadd.f32 0.0, %v637
    %639 = vmatmul.bf16.gmra.mxu0 %v294
    %v640 = vpop.f32.mrf.mxu0
    %v641 = vadd.f32 0.0, %v640
    %v642 = vpop.f32.mrf.mxu0
    %v643 = vadd.f32 0.0, %v642
    %644 = vmatmul.bf16.gmra.mxu0 %v295
    %v645 = vpop.f32.mrf.mxu0
    %v646 = vadd.f32 0.0, %v645
    %v647 = vpop.f32.mrf.mxu0
    %v648 = vadd.f32 0.0, %v647
    %649 = vmatmul.bf16.gmra.mxu0 %v296
    %v650 = vpop.f32.mrf.mxu0
    %v651 = vadd.f32 0.0, %v650
    %v652 = vpop.f32.mrf.mxu0
    %v653 = vadd.f32 0.0, %v652
    %654 = vmatmul.bf16.gmra.mxu0 %v297
    %v655 = vpop.f32.mrf.mxu0
    %v656 = vadd.f32 0.0, %v655
    %v657 = vpop.f32.mrf.mxu0
    %v658 = vadd.f32 0.0, %v657
    %659 = vmatmul.bf16.gmra.mxu0 %v298
    %v660 = vpop.f32.mrf.mxu0
    %v661 = vadd.f32 0.0, %v660
    %v662 = vpop.f32.mrf.mxu0
    %v663 = vadd.f32 0.0, %v662
    %664 = vmatmul.bf16.gmra.mxu0 %v299
    %v665 = vpop.f32.mrf.mxu0
    %v666 = vadd.f32 0.0, %v665
    %v667 = vpop.f32.mrf.mxu0
    %v668 = vadd.f32 0.0, %v667
    %669 = vmatmul.bf16.gmra.mxu0 %v300
    %v670 = vpop.f32.mrf.mxu0
    %v671 = vadd.f32 0.0, %v670
    %v672 = vpop.f32.mrf.mxu0
    %v673 = vadd.f32 0.0, %v672
    %674 = vmatmul.bf16.gmra.mxu0 %v301
    %v675 = vpop.f32.mrf.mxu0
    %v676 = vadd.f32 0.0, %v675
    %v677 = vpop.f32.mrf.mxu0
    %v678 = vadd.f32 0.0, %v677
    %679 = vmatmul.bf16.gmra.mxu0 %v302
    %v680 = vpop.f32.mrf.mxu0
    %v681 = vadd.f32 0.0, %v680
    %v682 = vpop.f32.mrf.mxu0
    %v683 = vadd.f32 0.0, %v682
    %684 = vmatmul.bf16.gmra.mxu0 %v303
    %v685 = vpop.f32.mrf.mxu0
    %v686 = vadd.f32 0.0, %v685
    %v687 = vpop.f32.mrf.mxu0
    %v688 = vadd.f32 0.0, %v687
    %689 = vmatmul.bf16.gmra.mxu0 %v304
    %v690 = vpop.f32.mrf.mxu0
    %v691 = vadd.f32 0.0, %v690
    %v692 = vpop.f32.mrf.mxu0
    %v693 = vadd.f32 0.0, %v692
    %694 = vmatmul.bf16.gmra.mxu0 %v305
    %v695 = vpop.f32.mrf.mxu0
    %v696 = vadd.f32 0.0, %v695
    %v697 = vpop.f32.mrf.mxu0
    %v698 = vadd.f32 0.0, %v697
    %699 = vmatmul.bf16.gmra.mxu0 %v306
    %v700 = vpop.f32.mrf.mxu0
    %v701 = vadd.f32 0.0, %v700
    %v702 = vpop.f32.mrf.mxu0
    %v703 = vadd.f32 0.0, %v702
    %704 = vmatmul.bf16.gmra.mxu0 %v307
    %v705 = vpop.f32.mrf.mxu0
    %v706 = vadd.f32 0.0, %v705
    %v707 = vpop.f32.mrf.mxu0
    %v708 = vadd.f32 0.0, %v707
    %709 = vmatmul.bf16.gmra.mxu0 %v308
    %v710 = vpop.f32.mrf.mxu0
    %v711 = vadd.f32 0.0, %v710
    %v712 = vpop.f32.mrf.mxu0
    %v713 = vadd.f32 0.0, %v712
    %714 = vmatmul.bf16.gmra.mxu0 %v309
    %v715 = vpop.f32.mrf.mxu0
    %v716 = vadd.f32 0.0, %v715
    %v717 = vpop.f32.mrf.mxu0
    %v718 = vadd.f32 0.0, %v717
    %719 = vmatmul.bf16.gmra.mxu0 %v310
    %v720 = vpop.f32.mrf.mxu0
    %v721 = vadd.f32 0.0, %v720
    %v722 = vpop.f32.mrf.mxu0
    %v723 = vadd.f32 0.0, %v722
    %724 = vmatmul.bf16.gmra.mxu0 %v311
    %v725 = vpop.f32.mrf.mxu0
    %v726 = vadd.f32 0.0, %v725
    %v727 = vpop.f32.mrf.mxu0
    %v728 = vadd.f32 0.0, %v727
    %729 = vmatmul.bf16.gmra.mxu0 %v312
    %v730 = vpop.f32.mrf.mxu0
    %v731 = vadd.f32 0.0, %v730
    %v732 = vpop.f32.mrf.mxu0
    %v733 = vadd.f32 0.0, %v732
    %734 = vmatmul.bf16.gmra.mxu0 %v313
    %v735 = vpop.f32.mrf.mxu0
    %v736 = vadd.f32 0.0, %v735
    %v737 = vpop.f32.mrf.mxu0
    %v738 = vadd.f32 0.0, %v737
    %739 = vmatmul.bf16.gmra.mxu0 %v314
    %v740 = vpop.f32.mrf.mxu0
    %v741 = vadd.f32 0.0, %v740
    %v742 = vpop.f32.mrf.mxu0
    %v743 = vadd.f32 0.0, %v742
    %744 = vmatmul.bf16.gmra.mxu0 %v315
    %v745 = vpop.f32.mrf.mxu0
    %v746 = vadd.f32 0.0, %v745
    %v747 = vpop.f32.mrf.mxu0
    %v748 = vadd.f32 0.0, %v747
    %749 = vmatmul.bf16.gmra.mxu0 %v316
    %v750 = vpop.f32.mrf.mxu0
    %v751 = vadd.f32 0.0, %v750
    %v752 = vpop.f32.mrf.mxu0
    %v753 = vadd.f32 0.0, %v752
    %754 = vmatmul.bf16.gmra.mxu0 %v317
    %v755 = vpop.f32.mrf.mxu0
    %v756 = vadd.f32 0.0, %v755
    %v757 = vpop.f32.mrf.mxu0
    %v758 = vadd.f32 0.0, %v757
    %759 = vmatmul.bf16.gmra.mxu0 %v318
    %v760 = vpop.f32.mrf.mxu0
    %v761 = vadd.f32 0.0, %v760
    %v762 = vpop.f32.mrf.mxu0
    %v763 = vadd.f32 0.0, %v762
    %764 = vmatmul.bf16.gmra.mxu0 %v319
    %v765 = vpop.f32.mrf.mxu0
    %v766 = vadd.f32 0.0, %v765
    %v767 = vpop.f32.mrf.mxu0
    %v768 = vadd.f32 0.0, %v767
    %769 = vdwg.mxu0
    %v770 = vperm.slane %v79, 4
    %v771 = vadd.f32 %v611, %v770
    %v772 = vadd.f32 %v613, %v770
    %v773 = vadd.f32 %v616, %v770
    %v774 = vadd.f32 %v618, %v770
    %v775 = vadd.f32 %v621, %v770
    %v776 = vadd.f32 %v623, %v770
    %v777 = vadd.f32 %v626, %v770
    %v778 = vadd.f32 %v628, %v770
    %v779 = vadd.f32 %v631, %v770
    %v780 = vadd.f32 %v633, %v770
    %v781 = vadd.f32 %v636, %v770
    %v782 = vadd.f32 %v638, %v770
    %v783 = vadd.f32 %v641, %v770
    %v784 = vadd.f32 %v643, %v770
    %v785 = vadd.f32 %v646, %v770
    %v786 = vadd.f32 %v648, %v770
    %v787 = vadd.f32 %v651, %v770
    %v788 = vadd.f32 %v653, %v770
    %v789 = vadd.f32 %v656, %v770
    %v790 = vadd.f32 %v658, %v770
    %v791 = vadd.f32 %v661, %v770
    %v792 = vadd.f32 %v663, %v770
    %v793 = vadd.f32 %v666, %v770
    %v794 = vadd.f32 %v668, %v770
    %v795 = vadd.f32 %v671, %v770
    %v796 = vadd.f32 %v673, %v770
    %v797 = vadd.f32 %v676, %v770
    %v798 = vadd.f32 %v678, %v770
    %v799 = vadd.f32 %v681, %v770
    %v800 = vadd.f32 %v683, %v770
    %v801 = vadd.f32 %v686, %v770
    %v802 = vadd.f32 %v688, %v770
    %v803 = vadd.f32 %v691, %v770
    %v804 = vadd.f32 %v693, %v770
    %v805 = vadd.f32 %v696, %v770
    %v806 = vadd.f32 %v698, %v770
    %v807 = vadd.f32 %v701, %v770
    %v808 = vadd.f32 %v703, %v770
    %v809 = vadd.f32 %v706, %v770
    %v810 = vadd.f32 %v708, %v770
    %v811 = vadd.f32 %v711, %v770
    %v812 = vadd.f32 %v713, %v770
    %v813 = vadd.f32 %v716, %v770
    %v814 = vadd.f32 %v718, %v770
    %v815 = vadd.f32 %v721, %v770
    %v816 = vadd.f32 %v723, %v770
    %v817 = vadd.f32 %v726, %v770
    %v818 = vadd.f32 %v728, %v770
    %v819 = vadd.f32 %v731, %v770
    %v820 = vadd.f32 %v733, %v770
    %v821 = vadd.f32 %v736, %v770
    %v822 = vadd.f32 %v738, %v770
    %v823 = vadd.f32 %v741, %v770
    %v824 = vadd.f32 %v743, %v770
    %v825 = vadd.f32 %v746, %v770
    %v826 = vadd.f32 %v748, %v770
    %v827 = vadd.f32 %v751, %v770
    %v828 = vadd.f32 %v753, %v770
    %v829 = vadd.f32 %v756, %v770
    %v830 = vadd.f32 %v758, %v770
    %v831 = vadd.f32 %v761, %v770
    %v832 = vadd.f32 %v763, %v770
    %v833 = vadd.f32 %v766, %v770
    %v834 = vadd.f32 %v768, %v770
    %v835 = vadd.f32 %v442, %v444
    %v836 = vadd.f32 %v835, %v447
    %v837 = vadd.f32 %v836, %v449
    %v838 = vadd.f32 %v837, %v452
    %v839 = vadd.f32 %v838, %v454
    %v840 = vadd.f32 %v839, %v457
    %v841 = vadd.f32 %v840, %v459
    %v842 = vadd.f32 %v841, %v462
    %v843 = vadd.f32 %v842, %v464
    %v844 = vadd.f32 %v843, %v467
    %v845 = vadd.f32 %v844, %v469
    %v846 = vadd.f32 %v845, %v472
    %v847 = vadd.f32 %v846, %v474
    %v848 = vadd.f32 %v847, %v477
    %v849 = vadd.f32 %v848, %v479
    %v850 = vadd.f32 %v849, %v482
    %v851 = vadd.f32 %v850, %v484
    %v852 = vadd.f32 %v851, %v487
    %v853 = vadd.f32 %v852, %v489
    %v854 = vadd.f32 %v853, %v492
    %v855 = vadd.f32 %v854, %v494
    %v856 = vadd.f32 %v855, %v497
    %v857 = vadd.f32 %v856, %v499
    %v858 = vadd.f32 %v857, %v502
    %v859 = vadd.f32 %v858, %v504
    %v860 = vadd.f32 %v859, %v507
    %v861 = vadd.f32 %v860, %v509
    %v862 = vadd.f32 %v861, %v512
    %v863 = vadd.f32 %v862, %v514
    %v864 = vadd.f32 %v863, %v517
    %v865 = vadd.f32 %v864, %v519
    %v866 = vadd.f32 %v865, %v522
    %v867 = vadd.f32 %v866, %v524
    %v868 = vadd.f32 %v867, %v527
    %v869 = vadd.f32 %v868, %v529
    %v870 = vadd.f32 %v869, %v532
    %v871 = vadd.f32 %v870, %v534
    %v872 = vadd.f32 %v871, %v537
    %v873 = vadd.f32 %v872, %v539
    %v874 = vadd.f32 %v873, %v542
    %v875 = vadd.f32 %v874, %v544
    %v876 = vadd.f32 %v875, %v547
    %v877 = vadd.f32 %v876, %v549
    %v878 = vadd.f32 %v877, %v552
    %v879 = vadd.f32 %v878, %v554
    %v880 = vadd.f32 %v879, %v557
    %v881 = vadd.f32 %v880, %v559
    %v882 = vadd.f32 %v881, %v562
    %v883 = vadd.f32 %v882, %v564
    %v884 = vadd.f32 %v883, %v567
    %v885 = vadd.f32 %v884, %v569
    %v886 = vadd.f32 %v885, %v572
    %v887 = vadd.f32 %v886, %v574
    %v888 = vadd.f32 %v887, %v577
    %v889 = vadd.f32 %v888, %v579
    %v890 = vadd.f32 %v889, %v582
    %v891 = vadd.f32 %v890, %v584
    %v892 = vadd.f32 %v891, %v587
    %v893 = vadd.f32 %v892, %v589
    %v894 = vadd.f32 %v893, %v592
    %v895 = vadd.f32 %v894, %v594
    %v896 = vadd.f32 %v895, %v597
    %v897 = vadd.f32 %v896, %v599
    %v898 = vrot.slane %v897, 4
    %v899 = vadd.f32 %v897, %v898
    %v900 = vrot.slane %v899, 2
    %v901 = vadd.f32 %v899, %v900
    %v902 = vrot.slane %v901, 1
    %v903 = vadd.f32 %v901, %v902
    %v904 = vmul.f32 %v903, 0.001953125
    %v905 = vmul.f32 %v442, %v442
    %v906 = vmul.f32 %v444, %v444
    %v907 = vmul.f32 %v447, %v447
    %v908 = vmul.f32 %v449, %v449
    %v909 = vmul.f32 %v452, %v452
    %v910 = vmul.f32 %v454, %v454
    %v911 = vmul.f32 %v457, %v457
    %v912 = vmul.f32 %v459, %v459
    %v913 = vmul.f32 %v462, %v462
    %v914 = vmul.f32 %v464, %v464
    %v915 = vmul.f32 %v467, %v467
    %v916 = vmul.f32 %v469, %v469
    %v917 = vmul.f32 %v472, %v472
    %v918 = vmul.f32 %v474, %v474
    %v919 = vmul.f32 %v477, %v477
    %v920 = vmul.f32 %v479, %v479
    %v921 = vmul.f32 %v482, %v482
    %v922 = vmul.f32 %v484, %v484
    %v923 = vmul.f32 %v487, %v487
    %v924 = vmul.f32 %v489, %v489
    %v925 = vmul.f32 %v492, %v492
    %v926 = vmul.f32 %v494, %v494
    %v927 = vmul.f32 %v497, %v497
    %v928 = vmul.f32 %v499, %v499
    %v929 = vmul.f32 %v502, %v502
    %v930 = vmul.f32 %v504, %v504
    %v931 = vmul.f32 %v507, %v507
    %v932 = vmul.f32 %v509, %v509
    %v933 = vmul.f32 %v512, %v512
    %v934 = vmul.f32 %v514, %v514
    %v935 = vmul.f32 %v517, %v517
    %v936 = vmul.f32 %v519, %v519
    %v937 = vmul.f32 %v522, %v522
    %v938 = vmul.f32 %v524, %v524
    %v939 = vmul.f32 %v527, %v527
    %v940 = vmul.f32 %v529, %v529
    %v941 = vmul.f32 %v532, %v532
    %v942 = vmul.f32 %v534, %v534
    %v943 = vmul.f32 %v537, %v537
    %v944 = vmul.f32 %v539, %v539
    %v945 = vmul.f32 %v542, %v542
    %v946 = vmul.f32 %v544, %v544
    %v947 = vmul.f32 %v547, %v547
    %v948 = vmul.f32 %v549, %v549
    %v949 = vmul.f32 %v552, %v552
    %v950 = vmul.f32 %v554, %v554
    %v951 = vmul.f32 %v557, %v557
    %v952 = vmul.f32 %v559, %v559
    %v953 = vmul.f32 %v562, %v562
    %v954 = vmul.f32 %v564, %v564
    %v955 = vmul.f32 %v567, %v567
    %v956 = vmul.f32 %v569, %v569
    %v957 = vmul.f32 %v572, %v572
    %v958 = vmul.f32 %v574, %v574
    %v959 = vmul.f32 %v577, %v577
    %v960 = vmul.f32 %v579, %v579
    %v961 = vmul.f32 %v582, %v582
    %v962 = vmul.f32 %v584, %v584
    %v963 = vmul.f32 %v587, %v587
    %v964 = vmul.f32 %v589, %v589
    %v965 = vmul.f32 %v592, %v592
    %v966 = vmul.f32 %v594, %v594
    %v967 = vmul.f32 %v597, %v597
    %v968 = vmul.f32 %v599, %v599
    %v969 = vadd.f32 %v905, %v906
    %v970 = vadd.f32 %v969, %v907
    %v971 = vadd.f32 %v970, %v908
    %v972 = vadd.f32 %v971, %v909
    %v973 = vadd.f32 %v972, %v910
    %v974 = vadd.f32 %v973, %v911
    %v975 = vadd.f32 %v974, %v912
    %v976 = vadd.f32 %v975, %v913
    %v977 = vadd.f32 %v976, %v914
    %v978 = vadd.f32 %v977, %v915
    %v979 = vadd.f32 %v978, %v916
    %v980 = vadd.f32 %v979, %v917
    %v981 = vadd.f32 %v980, %v918
    %v982 = vadd.f32 %v981, %v919
    %v983 = vadd.f32 %v982, %v920
    %v984 = vadd.f32 %v983, %v921
    %v985 = vadd.f32 %v984, %v922
    %v986 = vadd.f32 %v985, %v923
    %v987 = vadd.f32 %v986, %v924
    %v988 = vadd.f32 %v987, %v925
    %v989 = vadd.f32 %v988, %v926
    %v990 = vadd.f32 %v989, %v927
    %v991 = vadd.f32 %v990, %v928
    %v992 = vadd.f32 %v991, %v929
    %v993 = vadd.f32 %v992, %v930
    %v994 = vadd.f32 %v993, %v931
    %v995 = vadd.f32 %v994, %v932
    %v996 = vadd.f32 %v995, %v933
    %v997 = vadd.f32 %v996, %v934
    %v998 = vadd.f32 %v997, %v935
    %v999 = vadd.f32 %v998, %v936
    %v1000 = vadd.f32 %v999, %v937
    %v1001 = vadd.f32 %v1000, %v938
    %v1002 = vadd.f32 %v1001, %v939
    %v1003 = vadd.f32 %v1002, %v940
    %v1004 = vadd.f32 %v1003, %v941
    %v1005 = vadd.f32 %v1004, %v942
    %v1006 = vadd.f32 %v1005, %v943
    %v1007 = vadd.f32 %v1006, %v944
    %v1008 = vadd.f32 %v1007, %v945
    %v1009 = vadd.f32 %v1008, %v946
    %v1010 = vadd.f32 %v1009, %v947
    %v1011 = vadd.f32 %v1010, %v948
    %v1012 = vadd.f32 %v1011, %v949
    %v1013 = vadd.f32 %v1012, %v950
    %v1014 = vadd.f32 %v1013, %v951
    %v1015 = vadd.f32 %v1014, %v952
    %v1016 = vadd.f32 %v1015, %v953
    %v1017 = vadd.f32 %v1016, %v954
    %v1018 = vadd.f32 %v1017, %v955
    %v1019 = vadd.f32 %v1018, %v956
    %v1020 = vadd.f32 %v1019, %v957
    %v1021 = vadd.f32 %v1020, %v958
    %v1022 = vadd.f32 %v1021, %v959
    %v1023 = vadd.f32 %v1022, %v960
    %v1024 = vadd.f32 %v1023, %v961
    %v1025 = vadd.f32 %v1024, %v962
    %v1026 = vadd.f32 %v1025, %v963
    %v1027 = vadd.f32 %v1026, %v964
    %v1028 = vadd.f32 %v1027, %v965
    %v1029 = vadd.f32 %v1028, %v966
    %v1030 = vadd.f32 %v1029, %v967
    %v1031 = vadd.f32 %v1030, %v968
    %v1032 = vrot.slane %v1031, 4
    %v1033 = vadd.f32 %v1031, %v1032
    %v1034 = vrot.slane %v1033, 2
    %v1035 = vadd.f32 %v1033, %v1034
    %v1036 = vrot.slane %v1035, 1
    %v1037 = vadd.f32 %v1035, %v1036
    %v1038 = vmul.f32 %v1037, 0.001953125
    %v1039 = vmul.f32 %v904, %v904
    %v1040 = vsub.f32 %v1038, %v1039
    %v1041 = vmax.f32 %v1040, 0.0
    %v1042 = vadd.f32 %v1041, 1e-05
    %v1043 = vrsqrt.pop %v1042
    %v1044 = vmul.f32 %v1043, %v1042
    %v1045 = vmul.f32 %v1044, %v1043
    %v1046 = vmul.f32 0.5, %v1045
    %v1047 = vsub.f32 1.5, %v1046
    %v1048 = vmul.f32 %v1043, %v1047
    %vm1049 = vweird.f32 %v1042
    %vm1050 = vweird.f32 %v1043
    %vm1051 = vmor %vm1049, %vm1050
    %v1052 = vsel %vm1051, %v1043, %v1048
    %v1053 = vmul.f32 %v79, %v1052
    %v1054 = vmul.f32 %v1053, %v904
    %v1056 = vrot.slane %v1054, 7
    %v1058 = vsub.f32 %v79, %v1056
    %v1059 = vperm.slane %v1053, 0
    %v1060 = vmul.f32 %v442, %v1059
    %v1061 = vmul.f32 %v444, %v1059
    %v1062 = vmul.f32 %v447, %v1059
    %v1063 = vmul.f32 %v449, %v1059
    %v1064 = vmul.f32 %v452, %v1059
    %v1065 = vmul.f32 %v454, %v1059
    %v1066 = vmul.f32 %v457, %v1059
    %v1067 = vmul.f32 %v459, %v1059
    %v1068 = vmul.f32 %v462, %v1059
    %v1069 = vmul.f32 %v464, %v1059
    %v1070 = vmul.f32 %v467, %v1059
    %v1071 = vmul.f32 %v469, %v1059
    %v1072 = vmul.f32 %v472, %v1059
    %v1073 = vmul.f32 %v474, %v1059
    %v1074 = vmul.f32 %v477, %v1059
    %v1075 = vmul.f32 %v479, %v1059
    %v1076 = vmul.f32 %v482, %v1059
    %v1077 = vmul.f32 %v484, %v1059
    %v1078 = vmul.f32 %v487, %v1059
    %v1079 = vmul.f32 %v489, %v1059
    %v1080 = vmul.f32 %v492, %v1059
    %v1081 = vmul.f32 %v494, %v1059
    %v1082 = vmul.f32 %v497, %v1059
    %v1083 = vmul.f32 %v499, %v1059
    %v1084 = vmul.f32 %v502, %v1059
    %v1085 = vmul.f32 %v504, %v1059
    %v1086 = vmul.f32 %v507, %v1059
    %v1087 = vmul.f32 %v509, %v1059
    %v1088 = vmul.f32 %v512, %v1059
    %v1089 = vmul.f32 %v514, %v1059
    %v1090 = vmul.f32 %v517, %v1059
    %v1091 = vmul.f32 %v519, %v1059
    %v1092 = vmul.f32 %v522, %v1059
    %v1093 = vmul.f32 %v524, %v1059
    %v1094 = vmul.f32 %v527, %v1059
    %v1095 = vmul.f32 %v529, %v1059
    %v1096 = vmul.f32 %v532, %v1059
    %v1097 = vmul.f32 %v534, %v1059
    %v1098 = vmul.f32 %v537, %v1059
    %v1099 = vmul.f32 %v539, %v1059
    %v1100 = vmul.f32 %v542, %v1059
    %v1101 = vmul.f32 %v544, %v1059
    %v1102 = vmul.f32 %v547, %v1059
    %v1103 = vmul.f32 %v549, %v1059
    %v1104 = vmul.f32 %v552, %v1059
    %v1105 = vmul.f32 %v554, %v1059
    %v1106 = vmul.f32 %v557, %v1059
    %v1107 = vmul.f32 %v559, %v1059
    %v1108 = vmul.f32 %v562, %v1059
    %v1109 = vmul.f32 %v564, %v1059
    %v1110 = vmul.f32 %v567, %v1059
    %v1111 = vmul.f32 %v569, %v1059
    %v1112 = vmul.f32 %v572, %v1059
    %v1113 = vmul.f32 %v574, %v1059
    %v1114 = vmul.f32 %v577, %v1059
    %v1115 = vmul.f32 %v579, %v1059
    %v1116 = vmul.f32 %v582, %v1059
    %v1117 = vmul.f32 %v584, %v1059
    %v1118 = vmul.f32 %v587, %v1059
    %v1119 = vmul.f32 %v589, %v1059
    %v1120 = vmul.f32 %v592, %v1059
    %v1121 = vmul.f32 %v594, %v1059
    %v1122 = vmul.f32 %v597, %v1059
    %v1123 = vmul.f32 %v599, %v1059
    %v1124 = vperm.slane %v1058, 1
    %v1125 = vadd.f32 %v1060, %v1124
    %v1126 = vadd.f32 %v1061, %v1124
    %v1127 = vadd.f32 %v1062, %v1124
    %v1128 = vadd.f32 %v1063, %v1124
    %v1129 = vadd.f32 %v1064, %v1124
    %v1130 = vadd.f32 %v1065, %v1124
    %v1131 = vadd.f32 %v1066, %v1124
    %v1132 = vadd.f32 %v1067, %v1124
    %v1133 = vadd.f32 %v1068, %v1124
    %v1134 = vadd.f32 %v1069, %v1124
    %v1135 = vadd.f32 %v1070, %v1124
    %v1136 = vadd.f32 %v1071, %v1124
    %v1137 = vadd.f32 %v1072, %v1124
    %v1138 = vadd.f32 %v1073, %v1124
    %v1139 = vadd.f32 %v1074, %v1124
    %v1140 = vadd.f32 %v1075, %v1124
    %v1141 = vadd.f32 %v1076, %v1124
    %v1142 = vadd.f32 %v1077, %v1124
    %v1143 = vadd.f32 %v1078, %v1124
    %v1144 = vadd.f32 %v1079, %v1124
    %v1145 = vadd.f32 %v1080, %v1124
    %v1146 = vadd.f32 %v1081, %v1124
    %v1147 = vadd.f32 %v1082, %v1124
    %v1148 = vadd.f32 %v1083, %v1124
    %v1149 = vadd.f32 %v1084, %v1124
    %v1150 = vadd.f32 %v1085, %v1124
    %v1151 = vadd.f32 %v1086, %v1124
    %v1152 = vadd.f32 %v1087, %v1124
    %v1153 = vadd.f32 %v1088, %v1124
    %v1154 = vadd.f32 %v1089, %v1124
    %v1155 = vadd.f32 %v1090, %v1124
    %v1156 = vadd.f32 %v1091, %v1124
    %v1157 = vadd.f32 %v1092, %v1124
    %v1158 = vadd.f32 %v1093, %v1124
    %v1159 = vadd.f32 %v1094, %v1124
    %v1160 = vadd.f32 %v1095, %v1124
    %v1161 = vadd.f32 %v1096, %v1124
    %v1162 = vadd.f32 %v1097, %v1124
    %v1163 = vadd.f32 %v1098, %v1124
    %v1164 = vadd.f32 %v1099, %v1124
    %v1165 = vadd.f32 %v1100, %v1124
    %v1166 = vadd.f32 %v1101, %v1124
    %v1167 = vadd.f32 %v1102, %v1124
    %v1168 = vadd.f32 %v1103, %v1124
    %v1169 = vadd.f32 %v1104, %v1124
    %v1170 = vadd.f32 %v1105, %v1124
    %v1171 = vadd.f32 %v1106, %v1124
    %v1172 = vadd.f32 %v1107, %v1124
    %v1173 = vadd.f32 %v1108, %v1124
    %v1174 = vadd.f32 %v1109, %v1124
    %v1175 = vadd.f32 %v1110, %v1124
    %v1176 = vadd.f32 %v1111, %v1124
    %v1177 = vadd.f32 %v1112, %v1124
    %v1178 = vadd.f32 %v1113, %v1124
    %v1179 = vadd.f32 %v1114, %v1124
    %v1180 = vadd.f32 %v1115, %v1124
    %v1181 = vadd.f32 %v1116, %v1124
    %v1182 = vadd.f32 %v1117, %v1124
    %v1183 = vadd.f32 %v1118, %v1124
    %v1184 = vadd.f32 %v1119, %v1124
    %v1185 = vadd.f32 %v1120, %v1124
    %v1186 = vadd.f32 %v1121, %v1124
    %v1187 = vadd.f32 %v1122, %v1124
    %v1188 = vadd.f32 %v1123, %v1124
    %v1189 = vmax.f32 %v1125, 0.0
    %v1190 = vmax.f32 %v1126, 0.0
    %v1191 = vmax.f32 %v1127, 0.0
    %v1192 = vmax.f32 %v1128, 0.0
    %v1193 = vmax.f32 %v1129, 0.0
    %v1194 = vmax.f32 %v1130, 0.0
    %v1195 = vmax.f32 %v1131, 0.0
    %v1196 = vmax.f32 %v1132, 0.0
    %v1197 = vmax.f32 %v1133, 0.0
    %v1198 = vmax.f32 %v1134, 0.0
    %v1199 = vmax.f32 %v1135, 0.0
    %v1200 = vmax.f32 %v1136, 0.0
    %v1201 = vmax.f32 %v1137, 0.0
    %v1202 = vmax.f32 %v1138, 0.0
    %v1203 = vmax.f32 %v1139, 0.0
    %v1204 = vmax.f32 %v1140, 0.0
    %v1205 = vmax.f32 %v1141, 0.0
    %v1206 = vmax.f32 %v1142, 0.0
    %v1207 = vmax.f32 %v1143, 0.0
    %v1208 = vmax.f32 %v1144, 0.0
    %v1209 = vmax.f32 %v1145, 0.0
    %v1210 = vmax.f32 %v1146, 0.0
    %v1211 = vmax.f32 %v1147, 0.0
    %v1212 = vmax.f32 %v1148, 0.0
    %v1213 = vmax.f32 %v1149, 0.0
    %v1214 = vmax.f32 %v1150, 0.0
    %v1215 = vmax.f32 %v1151, 0.0
    %v1216 = vmax.f32 %v1152, 0.0
    %v1217 = vmax.f32 %v1153, 0.0
    %v1218 = vmax.f32 %v1154, 0.0
    %v1219 = vmax.f32 %v1155, 0.0
    %v1220 = vmax.f32 %v1156, 0.0
    %v1221 = vmax.f32 %v1157, 0.0
    %v1222 = vmax.f32 %v1158, 0.0
    %v1223 = vmax.f32 %v1159, 0.0
    %v1224 = vmax.f32 %v1160, 0.0
    %v1225 = vmax.f32 %v1161, 0.0
    %v1226 = vmax.f32 %v1162, 0.0
    %v1227 = vmax.f32 %v1163, 0.0
    %v1228 = vmax.f32 %v1164, 0.0
    %v1229 = vmax.f32 %v1165, 0.0
    %v1230 = vmax.f32 %v1166, 0.0
    %v1231 = vmax.f32 %v1167, 0.0
    %v1232 = vmax.f32 %v1168, 0.0
    %v1233 = vmax.f32 %v1169, 0.0
    %v1234 = vmax.f32 %v1170, 0.0
    %v1235 = vmax.f32 %v1171, 0.0
    %v1236 = vmax.f32 %v1172, 0.0
    %v1237 = vmax.f32 %v1173, 0.0
    %v1238 = vmax.f32 %v1174, 0.0
    %v1239 = vmax.f32 %v1175, 0.0
    %v1240 = vmax.f32 %v1176, 0.0
    %v1241 = vmax.f32 %v1177, 0.0
    %v1242 = vmax.f32 %v1178, 0.0
    %v1243 = vmax.f32 %v1179, 0.0
    %v1244 = vmax.f32 %v1180, 0.0
    %v1245 = vmax.f32 %v1181, 0.0
    %v1246 = vmax.f32 %v1182, 0.0
    %v1247 = vmax.f32 %v1183, 0.0
    %v1248 = vmax.f32 %v1184, 0.0
    %v1249 = vmax.f32 %v1185, 0.0
    %v1250 = vmax.f32 %v1186, 0.0
    %v1251 = vmax.f32 %v1187, 0.0
    %v1252 = vmax.f32 %v1188, 0.0
    %1253 = vst [vmem:[#allocation2] sm:$0xff] 0.0
    %1254 = vst [vmem:[#allocation2 + $0x8] sm:$0xff] 0.0
    %1255 = vst [vmem:[#allocation2 + $0x10] sm:$0x3] 0.0
    %1256 = vst [vmem:[#allocation2 + $0x18] sm:$0xff] 0.0
    %1257 = vst [vmem:[#allocation2 + $0x20] sm:$0xff] 0.0
    %1258 = vst [vmem:[#allocation2 + $0x28] sm:$0x3] 0.0
    %1259 = vst [vmem:[#allocation2 + $0x30] sm:$0xff] 0.0
    %1260 = vst [vmem:[#allocation2 + $0x38] sm:$0xff] 0.0
    %1261 = vst [vmem:[#allocation2 + $0x40] sm:$0x3] 0.0
    %1262 = vst [vmem:[#allocation2 + $0x48] sm:$0xff] 0.0
    %1263 = vst [vmem:[#allocation2 + $0x50] sm:$0xff] 0.0
    %1264 = vst [vmem:[#allocation2 + $0x58] sm:$0x3] 0.0
    %1265 = vst [vmem:[#allocation2 + $0x60] sm:$0xff] 0.0
    %1266 = vst [vmem:[#allocation2 + $0x68] sm:$0xff] 0.0
    %1267 = vst [vmem:[#allocation2 + $0x70] sm:$0x3] 0.0
    %1268 = vst [vmem:[#allocation2 + $0x78] sm:$0xff] 0.0
    %1269 = vst [vmem:[#allocation2 + $0x80] sm:$0xff] 0.0
    %1270 = vst [vmem:[#allocation2 + $0x88] sm:$0x3] 0.0
    %1271 = vst [vmem:[#allocation2 + $0x90] sm:$0xff] 0.0
    %1272 = vst [vmem:[#allocation2 + $0x98] sm:$0xff] 0.0
    %1273 = vst [vmem:[#allocation2 + $0xa0] sm:$0x3] 0.0
    %1274 = vst [vmem:[#allocation2 + $0xa8] sm:$0xff] 0.0
    %1275 = vst [vmem:[#allocation2 + $0xb0] sm:$0xff] 0.0
    %1276 = vst [vmem:[#allocation2 + $0xb8] sm:$0x3] 0.0
    %1277 = vst [vmem:[#allocation2 + $0xc0] sm:$0xff] 0.0
    %1278 = vst [vmem:[#allocation2 + $0xc8] sm:$0xff] 0.0
    %1279 = vst [vmem:[#allocation2 + $0xd0] sm:$0x3] 0.0
    %1280 = vst [vmem:[#allocation2 + $0xd8] sm:$0xff] 0.0
    %1281 = vst [vmem:[#allocation2 + $0xe0] sm:$0xff] 0.0
    %1282 = vst [vmem:[#allocation2 + $0xe8] sm:$0x3] 0.0
    %1283 = vst [vmem:[#allocation2 + $0xf0] sm:$0xff] 0.0
    %1284 = vst [vmem:[#allocation2 + $0xf8] sm:$0xff] 0.0
    %1285 = vst [vmem:[#allocation2 + $0x100] sm:$0x3] 0.0
    %1286 = vst [vmem:[#allocation2 + $0x108] sm:$0xff] 0.0
    %1287 = vst [vmem:[#allocation2 + $0x110] sm:$0xff] 0.0
    %1288 = vst [vmem:[#allocation2 + $0x118] sm:$0x3] 0.0
    %1289 = vst [vmem:[#allocation2 + $0x120] sm:$0xff] 0.0
    %1290 = vst [vmem:[#allocation2 + $0x128] sm:$0xff] 0.0
    %1291 = vst [vmem:[#allocation2 + $0x130] sm:$0x3] 0.0
    %1292 = vst [vmem:[#allocation2 + $0x138] sm:$0xff] 0.0
    %1293 = vst [vmem:[#allocation2 + $0x140] sm:$0xff] 0.0
    %1294 = vst [vmem:[#allocation2 + $0x148] sm:$0x3] 0.0
    %1295 = vst [vmem:[#allocation2 + $0x150] sm:$0xff] 0.0
    %1296 = vst [vmem:[#allocation2 + $0x158] sm:$0xff] 0.0
    %1297 = vst [vmem:[#allocation2 + $0x160] sm:$0x3] 0.0
    %1298 = vst [vmem:[#allocation2 + $0x168] sm:$0xff] 0.0
    %1299 = vst [vmem:[#allocation2 + $0x170] sm:$0xff] 0.0
    %1300 = vst [vmem:[#allocation2 + $0x178] sm:$0x3] 0.0
    %1301 = vst [vmem:[#allocation2 + $0x180] sm:$0xff] 0.0
    %1302 = vst [vmem:[#allocation2 + $0x188] sm:$0xff] 0.0
    %1303 = vst [vmem:[#allocation2 + $0x190] sm:$0x3] 0.0
    %1304 = vst [vmem:[#allocation2 + $0x198] sm:$0xff] 0.0
    %1305 = vst [vmem:[#allocation2 + $0x1a0] sm:$0xff] 0.0
    %1306 = vst [vmem:[#allocation2 + $0x1a8] sm:$0x3] 0.0
    %1307 = vst [vmem:[#allocation2 + $0x1b0] sm:$0xff] 0.0
    %1308 = vst [vmem:[#allocation2 + $0x1b8] sm:$0xff] 0.0
    %1309 = vst [vmem:[#allocation2 + $0x1c0] sm:$0x3] 0.0
    %1310 = vst [vmem:[#allocation2 + $0x1c8] sm:$0xff] 0.0
    %1311 = vst [vmem:[#allocation2 + $0x1d0] sm:$0xff] 0.0
    %1312 = vst [vmem:[#allocation2 + $0x1d8] sm:$0x3] 0.0
    %1313 = vst [vmem:[#allocation2 + $0x1e0] sm:$0xff] 0.0
    %1314 = vst [vmem:[#allocation2 + $0x1e8] sm:$0xff] 0.0
    %1315 = vst [vmem:[#allocation2 + $0x1f0] sm:$0x3] 0.0
    %1316 = vst [vmem:[#allocation2 + $0x1f8] sm:$0xff] 0.0
    %1317 = vst [vmem:[#allocation2 + $0x200] sm:$0xff] 0.0
    %1318 = vst [vmem:[#allocation2 + $0x208] sm:$0x3] 0.0
    %1319 = vst [vmem:[#allocation2 + $0x210] sm:$0xff] 0.0
    %1320 = vst [vmem:[#allocation2 + $0x218] sm:$0xff] 0.0
    %1321 = vst [vmem:[#allocation2 + $0x220] sm:$0x3] 0.0
    %1322 = vst [vmem:[#allocation2 + $0x228] sm:$0xff] 0.0
    %1323 = vst [vmem:[#allocation2 + $0x230] sm:$0xff] 0.0
    %1324 = vst [vmem:[#allocation2 + $0x238] sm:$0x3] 0.0
    %1325 = vst [vmem:[#allocation2 + $0x240] sm:$0xff] 0.0
    %1326 = vst [vmem:[#allocation2 + $0x248] sm:$0xff] 0.0
    %1327 = vst [vmem:[#allocation2 + $0x250] sm:$0x3] 0.0
    %1328 = vst [vmem:[#allocation2 + $0x258] sm:$0xff] 0.0
    %1329 = vst [vmem:[#allocation2 + $0x260] sm:$0xff] 0.0
    %1330 = vst [vmem:[#allocation2 + $0x268] sm:$0x3] 0.0
    %1331 = vst [vmem:[#allocation2 + $0x270] sm:$0xff] 0.0
    %1332 = vst [vmem:[#allocation2 + $0x278] sm:$0xff] 0.0
    %1333 = vst [vmem:[#allocation2 + $0x280] sm:$0x3] 0.0
    %1334 = vst [vmem:[#allocation2 + $0x288] sm:$0xff] 0.0
    %1335 = vst [vmem:[#allocation2 + $0x290] sm:$0xff] 0.0
    %1336 = vst [vmem:[#allocation2 + $0x298] sm:$0x3] 0.0
    %1337 = vst [vmem:[#allocation2 + $0x2a0] sm:$0xff] 0.0
    %1338 = vst [vmem:[#allocation2 + $0x2a8] sm:$0xff] 0.0
    %1339 = vst [vmem:[#allocation2 + $0x2b0] sm:$0x3] 0.0
    %1340 = vst [vmem:[#allocation2 + $0x2b8] sm:$0xff] 0.0
    %1341 = vst [vmem:[#allocation2 + $0x2c0] sm:$0xff] 0.0
    %1342 = vst [vmem:[#allocation2 + $0x2c8] sm:$0x3] 0.0
    %1343 = vst [vmem:[#allocation2 + $0x2d0] sm:$0xff] 0.0
    %1344 = vst [vmem:[#allocation2 + $0x2d8] sm:$0xff] 0.0
    %1345 = vst [vmem:[#allocation2 + $0x2e0] sm:$0x3] 0.0
    %1346 = vst [vmem:[#allocation2 + $0x2e8] sm:$0xff] 0.0
    %1347 = vst [vmem:[#allocation2 + $0x2f0] sm:$0xff] 0.0
    %1348 = vst [vmem:[#allocation2 + $0x2f8] sm:$0x3] 0.0
    %1349 = vst [vmem:[#allocation2 + $0x300] sm:$0xff] 0.0
    %1350 = vst [vmem:[#allocation2 + $0x308] sm:$0xff] 0.0
    %1351 = vst [vmem:[#allocation2 + $0x310] sm:$0x3] 0.0
    %1352 = vst [vmem:[#allocation2 + $0x318] sm:$0xff] 0.0
    %1353 = vst [vmem:[#allocation2 + $0x320] sm:$0xff] 0.0
    %1354 = vst [vmem:[#allocation2 + $0x328] sm:$0x3] 0.0
    %1355 = vst [vmem:[#allocation2 + $0x330] sm:$0xff] 0.0
    %1356 = vst [vmem:[#allocation2 + $0x338] sm:$0xff] 0.0
    %1357 = vst [vmem:[#allocation2 + $0x340] sm:$0x3] 0.0
    %1358 = vst [vmem:[#allocation2 + $0x348] sm:$0xff] 0.0
    %1359 = vst [vmem:[#allocation2 + $0x350] sm:$0xff] 0.0
    %1360 = vst [vmem:[#allocation2 + $0x358] sm:$0x3] 0.0
    %s1361 = scalar_lea.vmem [#allocation2], 24
    %1362 = vst [vmem:[%s1361 + $0x1] sm:$0xff] %v1189
    %1363 = vst [vmem:[%s1361 + $0x9] sm:$0xff] %v1190
    %1364 = vst [vmem:[%s1361 + $0x19] sm:$0xff] %v1191
    %1365 = vst [vmem:[%s1361 + $0x21] sm:$0xff] %v1192
    %1366 = vst [vmem:[%s1361 + $0x31] sm:$0xff] %v1193
    %1367 = vst [vmem:[%s1361 + $0x39] sm:$0xff] %v1194
    %1368 = vst [vmem:[%s1361 + $0x49] sm:$0xff] %v1195
    %1369 = vst [vmem:[%s1361 + $0x51] sm:$0xff] %v1196
    %1370 = vst [vmem:[%s1361 + $0x61] sm:$0xff] %v1197
    %1371 = vst [vmem:[%s1361 + $0x69] sm:$0xff] %v1198
    %1372 = vst [vmem:[%s1361 + $0x79] sm:$0xff] %v1199
    %1373 = vst [vmem:[%s1361 + $0x81] sm:$0xff] %v1200
    %1374 = vst [vmem:[%s1361 + $0x91] sm:$0xff] %v1201
    %1375 = vst [vmem:[%s1361 + $0x99] sm:$0xff] %v1202
    %1376 = vst [vmem:[%s1361 + $0xa9] sm:$0xff] %v1203
    %1377 = vst [vmem:[%s1361 + $0xb1] sm:$0xff] %v1204
    %1378 = vst [vmem:[%s1361 + $0xc1] sm:$0xff] %v1205
    %1379 = vst [vmem:[%s1361 + $0xc9] sm:$0xff] %v1206
    %1380 = vst [vmem:[%s1361 + $0xd9] sm:$0xff] %v1207
    %1381 = vst [vmem:[%s1361 + $0xe1] sm:$0xff] %v1208
    %1382 = vst [vmem:[%s1361 + $0xf1] sm:$0xff] %v1209
    %1383 = vst [vmem:[%s1361 + $0xf9] sm:$0xff] %v1210
    %1384 = vst [vmem:[%s1361 + $0x109] sm:$0xff] %v1211
    %1385 = vst [vmem:[%s1361 + $0x111] sm:$0xff] %v1212
    %1386 = vst [vmem:[%s1361 + $0x121] sm:$0xff] %v1213
    %1387 = vst [vmem:[%s1361 + $0x129] sm:$0xff] %v1214
    %1388 = vst [vmem:[%s1361 + $0x139] sm:$0xff] %v1215
    %1389 = vst [vmem:[%s1361 + $0x141] sm:$0xff] %v1216
    %1390 = vst [vmem:[%s1361 + $0x151] sm:$0xff] %v1217
    %1391 = vst [vmem:[%s1361 + $0x159] sm:$0xff] %v1218
    %1392 = vst [vmem:[%s1361 + $0x169] sm:$0xff] %v1219
    %1393 = vst [vmem:[%s1361 + $0x171] sm:$0xff] %v1220
    %1394 = vst [vmem:[%s1361 + $0x1b1] sm:$0xff] %v1221
    %1395 = vst [vmem:[%s1361 + $0x1b9] sm:$0xff] %v1222
    %1396 = vst [vmem:[%s1361 + $0x1c9] sm:$0xff] %v1223
    %1397 = vst [vmem:[%s1361 + $0x1d1] sm:$0xff] %v1224
    %1398 = vst [vmem:[%s1361 + $0x1e1] sm:$0xff] %v1225
    %1399 = vst [vmem:[%s1361 + $0x1e9] sm:$0xff] %v1226
    %1400 = vst [vmem:[%s1361 + $0x1f9] sm:$0xff] %v1227
    %1401 = vst [vmem:[%s1361 + $0x201] sm:$0xff] %v1228
    %1402 = vst [vmem:[%s1361 + $0x211] sm:$0xff] %v1229
    %1403 = vst [vmem:[%s1361 + $0x219] sm:$0xff] %v1230
    %1404 = vst [vmem:[%s1361 + $0x229] sm:$0xff] %v1231
    %1405 = vst [vmem:[%s1361 + $0x231] sm:$0xff] %v1232
    %1406 = vst [vmem:[%s1361 + $0x241] sm:$0xff] %v1233
    %1407 = vst [vmem:[%s1361 + $0x249] sm:$0xff] %v1234
    %1408 = vst [vmem:[%s1361 + $0x259] sm:$0xff] %v1235
    %1409 = vst [vmem:[%s1361 + $0x261] sm:$0xff] %v1236
    %1410 = vst [vmem:[%s1361 + $0x271] sm:$0xff] %v1237
    %1411 = vst [vmem:[%s1361 + $0x279] sm:$0xff] %v1238
    %1412 = vst [vmem:[%s1361 + $0x289] sm:$0xff] %v1239
    %1413 = vst [vmem:[%s1361 + $0x291] sm:$0xff] %v1240
    %1414 = vst [vmem:[%s1361 + $0x2a1] sm:$0xff] %v1241
    %1415 = vst [vmem:[%s1361 + $0x2a9] sm:$0xff] %v1242
    %1416 = vst [vmem:[%s1361 + $0x2b9] sm:$0xff] %v1243
    %1417 = vst [vmem:[%s1361 + $0x2c1] sm:$0xff] %v1244
    %1418 = vst [vmem:[%s1361 + $0x2d1] sm:$0xff] %v1245
    %1419 = vst [vmem:[%s1361 + $0x2d9] sm:$0xff] %v1246
    %1420 = vst [vmem:[%s1361 + $0x2e9] sm:$0xff] %v1247
    %1421 = vst [vmem:[%s1361 + $0x2f1] sm:$0xff] %v1248
    %1422 = vst [vmem:[%s1361 + $0x301] sm:$0xff] %v1249
    %1423 = vst [vmem:[%s1361 + $0x309] sm:$0xff] %v1250
    %1424 = vst [vmem:[%s1361 + $0x319] sm:$0xff] %v1251
    %1425 = vst [vmem:[%s1361 + $0x321] sm:$0xff] %v1252
    %v1426 = vld [vmem:[#allocation2] sm:$0xff]
    %v1427 = vld [vmem:[#allocation2 + $0x8] sm:$0xff]
    %v1428 = vld [vmem:[#allocation2 + $0x10] sm:$0x3]
    %v1429 = vld [vmem:[#allocation2 + $0x18] sm:$0xff]
    %v1430 = vld [vmem:[#allocation2 + $0x20] sm:$0xff]
    %v1431 = vld [vmem:[#allocation2 + $0x28] sm:$0x3]
    %v1432 = vld [vmem:[#allocation2 + $0x30] sm:$0xff]
    %v1433 = vld [vmem:[#allocation2 + $0x38] sm:$0xff]
    %v1434 = vld [vmem:[#allocation2 + $0x40] sm:$0x3]
    %v1435 = vld [vmem:[#allocation2 + $0x48] sm:$0xff]
    %v1436 = vld [vmem:[#allocation2 + $0x50] sm:$0xff]
    %v1437 = vld [vmem:[#allocation2 + $0x58] sm:$0x3]
    %v1438 = vld [vmem:[#allocation2 + $0x60] sm:$0xff]
    %v1439 = vld [vmem:[#allocation2 + $0x68] sm:$0xff]
    %v1440 = vld [vmem:[#allocation2 + $0x70] sm:$0x3]
    %v1441 = vld [vmem:[#allocation2 + $0x78] sm:$0xff]
    %v1442 = vld [vmem:[#allocation2 + $0x80] sm:$0xff]
    %v1443 = vld [vmem:[#allocation2 + $0x88] sm:$0x3]
    %v1444 = vld [vmem:[#allocation2 + $0x90] sm:$0xff]
    %v1445 = vld [vmem:[#allocation2 + $0x98] sm:$0xff]
    %v1446 = vld [vmem:[#allocation2 + $0xa0] sm:$0x3]
    %v1447 = vld [vmem:[#allocation2 + $0xa8] sm:$0xff]
    %v1448 = vld [vmem:[#allocation2 + $0xb0] sm:$0xff]
    %v1449 = vld [vmem:[#allocation2 + $0xb8] sm:$0x3]
    %v1450 = vld [vmem:[#allocation2 + $0xc0] sm:$0xff]
    %v1451 = vld [vmem:[#allocation2 + $0xc8] sm:$0xff]
    %v1452 = vld [vmem:[#allocation2 + $0xd0] sm:$0x3]
    %v1453 = vld [vmem:[#allocation2 + $0xd8] sm:$0xff]
    %v1454 = vld [vmem:[#allocation2 + $0xe0] sm:$0xff]
    %v1455 = vld [vmem:[#allocation2 + $0xe8] sm:$0x3]
    %v1456 = vld [vmem:[#allocation2 + $0xf0] sm:$0xff]
    %v1457 = vld [vmem:[#allocation2 + $0xf8] sm:$0xff]
    %v1458 = vld [vmem:[#allocation2 + $0x100] sm:$0x3]
    %v1459 = vld [vmem:[#allocation2 + $0x108] sm:$0xff]
    %v1460 = vld [vmem:[#allocation2 + $0x110] sm:$0xff]
    %v1461 = vld [vmem:[#allocation2 + $0x118] sm:$0x3]
    %v1462 = vld [vmem:[#allocation2 + $0x120] sm:$0xff]
    %v1463 = vld [vmem:[#allocation2 + $0x128] sm:$0xff]
    %v1464 = vld [vmem:[#allocation2 + $0x130] sm:$0x3]
    %v1465 = vld [vmem:[#allocation2 + $0x138] sm:$0xff]
    %v1466 = vld [vmem:[#allocation2 + $0x140] sm:$0xff]
    %v1467 = vld [vmem:[#allocation2 + $0x148] sm:$0x3]
    %v1468 = vld [vmem:[#allocation2 + $0x150] sm:$0xff]
    %v1469 = vld [vmem:[#allocation2 + $0x158] sm:$0xff]
    %v1470 = vld [vmem:[#allocation2 + $0x160] sm:$0x3]
    %v1471 = vld [vmem:[#allocation2 + $0x168] sm:$0xff]
    %v1472 = vld [vmem:[#allocation2 + $0x170] sm:$0xff]
    %v1473 = vld [vmem:[#allocation2 + $0x178] sm:$0x3]
    %v1474 = vld [vmem:[#allocation2 + $0x180] sm:$0xff]
    %v1475 = vld [vmem:[#allocation2 + $0x188] sm:$0xff]
    %v1476 = vld [vmem:[#allocation2 + $0x190] sm:$0x3]
    %v1477 = vld [vmem:[#allocation2 + $0x198] sm:$0xff]
    %v1478 = vld [vmem:[#allocation2 + $0x1a0] sm:$0xff]
    %v1479 = vld [vmem:[#allocation2 + $0x1a8] sm:$0x3]
    %v1480 = vld [vmem:[#allocation2 + $0x1b0] sm:$0xff]
    %v1481 = vld [vmem:[#allocation2 + $0x1b8] sm:$0xff]
    %v1482 = vld [vmem:[#allocation2 + $0x1c0] sm:$0x3]
    %v1483 = vld [vmem:[#allocation2 + $0x1c8] sm:$0xff]
    %v1484 = vld [vmem:[#allocation2 + $0x1d0] sm:$0xff]
    %v1485 = vld [vmem:[#allocation2 + $0x1d8] sm:$0x3]
    %v1486 = vld [vmem:[#allocation2 + $0x1e0] sm:$0xff]
    %v1487 = vld [vmem:[#allocation2 + $0x1e8] sm:$0xff]
    %v1488 = vld [vmem:[#allocation2 + $0x1f0] sm:$0x3]
    %v1489 = vld [vmem:[#allocation2 + $0x1f8] sm:$0xff]
    %v1490 = vld [vmem:[#allocation2 + $0x200] sm:$0xff]
    %v1491 = vld [vmem:[#allocation2 + $0x208] sm:$0x3]
    %v1492 = vld [vmem:[#allocation2 + $0x210] sm:$0xff]
    %v1493 = vld [vmem:[#allocation2 + $0x218] sm:$0xff]
    %v1494 = vld [vmem:[#allocation2 + $0x220] sm:$0x3]
    %v1495 = vld [vmem:[#allocation2 + $0x228] sm:$0xff]
    %v1496 = vld [vmem:[#allocation2 + $0x230] sm:$0xff]
    %v1497 = vld [vmem:[#allocation2 + $0x238] sm:$0x3]
    %v1498 = vld [vmem:[#allocation2 + $0x240] sm:$0xff]
    %v1499 = vld [vmem:[#allocation2 + $0x248] sm:$0xff]
    %v1500 = vld [vmem:[#allocation2 + $0x250] sm:$0x3]
    %v1501 = vld [vmem:[#allocation2 + $0x258] sm:$0xff]
    %v1502 = vld [vmem:[#allocation2 + $0x260] sm:$0xff]
    %v1503 = vld [vmem:[#allocation2 + $0x268] sm:$0x3]
    %v1504 = vld [vmem:[#allocation2 + $0x270] sm:$0xff]
    %v1505 = vld [vmem:[#allocation2 + $0x278] sm:$0xff]
    %v1506 = vld [vmem:[#allocation2 + $0x280] sm:$0x3]
    %v1507 = vld [vmem:[#allocation2 + $0x288] sm:$0xff]
    %v1508 = vld [vmem:[#allocation2 + $0x290] sm:$0xff]
    %v1509 = vld [vmem:[#allocation2 + $0x298] sm:$0x3]
    %v1510 = vld [vmem:[#allocation2 + $0x2a0] sm:$0xff]
    %v1511 = vld [vmem:[#allocation2 + $0x2a8] sm:$0xff]
    %v1512 = vld [vmem:[#allocation2 + $0x2b0] sm:$0x3]
    %v1513 = vld [vmem:[#allocation2 + $0x2b8] sm:$0xff]
    %v1514 = vld [vmem:[#allocation2 + $0x2c0] sm:$0xff]
    %v1515 = vld [vmem:[#allocation2 + $0x2c8] sm:$0x3]
    %v1516 = vld [vmem:[#allocation2 + $0x2d0] sm:$0xff]
    %v1517 = vld [vmem:[#allocation2 + $0x2d8] sm:$0xff]
    %v1518 = vld [vmem:[#allocation2 + $0x2e0] sm:$0x3]
    %v1519 = vld [vmem:[#allocation2 + $0x2e8] sm:$0xff]
    %v1520 = vld [vmem:[#allocation2 + $0x2f0] sm:$0xff]
    %v1521 = vld [vmem:[#allocation2 + $0x2f8] sm:$0x3]
    %v1522 = vld [vmem:[#allocation2 + $0x300] sm:$0xff]
    %v1523 = vld [vmem:[#allocation2 + $0x308] sm:$0xff]
    %v1524 = vld [vmem:[#allocation2 + $0x310] sm:$0x3]
    %v1525 = vld [vmem:[#allocation2 + $0x318] sm:$0xff]
    %v1526 = vld [vmem:[#allocation2 + $0x320] sm:$0xff]
    %v1527 = vld [vmem:[#allocation2 + $0x328] sm:$0x3]
    %v1528 = vld [vmem:[#allocation2 + $0x330] sm:$0xff]
    %v1529 = vld [vmem:[#allocation2 + $0x338] sm:$0xff]
    %v1530 = vld [vmem:[#allocation2 + $0x340] sm:$0x3]
    %v1531 = vld [vmem:[#allocation2 + $0x348] sm:$0xff]
    %v1532 = vld [vmem:[#allocation2 + $0x350] sm:$0xff]
    %v1533 = vld [vmem:[#allocation2 + $0x358] sm:$0x3]
    %v1534 = vpack.c.bf16 %v1427, %v1426
    %v1535 = vpack.c.bf16 %v1430, %v1429
    %v1536 = vpack.c.bf16 %v1433, %v1432
    %v1537 = vpack.c.bf16 %v1436, %v1435
    %v1538 = vpack.c.bf16 %v1439, %v1438
    %v1539 = vpack.c.bf16 %v1442, %v1441
    %v1540 = vpack.c.bf16 %v1445, %v1444
    %v1541 = vpack.c.bf16 %v1448, %v1447
    %v1542 = vpack.c.bf16 %v1451, %v1450
    %v1543 = vpack.c.bf16 %v1454, %v1453
    %v1544 = vpack.c.bf16 %v1457, %v1456
    %v1545 = vpack.c.bf16 %v1460, %v1459
    %v1546 = vpack.c.bf16 %v1463, %v1462
    %v1547 = vpack.c.bf16 %v1466, %v1465
    %v1548 = vpack.c.bf16 %v1469, %v1468
    %v1549 = vpack.c.bf16 %v1472, %v1471
    %v1550 = vpack.c.bf16 %v1481, %v1480
    %v1551 = vpack.c.bf16 %v1484, %v1483
    %v1552 = vpack.c.bf16 %v1487, %v1486
    %v1553 = vpack.c.bf16 %v1490, %v1489
    %v1554 = vpack.c.bf16 %v1493, %v1492
    %v1555 = vpack.c.bf16 %v1496, %v1495
    %v1556 = vpack.c.bf16 %v1499, %v1498
    %v1557 = vpack.c.bf16 %v1502, %v1501
    %v1558 = vpack.c.bf16 %v1505, %v1504
    %v1559 = vpack.c.bf16 %v1508, %v1507
    %v1560 = vpack.c.bf16 %v1511, %v1510
    %v1561 = vpack.c.bf16 %v1514, %v1513
    %v1562 = vpack.c.bf16 %v1517, %v1516
    %v1563 = vpack.c.bf16 %v1520, %v1519
    %v1564 = vpack.c.bf16 %v1523, %v1522
    %v1565 = vpack.c.bf16 %v1526, %v1525
    %v1566 = vld [vmem:[#allocation8] sm:$0xf]
    %v1567 = vld [vmem:[#allocation8 + $0x4] sm:$0xf]
    %v1568 = vld [vmem:[#allocation8 + $0x8] sm:$0xf]
    %v1569 = vld [vmem:[#allocation8 + $0xc] sm:$0xf]
    %v1570 = vld [vmem:[#allocation8 + $0x10] sm:$0xf]
    %v1571 = vld [vmem:[#allocation8 + $0x14] sm:$0xf]
    %v1572 = vld [vmem:[#allocation8 + $0x18] sm:$0xf]
    %v1573 = vld [vmem:[#allocation8 + $0x1c] sm:$0xf]
    %v1574 = vld [vmem:[#allocation8 + $0x20] sm:$0xf]
    %v1575 = vld [vmem:[#allocation8 + $0x24] sm:$0xf]
    %v1576 = vld [vmem:[#allocation8 + $0x28] sm:$0xf]
    %v1577 = vld [vmem:[#allocation8 + $0x2c] sm:$0xf]
    %v1578 = vld [vmem:[#allocation8 + $0x30] sm:$0xf]
    %v1579 = vld [vmem:[#allocation8 + $0x34] sm:$0xf]
    %v1580 = vld [vmem:[#allocation8 + $0x38] sm:$0xf]
    %v1581 = vld [vmem:[#allocation8 + $0x3c] sm:$0xf]
    %vm1678 = vcmask 1046528
    %v1679 = vrot.slane %v1426, 1
    %v1680 = vrot.slane %v1427, 1
    %v1681 = vsel %vm1678, %v1679, %v1680
    %v1682 = vrot.slane %v1428, 1
    %v1683 = vsel %vm1678, %v1680, %v1682
    %v1684 = vrot.slane %v1429, 1
    %v1685 = vrot.slane %v1430, 1
    %v1686 = vsel %vm1678, %v1684, %v1685
    %v1687 = vrot.slane %v1431, 1
    %v1688 = vsel %vm1678, %v1685, %v1687
    %v1689 = vrot.slane %v1432, 1
    %v1690 = vrot.slane %v1433, 1
    %v1691 = vsel %vm1678, %v1689, %v1690
    %v1692 = vrot.slane %v1434, 1
    %v1693 = vsel %vm1678, %v1690, %v1692
    %v1694 = vrot.slane %v1435, 1
    %v1695 = vrot.slane %v1436, 1
    %v1696 = vsel %vm1678, %v1694, %v1695
    %v1697 = vrot.slane %v1437, 1
    %v1698 = vsel %vm1678, %v1695, %v1697
    %v1699 = vrot.slane %v1438, 1
    %v1700 = vrot.slane %v1439, 1
    %v1701 = vsel %vm1678, %v1699, %v1700
    %v1702 = vrot.slane %v1440, 1
    %v1703 = vsel %vm1678, %v1700, %v1702
    %v1704 = vrot.slane %v1441, 1
    %v1705 = vrot.slane %v1442, 1
    %v1706 = vsel %vm1678, %v1704, %v1705
    %v1707 = vrot.slane %v1443, 1
    %v1708 = vsel %vm1678, %v1705, %v1707
    %v1709 = vrot.slane %v1444, 1
    %v1710 = vrot.slane %v1445, 1
    %v1711 = vsel %vm1678, %v1709, %v1710
    %v1712 = vrot.slane %v1446, 1
    %v1713 = vsel %vm1678, %v1710, %v1712
    %v1714 = vrot.slane %v1447, 1
    %v1715 = vrot.slane %v1448, 1
    %v1716 = vsel %vm1678, %v1714, %v1715
    %v1717 = vrot.slane %v1449, 1
    %v1718 = vsel %vm1678, %v1715, %v1717
    %v1719 = vrot.slane %v1450, 1
    %v1720 = vrot.slane %v1451, 1
    %v1721 = vsel %vm1678, %v1719, %v1720
    %v1722 = vrot.slane %v1452, 1
    %v1723 = vsel %vm1678, %v1720, %v1722
    %v1724 = vrot.slane %v1453, 1
    %v1725 = vrot.slane %v1454, 1
    %v1726 = vsel %vm1678, %v1724, %v1725
    %v1727 = vrot.slane %v1455, 1
    %v1728 = vsel %vm1678, %v1725, %v1727
    %v1729 = vrot.slane %v1456, 1
    %v1730 = vrot.slane %v1457, 1
    %v1731 = vsel %vm1678, %v1729, %v1730
    %v1732 = vrot.slane %v1458, 1
    %v1733 = vsel %vm1678, %v1730, %v1732
    %v1734 = vrot.slane %v1459, 1
    %v1735 = vrot.slane %v1460, 1
    %v1736 = vsel %vm1678, %v1734, %v1735
    %v1737 = vrot.slane %v1461, 1
    %v1738 = vsel %vm1678, %v1735, %v1737
    %v1739 = vrot.slane %v1462, 1
    %v1740 = vrot.slane %v1463, 1
    %v1741 = vsel %vm1678, %v1739, %v1740
    %v1742 = vrot.slane %v1464, 1
    %v1743 = vsel %vm1678, %v1740, %v1742
    %v1744 = vrot.slane %v1465, 1
    %v1745 = vrot.slane %v1466, 1
    %v1746 = vsel %vm1678, %v1744, %v1745
    %v1747 = vrot.slane %v1467, 1
    %v1748 = vsel %vm1678, %v1745, %v1747
    %v1749 = vrot.slane %v1468, 1
    %v1750 = vrot.slane %v1469, 1
    %v1751 = vsel %vm1678, %v1749, %v1750
    %v1752 = vrot.slane %v1470, 1
    %v1753 = vsel %vm1678, %v1750, %v1752
    %v1754 = vrot.slane %v1471, 1
    %v1755 = vrot.slane %v1472, 1
    %v1756 = vsel %vm1678, %v1754, %v1755
    %v1757 = vrot.slane %v1473, 1
    %v1758 = vsel %vm1678, %v1755, %v1757
    %v1759 = vrot.slane %v1480, 1
    %v1760 = vrot.slane %v1481, 1
    %v1761 = vsel %vm1678, %v1759, %v1760
    %v1762 = vrot.slane %v1482, 1
    %v1763 = vsel %vm1678, %v1760, %v1762
    %v1764 = vrot.slane %v1483, 1
    %v1765 = vrot.slane %v1484, 1
    %v1766 = vsel %vm1678, %v1764, %v1765
    %v1767 = vrot.slane %v1485, 1
    %v1768 = vsel %vm1678, %v1765, %v1767
    %v1769 = vrot.slane %v1486, 1
    %v1770 = vrot.slane %v1487, 1
    %v1771 = vsel %vm1678, %v1769, %v1770
    %v1772 = vrot.slane %v1488, 1
    %v1773 = vsel %vm1678, %v1770, %v1772
    %v1774 = vrot.slane %v1489, 1
    %v1775 = vrot.slane %v1490, 1
    %v1776 = vsel %vm1678, %v1774, %v1775
    %v1777 = vrot.slane %v1491, 1
    %v1778 = vsel %vm1678, %v1775, %v1777
    %v1779 = vrot.slane %v1492, 1
    %v1780 = vrot.slane %v1493, 1
    %v1781 = vsel %vm1678, %v1779, %v1780
    %v1782 = vrot.slane %v1494, 1
    %v1783 = vsel %vm1678, %v1780, %v1782
    %v1784 = vrot.slane %v1495, 1
    %v1785 = vrot.slane %v1496, 1
    %v1786 = vsel %vm1678, %v1784, %v1785
    %v1787 = vrot.slane %v1497, 1
    %v1788 = vsel %vm1678, %v1785, %v1787
    %v1789 = vrot.slane %v1498, 1
    %v1790 = vrot.slane %v1499, 1
    %v1791 = vsel %vm1678, %v1789, %v1790
    %v1792 = vrot.slane %v1500, 1
    %v1793 = vsel %vm1678, %v1790, %v1792
    %v1794 = vrot.slane %v1501, 1
    %v1795 = vrot.slane %v1502, 1
    %v1796 = vsel %vm1678, %v1794, %v1795
    %v1797 = vrot.slane %v1503, 1
    %v1798 = vsel %vm1678, %v1795, %v1797
    %v1799 = vrot.slane %v1504, 1
    %v1800 = vrot.slane %v1505, 1
    %v1801 = vsel %vm1678, %v1799, %v1800
    %v1802 = vrot.slane %v1506, 1
    %v1803 = vsel %vm1678, %v1800, %v1802
    %v1804 = vrot.slane %v1507, 1
    %v1805 = vrot.slane %v1508, 1
    %v1806 = vsel %vm1678, %v1804, %v1805
    %v1807 = vrot.slane %v1509, 1
    %v1808 = vsel %vm1678, %v1805, %v1807
    %v1809 = vrot.slane %v1510, 1
    %v1810 = vrot.slane %v1511, 1
    %v1811 = vsel %vm1678, %v1809, %v1810
    %v1812 = vrot.slane %v1512, 1
    %v1813 = vsel %vm1678, %v1810, %v1812
    %v1814 = vrot.slane %v1513, 1
    %v1815 = vrot.slane %v1514, 1
    %v1816 = vsel %vm1678, %v1814, %v1815
    %v1817 = vrot.slane %v1515, 1
    %v1818 = vsel %vm1678, %v1815, %v1817
    %v1819 = vrot.slane %v1516, 1
    %v1820 = vrot.slane %v1517, 1
    %v1821 = vsel %vm1678, %v1819, %v1820
    %v1822 = vrot.slane %v1518, 1
    %v1823 = vsel %vm1678, %v1820, %v1822
    %v1824 = vrot.slane %v1519, 1
    %v1825 = vrot.slane %v1520, 1
    %v1826 = vsel %vm1678, %v1824, %v1825
    %v1827 = vrot.slane %v1521, 1
    %v1828 = vsel %vm1678, %v1825, %v1827
    %v1829 = vrot.slane %v1522, 1
    %v1830 = vrot.slane %v1523, 1
    %v1831 = vsel %vm1678, %v1829, %v1830
    %v1832 = vrot.slane %v1524, 1
    %v1833 = vsel %vm1678, %v1830, %v1832
    %v1834 = vrot.slane %v1525, 1
    %v1835 = vrot.slane %v1526, 1
    %v1836 = vsel %vm1678, %v1834, %v1835
    %v1837 = vrot.slane %v1527, 1
    %v1838 = vsel %vm1678, %v1835, %v1837
    %v1903 = vpack.c.bf16 %v1683, %v1681
    %v1904 = vpack.c.bf16 %v1688, %v1686
    %v1905 = vpack.c.bf16 %v1693, %v1691
    %v1906 = vpack.c.bf16 %v1698, %v1696
    %v1907 = vpack.c.bf16 %v1703, %v1701
    %v1908 = vpack.c.bf16 %v1708, %v1706
    %v1909 = vpack.c.bf16 %v1713, %v1711
    %v1910 = vpack.c.bf16 %v1718, %v1716
    %v1911 = vpack.c.bf16 %v1723, %v1721
    %v1912 = vpack.c.bf16 %v1728, %v1726
    %v1913 = vpack.c.bf16 %v1733, %v1731
    %v1914 = vpack.c.bf16 %v1738, %v1736
    %v1915 = vpack.c.bf16 %v1743, %v1741
    %v1916 = vpack.c.bf16 %v1748, %v1746
    %v1917 = vpack.c.bf16 %v1753, %v1751
    %v1918 = vpack.c.bf16 %v1758, %v1756
    %v1919 = vpack.c.bf16 %v1763, %v1761
    %v1920 = vpack.c.bf16 %v1768, %v1766
    %v1921 = vpack.c.bf16 %v1773, %v1771
    %v1922 = vpack.c.bf16 %v1778, %v1776
    %v1923 = vpack.c.bf16 %v1783, %v1781
    %v1924 = vpack.c.bf16 %v1788, %v1786
    %v1925 = vpack.c.bf16 %v1793, %v1791
    %v1926 = vpack.c.bf16 %v1798, %v1796
    %v1927 = vpack.c.bf16 %v1803, %v1801
    %v1928 = vpack.c.bf16 %v1808, %v1806
    %v1929 = vpack.c.bf16 %v1813, %v1811
    %v1930 = vpack.c.bf16 %v1818, %v1816
    %v1931 = vpack.c.bf16 %v1823, %v1821
    %v1932 = vpack.c.bf16 %v1828, %v1826
    %v1933 = vpack.c.bf16 %v1833, %v1831
    %v1934 = vpack.c.bf16 %v1838, %v1836
    %s1935 = scalar_lea.vmem [#allocation8], 64
    %v1936 = vld [vmem:[%s1935] sm:$0xf]
    %v1937 = vld [vmem:[%s1935 + $0x4] sm:$0xf]
    %v1938 = vld [vmem:[%s1935 + $0x8] sm:$0xf]
    %v1939 = vld [vmem:[%s1935 + $0xc] sm:$0xf]
    %v1940 = vld [vmem:[%s1935 + $0x10] sm:$0xf]
    %v1941 = vld [vmem:[%s1935 + $0x14] sm:$0xf]
    %v1942 = vld [vmem:[%s1935 + $0x18] sm:$0xf]
    %v1943 = vld [vmem:[%s1935 + $0x1c] sm:$0xf]
    %v1944 = vld [vmem:[%s1935 + $0x20] sm:$0xf]
    %v1945 = vld [vmem:[%s1935 + $0x24] sm:$0xf]
    %v1946 = vld [vmem:[%s1935 + $0x28] sm:$0xf]
    %v1947 = vld [vmem:[%s1935 + $0x2c] sm:$0xf]
    %v1948 = vld [vmem:[%s1935 + $0x30] sm:$0xf]
    %v1949 = vld [vmem:[%s1935 + $0x34] sm:$0xf]
    %v1950 = vld [vmem:[%s1935 + $0x38] sm:$0xf]
    %v1951 = vld [vmem:[%s1935 + $0x3c] sm:$0xf]
    %v1968 = vunpack.c.l.b16 %v1936
    %v1969 = vunpack.c.l.b16 %v1937
    %v1970 = vunpack.c.l.b16 %v1938
    %v1971 = vunpack.c.l.b16 %v1939
    %v1972 = vunpack.c.l.b16 %v1940
    %v1973 = vunpack.c.l.b16 %v1941
    %v1974 = vunpack.c.l.b16 %v1942
    %v1975 = vunpack.c.l.b16 %v1943
    %v1976 = vunpack.c.l.b16 %v1944
    %v1977 = vunpack.c.l.b16 %v1945
    %v1978 = vunpack.c.l.b16 %v1946
    %v1979 = vunpack.c.l.b16 %v1947
    %v1980 = vunpack.c.l.b16 %v1948
    %v1981 = vunpack.c.l.b16 %v1949
    %v1982 = vunpack.c.l.b16 %v1950
    %v1983 = vunpack.c.l.b16 %v1951
    %v1984 = vpack.c.b16 %v1969, %v1968
    %v1985 = vpack.c.b16 %v1971, %v1970
    %v1986 = vpack.c.b16 %v1973, %v1972
    %v1987 = vpack.c.b16 %v1975, %v1974
    %v1988 = vpack.c.b16 %v1977, %v1976
    %v1989 = vpack.c.b16 %v1979, %v1978
    %v1990 = vpack.c.b16 %v1981, %v1980
    %v1991 = vpack.c.b16 %v1983, %v1982
    %2000 = vmatpush.bf16.msra.mxu0 %v1991
    %2001 = vmatpush.bf16.msra.mxu0 %v1990
    %2002 = vmatpush.bf16.msra.mxu0 %v1989
    %2003 = vmatpush.bf16.msra.mxu0 %v1988
    %2004 = vmatpush.bf16.msra.mxu0 %v1987
    %2005 = vmatpush.bf16.msra.mxu0 %v1986
    %2006 = vmatpush.bf16.msra.mxu0 %v1985
    %2007 = vmatpush.bf16.msra.mxu0 %v1984
    %2008 = vmatmul.bf16.gmra.mxu0 %v1903
    %v2009 = vpop.f32.mrf.mxu0
    %v2010 = vadd.f32 0.0, %v2009
    %v2011 = vpop.f32.mrf.mxu0
    %v2012 = vadd.f32 0.0, %v2011
    %2013 = vmatmul.bf16.gmra.mxu0 %v1904
    %v2014 = vpop.f32.mrf.mxu0
    %v2015 = vadd.f32 0.0, %v2014
    %v2016 = vpop.f32.mrf.mxu0
    %v2017 = vadd.f32 0.0, %v2016
    %2018 = vmatmul.bf16.gmra.mxu0 %v1905
    %v2019 = vpop.f32.mrf.mxu0
    %v2020 = vadd.f32 0.0, %v2019
    %v2021 = vpop.f32.mrf.mxu0
    %v2022 = vadd.f32 0.0, %v2021
    %2023 = vmatmul.bf16.gmra.mxu0 %v1906
    %v2024 = vpop.f32.mrf.mxu0
    %v2025 = vadd.f32 0.0, %v2024
    %v2026 = vpop.f32.mrf.mxu0
    %v2027 = vadd.f32 0.0, %v2026
    %2028 = vmatmul.bf16.gmra.mxu0 %v1907
    %v2029 = vpop.f32.mrf.mxu0
    %v2030 = vadd.f32 0.0, %v2029
    %v2031 = vpop.f32.mrf.mxu0
    %v2032 = vadd.f32 0.0, %v2031
    %2033 = vmatmul.bf16.gmra.mxu0 %v1908
    %v2034 = vpop.f32.mrf.mxu0
    %v2035 = vadd.f32 0.0, %v2034
    %v2036 = vpop.f32.mrf.mxu0
    %v2037 = vadd.f32 0.0, %v2036
    %2038 = vmatmul.bf16.gmra.mxu0 %v1909
    %v2039 = vpop.f32.mrf.mxu0
    %v2040 = vadd.f32 0.0, %v2039
    %v2041 = vpop.f32.mrf.mxu0
    %v2042 = vadd.f32 0.0, %v2041
    %2043 = vmatmul.bf16.gmra.mxu0 %v1910
    %v2044 = vpop.f32.mrf.mxu0
    %v2045 = vadd.f32 0.0, %v2044
    %v2046 = vpop.f32.mrf.mxu0
    %v2047 = vadd.f32 0.0, %v2046
    %2048 = vmatmul.bf16.gmra.mxu0 %v1911
    %v2049 = vpop.f32.mrf.mxu0
    %v2050 = vadd.f32 0.0, %v2049
    %v2051 = vpop.f32.mrf.mxu0
    %v2052 = vadd.f32 0.0, %v2051
    %2053 = vmatmul.bf16.gmra.mxu0 %v1912
    %v2054 = vpop.f32.mrf.mxu0
    %v2055 = vadd.f32 0.0, %v2054
    %v2056 = vpop.f32.mrf.mxu0
    %v2057 = vadd.f32 0.0, %v2056
    %2058 = vmatmul.bf16.gmra.mxu0 %v1913
    %v2059 = vpop.f32.mrf.mxu0
    %v2060 = vadd.f32 0.0, %v2059
    %v2061 = vpop.f32.mrf.mxu0
    %v2062 = vadd.f32 0.0, %v2061
    %2063 = vmatmul.bf16.gmra.mxu0 %v1914
    %v2064 = vpop.f32.mrf.mxu0
    %v2065 = vadd.f32 0.0, %v2064
    %v2066 = vpop.f32.mrf.mxu0
    %v2067 = vadd.f32 0.0, %v2066
    %2068 = vmatmul.bf16.gmra.mxu0 %v1915
    %v2069 = vpop.f32.mrf.mxu0
    %v2070 = vadd.f32 0.0, %v2069
    %v2071 = vpop.f32.mrf.mxu0
    %v2072 = vadd.f32 0.0, %v2071
    %2073 = vmatmul.bf16.gmra.mxu0 %v1916
    %v2074 = vpop.f32.mrf.mxu0
    %v2075 = vadd.f32 0.0, %v2074
    %v2076 = vpop.f32.mrf.mxu0
    %v2077 = vadd.f32 0.0, %v2076
    %2078 = vmatmul.bf16.gmra.mxu0 %v1917
    %v2079 = vpop.f32.mrf.mxu0
    %v2080 = vadd.f32 0.0, %v2079
    %v2081 = vpop.f32.mrf.mxu0
    %v2082 = vadd.f32 0.0, %v2081
    %2083 = vmatmul.bf16.gmra.mxu0 %v1918
    %v2084 = vpop.f32.mrf.mxu0
    %v2085 = vadd.f32 0.0, %v2084
    %v2086 = vpop.f32.mrf.mxu0
    %v2087 = vadd.f32 0.0, %v2086
    %2088 = vmatmul.bf16.gmra.mxu0 %v1919
    %v2089 = vpop.f32.mrf.mxu0
    %v2090 = vadd.f32 0.0, %v2089
    %v2091 = vpop.f32.mrf.mxu0
    %v2092 = vadd.f32 0.0, %v2091
    %2093 = vmatmul.bf16.gmra.mxu0 %v1920
    %v2094 = vpop.f32.mrf.mxu0
    %v2095 = vadd.f32 0.0, %v2094
    %v2096 = vpop.f32.mrf.mxu0
    %v2097 = vadd.f32 0.0, %v2096
    %2098 = vmatmul.bf16.gmra.mxu0 %v1921
    %v2099 = vpop.f32.mrf.mxu0
    %v2100 = vadd.f32 0.0, %v2099
    %v2101 = vpop.f32.mrf.mxu0
    %v2102 = vadd.f32 0.0, %v2101
    %2103 = vmatmul.bf16.gmra.mxu0 %v1922
    %v2104 = vpop.f32.mrf.mxu0
    %v2105 = vadd.f32 0.0, %v2104
    %v2106 = vpop.f32.mrf.mxu0
    %v2107 = vadd.f32 0.0, %v2106
    %2108 = vmatmul.bf16.gmra.mxu0 %v1923
    %v2109 = vpop.f32.mrf.mxu0
    %v2110 = vadd.f32 0.0, %v2109
    %v2111 = vpop.f32.mrf.mxu0
    %v2112 = vadd.f32 0.0, %v2111
    %2113 = vmatmul.bf16.gmra.mxu0 %v1924
    %v2114 = vpop.f32.mrf.mxu0
    %v2115 = vadd.f32 0.0, %v2114
    %v2116 = vpop.f32.mrf.mxu0
    %v2117 = vadd.f32 0.0, %v2116
    %2118 = vmatmul.bf16.gmra.mxu0 %v1925
    %v2119 = vpop.f32.mrf.mxu0
    %v2120 = vadd.f32 0.0, %v2119
    %v2121 = vpop.f32.mrf.mxu0
    %v2122 = vadd.f32 0.0, %v2121
    %2123 = vmatmul.bf16.gmra.mxu0 %v1926
    %v2124 = vpop.f32.mrf.mxu0
    %v2125 = vadd.f32 0.0, %v2124
    %v2126 = vpop.f32.mrf.mxu0
    %v2127 = vadd.f32 0.0, %v2126
    %2128 = vmatmul.bf16.gmra.mxu0 %v1927
    %v2129 = vpop.f32.mrf.mxu0
    %v2130 = vadd.f32 0.0, %v2129
    %v2131 = vpop.f32.mrf.mxu0
    %v2132 = vadd.f32 0.0, %v2131
    %2133 = vmatmul.bf16.gmra.mxu0 %v1928
    %v2134 = vpop.f32.mrf.mxu0
    %v2135 = vadd.f32 0.0, %v2134
    %v2136 = vpop.f32.mrf.mxu0
    %v2137 = vadd.f32 0.0, %v2136
    %2138 = vmatmul.bf16.gmra.mxu0 %v1929
    %v2139 = vpop.f32.mrf.mxu0
    %v2140 = vadd.f32 0.0, %v2139
    %v2141 = vpop.f32.mrf.mxu0
    %v2142 = vadd.f32 0.0, %v2141
    %2143 = vmatmul.bf16.gmra.mxu0 %v1930
    %v2144 = vpop.f32.mrf.mxu0
    %v2145 = vadd.f32 0.0, %v2144
    %v2146 = vpop.f32.mrf.mxu0
    %v2147 = vadd.f32 0.0, %v2146
    %2148 = vmatmul.bf16.gmra.mxu0 %v1931
    %v2149 = vpop.f32.mrf.mxu0
    %v2150 = vadd.f32 0.0, %v2149
    %v2151 = vpop.f32.mrf.mxu0
    %v2152 = vadd.f32 0.0, %v2151
    %2153 = vmatmul.bf16.gmra.mxu0 %v1932
    %v2154 = vpop.f32.mrf.mxu0
    %v2155 = vadd.f32 0.0, %v2154
    %v2156 = vpop.f32.mrf.mxu0
    %v2157 = vadd.f32 0.0, %v2156
    %2158 = vmatmul.bf16.gmra.mxu0 %v1933
    %v2159 = vpop.f32.mrf.mxu0
    %v2160 = vadd.f32 0.0, %v2159
    %v2161 = vpop.f32.mrf.mxu0
    %v2162 = vadd.f32 0.0, %v2161
    %2163 = vmatmul.bf16.gmra.mxu0 %v1934
    %v2164 = vpop.f32.mrf.mxu0
    %v2165 = vadd.f32 0.0, %v2164
    %v2166 = vpop.f32.mrf.mxu0
    %v2167 = vadd.f32 0.0, %v2166
    %2168 = vdwg.mxu0
    %v2185 = vunpack.c.l.b16 %v1566
    %v2186 = vunpack.c.l.b16 %v1567
    %v2187 = vunpack.c.l.b16 %v1568
    %v2188 = vunpack.c.l.b16 %v1569
    %v2189 = vunpack.c.l.b16 %v1570
    %v2190 = vunpack.c.l.b16 %v1571
    %v2191 = vunpack.c.l.b16 %v1572
    %v2192 = vunpack.c.l.b16 %v1573
    %v2193 = vunpack.c.l.b16 %v1574
    %v2194 = vunpack.c.l.b16 %v1575
    %v2195 = vunpack.c.l.b16 %v1576
    %v2196 = vunpack.c.l.b16 %v1577
    %v2197 = vunpack.c.l.b16 %v1578
    %v2198 = vunpack.c.l.b16 %v1579
    %v2199 = vunpack.c.l.b16 %v1580
    %v2200 = vunpack.c.l.b16 %v1581
    %v2201 = vpack.c.b16 %v2186, %v2185
    %v2202 = vpack.c.b16 %v2188, %v2187
    %v2203 = vpack.c.b16 %v2190, %v2189
    %v2204 = vpack.c.b16 %v2192, %v2191
    %v2205 = vpack.c.b16 %v2194, %v2193
    %v2206 = vpack.c.b16 %v2196, %v2195
    %v2207 = vpack.c.b16 %v2198, %v2197
    %v2208 = vpack.c.b16 %v2200, %v2199
    %2217 = vmatpush.bf16.msra.mxu0 %v2208
    %2218 = vmatpush.bf16.msra.mxu0 %v2207
    %2219 = vmatpush.bf16.msra.mxu0 %v2206
    %2220 = vmatpush.bf16.msra.mxu0 %v2205
    %2221 = vmatpush.bf16.msra.mxu0 %v2204
    %2222 = vmatpush.bf16.msra.mxu0 %v2203
    %2223 = vmatpush.bf16.msra.mxu0 %v2202
    %2224 = vmatpush.bf16.msra.mxu0 %v2201
    %2225 = vmatmul.bf16.gmra.mxu0 %v1534
    %v2226 = vpop.f32.mrf.mxu0
    %v2227 = vadd.f32 %v2010, %v2226
    %v2228 = vpop.f32.mrf.mxu0
    %v2229 = vadd.f32 %v2012, %v2228
    %2230 = vmatmul.bf16.gmra.mxu0 %v1535
    %v2231 = vpop.f32.mrf.mxu0
    %v2232 = vadd.f32 %v2015, %v2231
    %v2233 = vpop.f32.mrf.mxu0
    %v2234 = vadd.f32 %v2017, %v2233
    %2235 = vmatmul.bf16.gmra.mxu0 %v1536
    %v2236 = vpop.f32.mrf.mxu0
    %v2237 = vadd.f32 %v2020, %v2236
    %v2238 = vpop.f32.mrf.mxu0
    %v2239 = vadd.f32 %v2022, %v2238
    %2240 = vmatmul.bf16.gmra.mxu0 %v1537
    %v2241 = vpop.f32.mrf.mxu0
    %v2242 = vadd.f32 %v2025, %v2241
    %v2243 = vpop.f32.mrf.mxu0
    %v2244 = vadd.f32 %v2027, %v2243
    %2245 = vmatmul.bf16.gmra.mxu0 %v1538
    %v2246 = vpop.f32.mrf.mxu0
    %v2247 = vadd.f32 %v2030, %v2246
    %v2248 = vpop.f32.mrf.mxu0
    %v2249 = vadd.f32 %v2032, %v2248
    %2250 = vmatmul.bf16.gmra.mxu0 %v1539
    %v2251 = vpop.f32.mrf.mxu0
    %v2252 = vadd.f32 %v2035, %v2251
    %v2253 = vpop.f32.mrf.mxu0
    %v2254 = vadd.f32 %v2037, %v2253
    %2255 = vmatmul.bf16.gmra.mxu0 %v1540
    %v2256 = vpop.f32.mrf.mxu0
    %v2257 = vadd.f32 %v2040, %v2256
    %v2258 = vpop.f32.mrf.mxu0
    %v2259 = vadd.f32 %v2042, %v2258
    %2260 = vmatmul.bf16.gmra.mxu0 %v1541
    %v2261 = vpop.f32.mrf.mxu0
    %v2262 = vadd.f32 %v2045, %v2261
    %v2263 = vpop.f32.mrf.mxu0
    %v2264 = vadd.f32 %v2047, %v2263
    %2265 = vmatmul.bf16.gmra.mxu0 %v1542
    %v2266 = vpop.f32.mrf.mxu0
    %v2267 = vadd.f32 %v2050, %v2266
    %v2268 = vpop.f32.mrf.mxu0
    %v2269 = vadd.f32 %v2052, %v2268
    %2270 = vmatmul.bf16.gmra.mxu0 %v1543
    %v2271 = vpop.f32.mrf.mxu0
    %v2272 = vadd.f32 %v2055, %v2271
    %v2273 = vpop.f32.mrf.mxu0
    %v2274 = vadd.f32 %v2057, %v2273
    %2275 = vmatmul.bf16.gmra.mxu0 %v1544
    %v2276 = vpop.f32.mrf.mxu0
    %v2277 = vadd.f32 %v2060, %v2276
    %v2278 = vpop.f32.mrf.mxu0
    %v2279 = vadd.f32 %v2062, %v2278
    %2280 = vmatmul.bf16.gmra.mxu0 %v1545
    %v2281 = vpop.f32.mrf.mxu0
    %v2282 = vadd.f32 %v2065, %v2281
    %v2283 = vpop.f32.mrf.mxu0
    %v2284 = vadd.f32 %v2067, %v2283
    %2285 = vmatmul.bf16.gmra.mxu0 %v1546
    %v2286 = vpop.f32.mrf.mxu0
    %v2287 = vadd.f32 %v2070, %v2286
    %v2288 = vpop.f32.mrf.mxu0
    %v2289 = vadd.f32 %v2072, %v2288
    %2290 = vmatmul.bf16.gmra.mxu0 %v1547
    %v2291 = vpop.f32.mrf.mxu0
    %v2292 = vadd.f32 %v2075, %v2291
    %v2293 = vpop.f32.mrf.mxu0
    %v2294 = vadd.f32 %v2077, %v2293
    %2295 = vmatmul.bf16.gmra.mxu0 %v1548
    %v2296 = vpop.f32.mrf.mxu0
    %v2297 = vadd.f32 %v2080, %v2296
    %v2298 = vpop.f32.mrf.mxu0
    %v2299 = vadd.f32 %v2082, %v2298
    %2300 = vmatmul.bf16.gmra.mxu0 %v1549
    %v2301 = vpop.f32.mrf.mxu0
    %v2302 = vadd.f32 %v2085, %v2301
    %v2303 = vpop.f32.mrf.mxu0
    %v2304 = vadd.f32 %v2087, %v2303
    %2305 = vmatmul.bf16.gmra.mxu0 %v1550
    %v2306 = vpop.f32.mrf.mxu0
    %v2307 = vadd.f32 %v2090, %v2306
    %v2308 = vpop.f32.mrf.mxu0
    %v2309 = vadd.f32 %v2092, %v2308
    %2310 = vmatmul.bf16.gmra.mxu0 %v1551
    %v2311 = vpop.f32.mrf.mxu0
    %v2312 = vadd.f32 %v2095, %v2311
    %v2313 = vpop.f32.mrf.mxu0
    %v2314 = vadd.f32 %v2097, %v2313
    %2315 = vmatmul.bf16.gmra.mxu0 %v1552
    %v2316 = vpop.f32.mrf.mxu0
    %v2317 = vadd.f32 %v2100, %v2316
    %v2318 = vpop.f32.mrf.mxu0
    %v2319 = vadd.f32 %v2102, %v2318
    %2320 = vmatmul.bf16.gmra.mxu0 %v1553
    %v2321 = vpop.f32.mrf.mxu0
    %v2322 = vadd.f32 %v2105, %v2321
    %v2323 = vpop.f32.mrf.mxu0
    %v2324 = vadd.f32 %v2107, %v2323
    %2325 = vmatmul.bf16.gmra.mxu0 %v1554
    %v2326 = vpop.f32.mrf.mxu0
    %v2327 = vadd.f32 %v2110, %v2326
    %v2328 = vpop.f32.mrf.mxu0
    %v2329 = vadd.f32 %v2112, %v2328
    %2330 = vmatmul.bf16.gmra.mxu0 %v1555
    %v2331 = vpop.f32.mrf.mxu0
    %v2332 = vadd.f32 %v2115, %v2331
    %v2333 = vpop.f32.mrf.mxu0
    %v2334 = vadd.f32 %v2117, %v2333
    %2335 = vmatmul.bf16.gmra.mxu0 %v1556
    %v2336 = vpop.f32.mrf.mxu0
    %v2337 = vadd.f32 %v2120, %v2336
    %v2338 = vpop.f32.mrf.mxu0
    %v2339 = vadd.f32 %v2122, %v2338
    %2340 = vmatmul.bf16.gmra.mxu0 %v1557
    %v2341 = vpop.f32.mrf.mxu0
    %v2342 = vadd.f32 %v2125, %v2341
    %v2343 = vpop.f32.mrf.mxu0
    %v2344 = vadd.f32 %v2127, %v2343
    %2345 = vmatmul.bf16.gmra.mxu0 %v1558
    %v2346 = vpop.f32.mrf.mxu0
    %v2347 = vadd.f32 %v2130, %v2346
    %v2348 = vpop.f32.mrf.mxu0
    %v2349 = vadd.f32 %v2132, %v2348
    %2350 = vmatmul.bf16.gmra.mxu0 %v1559
    %v2351 = vpop.f32.mrf.mxu0
    %v2352 = vadd.f32 %v2135, %v2351
    %v2353 = vpop.f32.mrf.mxu0
    %v2354 = vadd.f32 %v2137, %v2353
    %2355 = vmatmul.bf16.gmra.mxu0 %v1560
    %v2356 = vpop.f32.mrf.mxu0
    %v2357 = vadd.f32 %v2140, %v2356
    %v2358 = vpop.f32.mrf.mxu0
    %v2359 = vadd.f32 %v2142, %v2358
    %2360 = vmatmul.bf16.gmra.mxu0 %v1561
    %v2361 = vpop.f32.mrf.mxu0
    %v2362 = vadd.f32 %v2145, %v2361
    %v2363 = vpop.f32.mrf.mxu0
    %v2364 = vadd.f32 %v2147, %v2363
    %2365 = vmatmul.bf16.gmra.mxu0 %v1562
    %v2366 = vpop.f32.mrf.mxu0
    %v2367 = vadd.f32 %v2150, %v2366
    %v2368 = vpop.f32.mrf.mxu0
    %v2369 = vadd.f32 %v2152, %v2368
    %2370 = vmatmul.bf16.gmra.mxu0 %v1563
    %v2371 = vpop.f32.mrf.mxu0
    %v2372 = vadd.f32 %v2155, %v2371
    %v2373 = vpop.f32.mrf.mxu0
    %v2374 = vadd.f32 %v2157, %v2373
    %2375 = vmatmul.bf16.gmra.mxu0 %v1564
    %v2376 = vpop.f32.mrf.mxu0
    %v2377 = vadd.f32 %v2160, %v2376
    %v2378 = vpop.f32.mrf.mxu0
    %v2379 = vadd.f32 %v2162, %v2378
    %2380 = vmatmul.bf16.gmra.mxu0 %v1565
    %v2381 = vpop.f32.mrf.mxu0
    %v2382 = vadd.f32 %v2165, %v2381
    %v2383 = vpop.f32.mrf.mxu0
    %v2384 = vadd.f32 %v2167, %v2383
    %2385 = vdwg.mxu0
    %vm2386 = vcmask 1045504
    %v2387 = vrot.slane %v1426, 2
    %v2388 = vrot.slane %v1427, 2
    %v2389 = vsel %vm2386, %v2387, %v2388
    %v2390 = vrot.slane %v1428, 2
    %v2391 = vsel %vm2386, %v2388, %v2390
    %v2392 = vrot.slane %v1429, 2
    %v2393 = vrot.slane %v1430, 2
    %v2394 = vsel %vm2386, %v2392, %v2393
    %v2395 = vrot.slane %v1431, 2
    %v2396 = vsel %vm2386, %v2393, %v2395
    %v2397 = vrot.slane %v1432, 2
    %v2398 = vrot.slane %v1433, 2
    %v2399 = vsel %vm2386, %v2397, %v2398
    %v2400 = vrot.slane %v1434, 2
    %v2401 = vsel %vm2386, %v2398, %v2400
    %v2402 = vrot.slane %v1435, 2
    %v2403 = vrot.slane %v1436, 2
    %v2404 = vsel %vm2386, %v2402, %v2403
    %v2405 = vrot.slane %v1437, 2
    %v2406 = vsel %vm2386, %v2403, %v2405
    %v2407 = vrot.slane %v1438, 2
    %v2408 = vrot.slane %v1439, 2
    %v2409 = vsel %vm2386, %v2407, %v2408
    %v2410 = vrot.slane %v1440, 2
    %v2411 = vsel %vm2386, %v2408, %v2410
    %v2412 = vrot.slane %v1441, 2
    %v2413 = vrot.slane %v1442, 2
    %v2414 = vsel %vm2386, %v2412, %v2413
    %v2415 = vrot.slane %v1443, 2
    %v2416 = vsel %vm2386, %v2413, %v2415
    %v2417 = vrot.slane %v1444, 2
    %v2418 = vrot.slane %v1445, 2
    %v2419 = vsel %vm2386, %v2417, %v2418
    %v2420 = vrot.slane %v1446, 2
    %v2421 = vsel %vm2386, %v2418, %v2420
    %v2422 = vrot.slane %v1447, 2
    %v2423 = vrot.slane %v1448, 2
    %v2424 = vsel %vm2386, %v2422, %v2423
    %v2425 = vrot.slane %v1449, 2
    %v2426 = vsel %vm2386, %v2423, %v2425
    %v2427 = vrot.slane %v1450, 2
    %v2428 = vrot.slane %v1451, 2
    %v2429 = vsel %vm2386, %v2427, %v2428
    %v2430 = vrot.slane %v1452, 2
    %v2431 = vsel %vm2386, %v2428, %v2430
    %v2432 = vrot.slane %v1453, 2
    %v2433 = vrot.slane %v1454, 2
    %v2434 = vsel %vm2386, %v2432, %v2433
    %v2435 = vrot.slane %v1455, 2
    %v2436 = vsel %vm2386, %v2433, %v2435
    %v2437 = vrot.slane %v1456, 2
    %v2438 = vrot.slane %v1457, 2
    %v2439 = vsel %vm2386, %v2437, %v2438
    %v2440 = vrot.slane %v1458, 2
    %v2441 = vsel %vm2386, %v2438, %v2440
    %v2442 = vrot.slane %v1459, 2
    %v2443 = vrot.slane %v1460, 2
    %v2444 = vsel %vm2386, %v2442, %v2443
    %v2445 = vrot.slane %v1461, 2
    %v2446 = vsel %vm2386, %v2443, %v2445
    %v2447 = vrot.slane %v1462, 2
    %v2448 = vrot.slane %v1463, 2
    %v2449 = vsel %vm2386, %v2447, %v2448
    %v2450 = vrot.slane %v1464, 2
    %v2451 = vsel %vm2386, %v2448, %v2450
    %v2452 = vrot.slane %v1465, 2
    %v2453 = vrot.slane %v1466, 2
    %v2454 = vsel %vm2386, %v2452, %v2453
    %v2455 = vrot.slane %v1467, 2
    %v2456 = vsel %vm2386, %v2453, %v2455
    %v2457 = vrot.slane %v1468, 2
    %v2458 = vrot.slane %v1469, 2
    %v2459 = vsel %vm2386, %v2457, %v2458
    %v2460 = vrot.slane %v1470, 2
    %v2461 = vsel %vm2386, %v2458, %v2460
    %v2462 = vrot.slane %v1471, 2
    %v2463 = vrot.slane %v1472, 2
    %v2464 = vsel %vm2386, %v2462, %v2463
    %v2465 = vrot.slane %v1473, 2
    %v2466 = vsel %vm2386, %v2463, %v2465
    %v2467 = vrot.slane %v1480, 2
    %v2468 = vrot.slane %v1481, 2
    %v2469 = vsel %vm2386, %v2467, %v2468
    %v2470 = vrot.slane %v1482, 2
    %v2471 = vsel %vm2386, %v2468, %v2470
    %v2472 = vrot.slane %v1483, 2
    %v2473 = vrot.slane %v1484, 2
    %v2474 = vsel %vm2386, %v2472, %v2473
    %v2475 = vrot.slane %v1485, 2
    %v2476 = vsel %vm2386, %v2473, %v2475
    %v2477 = vrot.slane %v1486, 2
    %v2478 = vrot.slane %v1487, 2
    %v2479 = vsel %vm2386, %v2477, %v2478
    %v2480 = vrot.slane %v1488, 2
    %v2481 = vsel %vm2386, %v2478, %v2480
    %v2482 = vrot.slane %v1489, 2
    %v2483 = vrot.slane %v1490, 2
    %v2484 = vsel %vm2386, %v2482, %v2483
    %v2485 = vrot.slane %v1491, 2
    %v2486 = vsel %vm2386, %v2483, %v2485
    %v2487 = vrot.slane %v1492, 2
    %v2488 = vrot.slane %v1493, 2
    %v2489 = vsel %vm2386, %v2487, %v2488
    %v2490 = vrot.slane %v1494, 2
    %v2491 = vsel %vm2386, %v2488, %v2490
    %v2492 = vrot.slane %v1495, 2
    %v2493 = vrot.slane %v1496, 2
    %v2494 = vsel %vm2386, %v2492, %v2493
    %v2495 = vrot.slane %v1497, 2
    %v2496 = vsel %vm2386, %v2493, %v2495
    %v2497 = vrot.slane %v1498, 2
    %v2498 = vrot.slane %v1499, 2
    %v2499 = vsel %vm2386, %v2497, %v2498
    %v2500 = vrot.slane %v1500, 2
    %v2501 = vsel %vm2386, %v2498, %v2500
    %v2502 = vrot.slane %v1501, 2
    %v2503 = vrot.slane %v1502, 2
    %v2504 = vsel %vm2386, %v2502, %v2503
    %v2505 = vrot.slane %v1503, 2
    %v2506 = vsel %vm2386, %v2503, %v2505
    %v2507 = vrot.slane %v1504, 2
    %v2508 = vrot.slane %v1505, 2
    %v2509 = vsel %vm2386, %v2507, %v2508
    %v2510 = vrot.slane %v1506, 2
    %v2511 = vsel %vm2386, %v2508, %v2510
    %v2512 = vrot.slane %v1507, 2
    %v2513 = vrot.slane %v1508, 2
    %v2514 = vsel %vm2386, %v2512, %v2513
    %v2515 = vrot.slane %v1509, 2
    %v2516 = vsel %vm2386, %v2513, %v2515
    %v2517 = vrot.slane %v1510, 2
    %v2518 = vrot.slane %v1511, 2
    %v2519 = vsel %vm2386, %v2517, %v2518
    %v2520 = vrot.slane %v1512, 2
    %v2521 = vsel %vm2386, %v2518, %v2520
    %v2522 = vrot.slane %v1513, 2
    %v2523 = vrot.slane %v1514, 2
    %v2524 = vsel %vm2386, %v2522, %v2523
    %v2525 = vrot.slane %v1515, 2
    %v2526 = vsel %vm2386, %v2523, %v2525
    %v2527 = vrot.slane %v1516, 2
    %v2528 = vrot.slane %v1517, 2
    %v2529 = vsel %vm2386, %v2527, %v2528
    %v2530 = vrot.slane %v1518, 2
    %v2531 = vsel %vm2386, %v2528, %v2530
    %v2532 = vrot.slane %v1519, 2
    %v2533 = vrot.slane %v1520, 2
    %v2534 = vsel %vm2386, %v2532, %v2533
    %v2535 = vrot.slane %v1521, 2
    %v2536 = vsel %vm2386, %v2533, %v2535
    %v2537 = vrot.slane %v1522, 2
    %v2538 = vrot.slane %v1523, 2
    %v2539 = vsel %vm2386, %v2537, %v2538
    %v2540 = vrot.slane %v1524, 2
    %v2541 = vsel %vm2386, %v2538, %v2540
    %v2542 = vrot.slane %v1525, 2
    %v2543 = vrot.slane %v1526, 2
    %v2544 = vsel %vm2386, %v2542, %v2543
    %v2545 = vrot.slane %v1527, 2
    %v2546 = vsel %vm2386, %v2543, %v2545
    %v2611 = vpack.c.bf16 %v2391, %v2389
    %v2612 = vpack.c.bf16 %v2396, %v2394
    %v2613 = vpack.c.bf16 %v2401, %v2399
    %v2614 = vpack.c.bf16 %v2406, %v2404
    %v2615 = vpack.c.bf16 %v2411, %v2409
    %v2616 = vpack.c.bf16 %v2416, %v2414
    %v2617 = vpack.c.bf16 %v2421, %v2419
    %v2618 = vpack.c.bf16 %v2426, %v2424
    %v2619 = vpack.c.bf16 %v2431, %v2429
    %v2620 = vpack.c.bf16 %v2436, %v2434
    %v2621 = vpack.c.bf16 %v2441, %v2439
    %v2622 = vpack.c.bf16 %v2446, %v2444
    %v2623 = vpack.c.bf16 %v2451, %v2449
    %v2624 = vpack.c.bf16 %v2456, %v2454
    %v2625 = vpack.c.bf16 %v2461, %v2459
    %v2626 = vpack.c.bf16 %v2466, %v2464
    %v2627 = vpack.c.bf16 %v2471, %v2469
    %v2628 = vpack.c.bf16 %v2476, %v2474
    %v2629 = vpack.c.bf16 %v2481, %v2479
    %v2630 = vpack.c.bf16 %v2486, %v2484
    %v2631 = vpack.c.bf16 %v2491, %v2489
    %v2632 = vpack.c.bf16 %v2496, %v2494
    %v2633 = vpack.c.bf16 %v2501, %v2499
    %v2634 = vpack.c.bf16 %v2506, %v2504
    %v2635 = vpack.c.bf16 %v2511, %v2509
    %v2636 = vpack.c.bf16 %v2516, %v2514
    %v2637 = vpack.c.bf16 %v2521, %v2519
    %v2638 = vpack.c.bf16 %v2526, %v2524
    %v2639 = vpack.c.bf16 %v2531, %v2529
    %v2640 = vpack.c.bf16 %v2536, %v2534
    %v2641 = vpack.c.bf16 %v2541, %v2539
    %v2642 = vpack.c.bf16 %v2546, %v2544
    %s2643 = scalar_lea.vmem [#allocation8], 128
    %v2644 = vld [vmem:[%s2643] sm:$0xf]
    %v2645 = vld [vmem:[%s2643 + $0x4] sm:$0xf]
    %v2646 = vld [vmem:[%s2643 + $0x8] sm:$0xf]
    %v2647 = vld [vmem:[%s2643 + $0xc] sm:$0xf]
    %v2648 = vld [vmem:[%s2643 + $0x10] sm:$0xf]
    %v2649 = vld [vmem:[%s2643 + $0x14] sm:$0xf]
    %v2650 = vld [vmem:[%s2643 + $0x18] sm:$0xf]
    %v2651 = vld [vmem:[%s2643 + $0x1c] sm:$0xf]
    %v2652 = vld [vmem:[%s2643 + $0x20] sm:$0xf]
    %v2653 = vld [vmem:[%s2643 + $0x24] sm:$0xf]
    %v2654 = vld [vmem:[%s2643 + $0x28] sm:$0xf]
    %v2655 = vld [vmem:[%s2643 + $0x2c] sm:$0xf]
    %v2656 = vld [vmem:[%s2643 + $0x30] sm:$0xf]
    %v2657 = vld [vmem:[%s2643 + $0x34] sm:$0xf]
    %v2658 = vld [vmem:[%s2643 + $0x38] sm:$0xf]
    %v2659 = vld [vmem:[%s2643 + $0x3c] sm:$0xf]
    %v2676 = vunpack.c.l.b16 %v2644
    %v2677 = vunpack.c.l.b16 %v2645
    %v2678 = vunpack.c.l.b16 %v2646
    %v2679 = vunpack.c.l.b16 %v2647
    %v2680 = vunpack.c.l.b16 %v2648
    %v2681 = vunpack.c.l.b16 %v2649
    %v2682 = vunpack.c.l.b16 %v2650
    %v2683 = vunpack.c.l.b16 %v2651
    %v2684 = vunpack.c.l.b16 %v2652
    %v2685 = vunpack.c.l.b16 %v2653
    %v2686 = vunpack.c.l.b16 %v2654
    %v2687 = vunpack.c.l.b16 %v2655
    %v2688 = vunpack.c.l.b16 %v2656
    %v2689 = vunpack.c.l.b16 %v2657
    %v2690 = vunpack.c.l.b16 %v2658
    %v2691 = vunpack.c.l.b16 %v2659
    %v2692 = vpack.c.b16 %v2677, %v2676
    %v2693 = vpack.c.b16 %v2679, %v2678
    %v2694 = vpack.c.b16 %v2681, %v2680
    %v2695 = vpack.c.b16 %v2683, %v2682
    %v2696 = vpack.c.b16 %v2685, %v2684
    %v2697 = vpack.c.b16 %v2687, %v2686
    %v2698 = vpack.c.b16 %v2689, %v2688
    %v2699 = vpack.c.b16 %v2691, %v2690
    %2708 = vmatpush.bf16.msra.mxu0 %v2699
    %2709 = vmatpush.bf16.msra.mxu0 %v2698
    %2710 = vmatpush.bf16.msra.mxu0 %v2697
    %2711 = vmatpush.bf16.msra.mxu0 %v2696
    %2712 = vmatpush.bf16.msra.mxu0 %v2695
    %2713 = vmatpush.bf16.msra.mxu0 %v2694
    %2714 = vmatpush.bf16.msra.mxu0 %v2693
    %2715 = vmatpush.bf16.msra.mxu0 %v2692
    %2716 = vmatmul.bf16.gmra.mxu0 %v2611
    %v2717 = vpop.f32.mrf.mxu0
    %v2718 = vadd.f32 0.0, %v2717
    %v2719 = vpop.f32.mrf.mxu0
    %v2720 = vadd.f32 0.0, %v2719
    %2721 = vmatmul.bf16.gmra.mxu0 %v2612
    %v2722 = vpop.f32.mrf.mxu0
    %v2723 = vadd.f32 0.0, %v2722
    %v2724 = vpop.f32.mrf.mxu0
    %v2725 = vadd.f32 0.0, %v2724
    %2726 = vmatmul.bf16.gmra.mxu0 %v2613
    %v2727 = vpop.f32.mrf.mxu0
    %v2728 = vadd.f32 0.0, %v2727
    %v2729 = vpop.f32.mrf.mxu0
    %v2730 = vadd.f32 0.0, %v2729
    %2731 = vmatmul.bf16.gmra.mxu0 %v2614
    %v2732 = vpop.f32.mrf.mxu0
    %v2733 = vadd.f32 0.0, %v2732
    %v2734 = vpop.f32.mrf.mxu0
    %v2735 = vadd.f32 0.0, %v2734
    %2736 = vmatmul.bf16.gmra.mxu0 %v2615
    %v2737 = vpop.f32.mrf.mxu0
    %v2738 = vadd.f32 0.0, %v2737
    %v2739 = vpop.f32.mrf.mxu0
    %v2740 = vadd.f32 0.0, %v2739
    %2741 = vmatmul.bf16.gmra.mxu0 %v2616
    %v2742 = vpop.f32.mrf.mxu0
    %v2743 = vadd.f32 0.0, %v2742
    %v2744 = vpop.f32.mrf.mxu0
    %v2745 = vadd.f32 0.0, %v2744
    %2746 = vmatmul.bf16.gmra.mxu0 %v2617
    %v2747 = vpop.f32.mrf.mxu0
    %v2748 = vadd.f32 0.0, %v2747
    %v2749 = vpop.f32.mrf.mxu0
    %v2750 = vadd.f32 0.0, %v2749
    %2751 = vmatmul.bf16.gmra.mxu0 %v2618
    %v2752 = vpop.f32.mrf.mxu0
    %v2753 = vadd.f32 0.0, %v2752
    %v2754 = vpop.f32.mrf.mxu0
    %v2755 = vadd.f32 0.0, %v2754
    %2756 = vmatmul.bf16.gmra.mxu0 %v2619
    %v2757 = vpop.f32.mrf.mxu0
    %v2758 = vadd.f32 0.0, %v2757
    %v2759 = vpop.f32.mrf.mxu0
    %v2760 = vadd.f32 0.0, %v2759
    %2761 = vmatmul.bf16.gmra.mxu0 %v2620
    %v2762 = vpop.f32.mrf.mxu0
    %v2763 = vadd.f32 0.0, %v2762
    %v2764 = vpop.f32.mrf.mxu0
    %v2765 = vadd.f32 0.0, %v2764
    %2766 = vmatmul.bf16.gmra.mxu0 %v2621
    %v2767 = vpop.f32.mrf.mxu0
    %v2768 = vadd.f32 0.0, %v2767
    %v2769 = vpop.f32.mrf.mxu0
    %v2770 = vadd.f32 0.0, %v2769
    %2771 = vmatmul.bf16.gmra.mxu0 %v2622
    %v2772 = vpop.f32.mrf.mxu0
    %v2773 = vadd.f32 0.0, %v2772
    %v2774 = vpop.f32.mrf.mxu0
    %v2775 = vadd.f32 0.0, %v2774
    %2776 = vmatmul.bf16.gmra.mxu0 %v2623
    %v2777 = vpop.f32.mrf.mxu0
    %v2778 = vadd.f32 0.0, %v2777
    %v2779 = vpop.f32.mrf.mxu0
    %v2780 = vadd.f32 0.0, %v2779
    %2781 = vmatmul.bf16.gmra.mxu0 %v2624
    %v2782 = vpop.f32.mrf.mxu0
    %v2783 = vadd.f32 0.0, %v2782
    %v2784 = vpop.f32.mrf.mxu0
    %v2785 = vadd.f32 0.0, %v2784
    %2786 = vmatmul.bf16.gmra.mxu0 %v2625
    %v2787 = vpop.f32.mrf.mxu0
    %v2788 = vadd.f32 0.0, %v2787
    %v2789 = vpop.f32.mrf.mxu0
    %v2790 = vadd.f32 0.0, %v2789
    %2791 = vmatmul.bf16.gmra.mxu0 %v2626
    %v2792 = vpop.f32.mrf.mxu0
    %v2793 = vadd.f32 0.0, %v2792
    %v2794 = vpop.f32.mrf.mxu0
    %v2795 = vadd.f32 0.0, %v2794
    %2796 = vmatmul.bf16.gmra.mxu0 %v2627
    %v2797 = vpop.f32.mrf.mxu0
    %v2798 = vadd.f32 0.0, %v2797
    %v2799 = vpop.f32.mrf.mxu0
    %v2800 = vadd.f32 0.0, %v2799
    %2801 = vmatmul.bf16.gmra.mxu0 %v2628
    %v2802 = vpop.f32.mrf.mxu0
    %v2803 = vadd.f32 0.0, %v2802
    %v2804 = vpop.f32.mrf.mxu0
    %v2805 = vadd.f32 0.0, %v2804
    %2806 = vmatmul.bf16.gmra.mxu0 %v2629
    %v2807 = vpop.f32.mrf.mxu0
    %v2808 = vadd.f32 0.0, %v2807
    %v2809 = vpop.f32.mrf.mxu0
    %v2810 = vadd.f32 0.0, %v2809
    %2811 = vmatmul.bf16.gmra.mxu0 %v2630
    %v2812 = vpop.f32.mrf.mxu0
    %v2813 = vadd.f32 0.0, %v2812
    %v2814 = vpop.f32.mrf.mxu0
    %v2815 = vadd.f32 0.0, %v2814
    %2816 = vmatmul.bf16.gmra.mxu0 %v2631
    %v2817 = vpop.f32.mrf.mxu0
    %v2818 = vadd.f32 0.0, %v2817
    %v2819 = vpop.f32.mrf.mxu0
    %v2820 = vadd.f32 0.0, %v2819
    %2821 = vmatmul.bf16.gmra.mxu0 %v2632
    %v2822 = vpop.f32.mrf.mxu0
    %v2823 = vadd.f32 0.0, %v2822
    %v2824 = vpop.f32.mrf.mxu0
    %v2825 = vadd.f32 0.0, %v2824
    %2826 = vmatmul.bf16.gmra.mxu0 %v2633
    %v2827 = vpop.f32.mrf.mxu0
    %v2828 = vadd.f32 0.0, %v2827
    %v2829 = vpop.f32.mrf.mxu0
    %v2830 = vadd.f32 0.0, %v2829
    %2831 = vmatmul.bf16.gmra.mxu0 %v2634
    %v2832 = vpop.f32.mrf.mxu0
    %v2833 = vadd.f32 0.0, %v2832
    %v2834 = vpop.f32.mrf.mxu0
    %v2835 = vadd.f32 0.0, %v2834
    %2836 = vmatmul.bf16.gmra.mxu0 %v2635
    %v2837 = vpop.f32.mrf.mxu0
    %v2838 = vadd.f32 0.0, %v2837
    %v2839 = vpop.f32.mrf.mxu0
    %v2840 = vadd.f32 0.0, %v2839
    %2841 = vmatmul.bf16.gmra.mxu0 %v2636
    %v2842 = vpop.f32.mrf.mxu0
    %v2843 = vadd.f32 0.0, %v2842
    %v2844 = vpop.f32.mrf.mxu0
    %v2845 = vadd.f32 0.0, %v2844
    %2846 = vmatmul.bf16.gmra.mxu0 %v2637
    %v2847 = vpop.f32.mrf.mxu0
    %v2848 = vadd.f32 0.0, %v2847
    %v2849 = vpop.f32.mrf.mxu0
    %v2850 = vadd.f32 0.0, %v2849
    %2851 = vmatmul.bf16.gmra.mxu0 %v2638
    %v2852 = vpop.f32.mrf.mxu0
    %v2853 = vadd.f32 0.0, %v2852
    %v2854 = vpop.f32.mrf.mxu0
    %v2855 = vadd.f32 0.0, %v2854
    %2856 = vmatmul.bf16.gmra.mxu0 %v2639
    %v2857 = vpop.f32.mrf.mxu0
    %v2858 = vadd.f32 0.0, %v2857
    %v2859 = vpop.f32.mrf.mxu0
    %v2860 = vadd.f32 0.0, %v2859
    %2861 = vmatmul.bf16.gmra.mxu0 %v2640
    %v2862 = vpop.f32.mrf.mxu0
    %v2863 = vadd.f32 0.0, %v2862
    %v2864 = vpop.f32.mrf.mxu0
    %v2865 = vadd.f32 0.0, %v2864
    %2866 = vmatmul.bf16.gmra.mxu0 %v2641
    %v2867 = vpop.f32.mrf.mxu0
    %v2868 = vadd.f32 0.0, %v2867
    %v2869 = vpop.f32.mrf.mxu0
    %v2870 = vadd.f32 0.0, %v2869
    %2871 = vmatmul.bf16.gmra.mxu0 %v2642
    %v2872 = vpop.f32.mrf.mxu0
    %v2873 = vadd.f32 0.0, %v2872
    %v2874 = vpop.f32.mrf.mxu0
    %v2875 = vadd.f32 0.0, %v2874
    %2876 = vdwg.mxu0
    %v2877 = vadd.f32 %v2227, %v2718
    %v2878 = vadd.f32 %v2229, %v2720
    %v2879 = vadd.f32 %v2232, %v2723
    %v2880 = vadd.f32 %v2234, %v2725
    %v2881 = vadd.f32 %v2237, %v2728
    %v2882 = vadd.f32 %v2239, %v2730
    %v2883 = vadd.f32 %v2242, %v2733
    %v2884 = vadd.f32 %v2244, %v2735
    %v2885 = vadd.f32 %v2247, %v2738
    %v2886 = vadd.f32 %v2249, %v2740
    %v2887 = vadd.f32 %v2252, %v2743
    %v2888 = vadd.f32 %v2254, %v2745
    %v2889 = vadd.f32 %v2257, %v2748
    %v2890 = vadd.f32 %v2259, %v2750
    %v2891 = vadd.f32 %v2262, %v2753
    %v2892 = vadd.f32 %v2264, %v2755
    %v2893 = vadd.f32 %v2267, %v2758
    %v2894 = vadd.f32 %v2269, %v2760
    %v2895 = vadd.f32 %v2272, %v2763
    %v2896 = vadd.f32 %v2274, %v2765
    %v2897 = vadd.f32 %v2277, %v2768
    %v2898 = vadd.f32 %v2279, %v2770
    %v2899 = vadd.f32 %v2282, %v2773
    %v2900 = vadd.f32 %v2284, %v2775
    %v2901 = vadd.f32 %v2287, %v2778
    %v2902 = vadd.f32 %v2289, %v2780
    %v2903 = vadd.f32 %v2292, %v2783
    %v2904 = vadd.f32 %v2294, %v2785
    %v2905 = vadd.f32 %v2297, %v2788
    %v2906 = vadd.f32 %v2299, %v2790
    %v2907 = vadd.f32 %v2302, %v2793
    %v2908 = vadd.f32 %v2304, %v2795
    %v2909 = vadd.f32 %v2307, %v2798
    %v2910 = vadd.f32 %v2309, %v2800
    %v2911 = vadd.f32 %v2312, %v2803
    %v2912 = vadd.f32 %v2314, %v2805
    %v2913 = vadd.f32 %v2317, %v2808
    %v2914 = vadd.f32 %v2319, %v2810
    %v2915 = vadd.f32 %v2322, %v2813
    %v2916 = vadd.f32 %v2324, %v2815
    %v2917 = vadd.f32 %v2327, %v2818
    %v2918 = vadd.f32 %v2329, %v2820
    %v2919 = vadd.f32 %v2332, %v2823
    %v2920 = vadd.f32 %v2334, %v2825
    %v2921 = vadd.f32 %v2337, %v2828
    %v2922 = vadd.f32 %v2339, %v2830
    %v2923 = vadd.f32 %v2342, %v2833
    %v2924 = vadd.f32 %v2344, %v2835
    %v2925 = vadd.f32 %v2347, %v2838
    %v2926 = vadd.f32 %v2349, %v2840
    %v2927 = vadd.f32 %v2352, %v2843
    %v2928 = vadd.f32 %v2354, %v2845
    %v2929 = vadd.f32 %v2357, %v2848
    %v2930 = vadd.f32 %v2359, %v2850
    %v2931 = vadd.f32 %v2362, %v2853
    %v2932 = vadd.f32 %v2364, %v2855
    %v2933 = vadd.f32 %v2367, %v2858
    %v2934 = vadd.f32 %v2369, %v2860
    %v2935 = vadd.f32 %v2372, %v2863
    %v2936 = vadd.f32 %v2374, %v2865
    %v2937 = vadd.f32 %v2377, %v2868
    %v2938 = vadd.f32 %v2379, %v2870
    %v2939 = vadd.f32 %v2382, %v2873
    %v2940 = vadd.f32 %v2384, %v2875
    %v2941 = vpack.c.bf16 %v1475, %v1474
    %v2942 = vpack.c.bf16 %v1529, %v1528
    %s2943 = scalar_lea.vmem [#allocation8], 192
    %v2944 = vld [vmem:[%s2943] sm:$0xf]
    %v2945 = vld [vmem:[%s2943 + $0x4] sm:$0xf]
    %v2946 = vld [vmem:[%s2943 + $0x8] sm:$0xf]
    %v2947 = vld [vmem:[%s2943 + $0xc] sm:$0xf]
    %v2948 = vld [vmem:[%s2943 + $0x10] sm:$0xf]
    %v2949 = vld [vmem:[%s2943 + $0x14] sm:$0xf]
    %v2950 = vld [vmem:[%s2943 + $0x18] sm:$0xf]
    %v2951 = vld [vmem:[%s2943 + $0x1c] sm:$0xf]
    %v2952 = vld [vmem:[%s2943 + $0x20] sm:$0xf]
    %v2953 = vld [vmem:[%s2943 + $0x24] sm:$0xf]
    %v2954 = vld [vmem:[%s2943 + $0x28] sm:$0xf]
    %v2955 = vld [vmem:[%s2943 + $0x2c] sm:$0xf]
    %v2956 = vld [vmem:[%s2943 + $0x30] sm:$0xf]
    %v2957 = vld [vmem:[%s2943 + $0x34] sm:$0xf]
    %v2958 = vld [vmem:[%s2943 + $0x38] sm:$0xf]
    %v2959 = vld [vmem:[%s2943 + $0x3c] sm:$0xf]
    %v2976 = vunpack.c.l.b16 %v2944
    %v2977 = vunpack.c.l.b16 %v2945
    %v2978 = vunpack.c.l.b16 %v2946
    %v2979 = vunpack.c.l.b16 %v2947
    %v2980 = vunpack.c.l.b16 %v2948
    %v2981 = vunpack.c.l.b16 %v2949
    %v2982 = vunpack.c.l.b16 %v2950
    %v2983 = vunpack.c.l.b16 %v2951
    %v2984 = vunpack.c.l.b16 %v2952
    %v2985 = vunpack.c.l.b16 %v2953
    %v2986 = vunpack.c.l.b16 %v2954
    %v2987 = vunpack.c.l.b16 %v2955
    %v2988 = vunpack.c.l.b16 %v2956
    %v2989 = vunpack.c.l.b16 %v2957
    %v2990 = vunpack.c.l.b16 %v2958
    %v2991 = vunpack.c.l.b16 %v2959
    %v2992 = vpack.c.b16 %v2977, %v2976
    %v2993 = vpack.c.b16 %v2979, %v2978
    %v2994 = vpack.c.b16 %v2981, %v2980
    %v2995 = vpack.c.b16 %v2983, %v2982
    %v2996 = vpack.c.b16 %v2985, %v2984
    %v2997 = vpack.c.b16 %v2987, %v2986
    %v2998 = vpack.c.b16 %v2989, %v2988
    %v2999 = vpack.c.b16 %v2991, %v2990
    %3008 = vmatpush.bf16.msra.mxu0 %v2999
    %3009 = vmatpush.bf16.msra.mxu0 %v2998
    %3010 = vmatpush.bf16.msra.mxu0 %v2997
    %3011 = vmatpush.bf16.msra.mxu0 %v2996
    %3012 = vmatpush.bf16.msra.mxu0 %v2995
    %3013 = vmatpush.bf16.msra.mxu0 %v2994
    %3014 = vmatpush.bf16.msra.mxu0 %v2993
    %3015 = vmatpush.bf16.msra.mxu0 %v2992
    %3016 = vmatmul.bf16.gmra.mxu0 %v1535
    %v3017 = vpop.f32.mrf.mxu0
    %v3018 = vadd.f32 0.0, %v3017
    %v3019 = vpop.f32.mrf.mxu0
    %v3020 = vadd.f32 0.0, %v3019
    %3021 = vmatmul.bf16.gmra.mxu0 %v1536
    %v3022 = vpop.f32.mrf.mxu0
    %v3023 = vadd.f32 0.0, %v3022
    %v3024 = vpop.f32.mrf.mxu0
    %v3025 = vadd.f32 0.0, %v3024
    %3026 = vmatmul.bf16.gmra.mxu0 %v1537
    %v3027 = vpop.f32.mrf.mxu0
    %v3028 = vadd.f32 0.0, %v3027
    %v3029 = vpop.f32.mrf.mxu0
    %v3030 = vadd.f32 0.0, %v3029
    %3031 = vmatmul.bf16.gmra.mxu0 %v1538
    %v3032 = vpop.f32.mrf.mxu0
    %v3033 = vadd.f32 0.0, %v3032
    %v3034 = vpop.f32.mrf.mxu0
    %v3035 = vadd.f32 0.0, %v3034
    %3036 = vmatmul.bf16.gmra.mxu0 %v1539
    %v3037 = vpop.f32.mrf.mxu0
    %v3038 = vadd.f32 0.0, %v3037
    %v3039 = vpop.f32.mrf.mxu0
    %v3040 = vadd.f32 0.0, %v3039
    %3041 = vmatmul.bf16.gmra.mxu0 %v1540
    %v3042 = vpop.f32.mrf.mxu0
    %v3043 = vadd.f32 0.0, %v3042
    %v3044 = vpop.f32.mrf.mxu0
    %v3045 = vadd.f32 0.0, %v3044
    %3046 = vmatmul.bf16.gmra.mxu0 %v1541
    %v3047 = vpop.f32.mrf.mxu0
    %v3048 = vadd.f32 0.0, %v3047
    %v3049 = vpop.f32.mrf.mxu0
    %v3050 = vadd.f32 0.0, %v3049
    %3051 = vmatmul.bf16.gmra.mxu0 %v1542
    %v3052 = vpop.f32.mrf.mxu0
    %v3053 = vadd.f32 0.0, %v3052
    %v3054 = vpop.f32.mrf.mxu0
    %v3055 = vadd.f32 0.0, %v3054
    %3056 = vmatmul.bf16.gmra.mxu0 %v1543
    %v3057 = vpop.f32.mrf.mxu0
    %v3058 = vadd.f32 0.0, %v3057
    %v3059 = vpop.f32.mrf.mxu0
    %v3060 = vadd.f32 0.0, %v3059
    %3061 = vmatmul.bf16.gmra.mxu0 %v1544
    %v3062 = vpop.f32.mrf.mxu0
    %v3063 = vadd.f32 0.0, %v3062
    %v3064 = vpop.f32.mrf.mxu0
    %v3065 = vadd.f32 0.0, %v3064
    %3066 = vmatmul.bf16.gmra.mxu0 %v1545
    %v3067 = vpop.f32.mrf.mxu0
    %v3068 = vadd.f32 0.0, %v3067
    %v3069 = vpop.f32.mrf.mxu0
    %v3070 = vadd.f32 0.0, %v3069
    %3071 = vmatmul.bf16.gmra.mxu0 %v1546
    %v3072 = vpop.f32.mrf.mxu0
    %v3073 = vadd.f32 0.0, %v3072
    %v3074 = vpop.f32.mrf.mxu0
    %v3075 = vadd.f32 0.0, %v3074
    %3076 = vmatmul.bf16.gmra.mxu0 %v1547
    %v3077 = vpop.f32.mrf.mxu0
    %v3078 = vadd.f32 0.0, %v3077
    %v3079 = vpop.f32.mrf.mxu0
    %v3080 = vadd.f32 0.0, %v3079
    %3081 = vmatmul.bf16.gmra.mxu0 %v1548
    %v3082 = vpop.f32.mrf.mxu0
    %v3083 = vadd.f32 0.0, %v3082
    %v3084 = vpop.f32.mrf.mxu0
    %v3085 = vadd.f32 0.0, %v3084
    %3086 = vmatmul.bf16.gmra.mxu0 %v1549
    %v3087 = vpop.f32.mrf.mxu0
    %v3088 = vadd.f32 0.0, %v3087
    %v3089 = vpop.f32.mrf.mxu0
    %v3090 = vadd.f32 0.0, %v3089
    %3091 = vmatmul.bf16.gmra.mxu0 %v2941
    %v3092 = vpop.f32.mrf.mxu0
    %v3093 = vadd.f32 0.0, %v3092
    %v3094 = vpop.f32.mrf.mxu0
    %v3095 = vadd.f32 0.0, %v3094
    %3096 = vmatmul.bf16.gmra.mxu0 %v1551
    %v3097 = vpop.f32.mrf.mxu0
    %v3098 = vadd.f32 0.0, %v3097
    %v3099 = vpop.f32.mrf.mxu0
    %v3100 = vadd.f32 0.0, %v3099
    %3101 = vmatmul.bf16.gmra.mxu0 %v1552
    %v3102 = vpop.f32.mrf.mxu0
    %v3103 = vadd.f32 0.0, %v3102
    %v3104 = vpop.f32.mrf.mxu0
    %v3105 = vadd.f32 0.0, %v3104
    %3106 = vmatmul.bf16.gmra.mxu0 %v1553
    %v3107 = vpop.f32.mrf.mxu0
    %v3108 = vadd.f32 0.0, %v3107
    %v3109 = vpop.f32.mrf.mxu0
    %v3110 = vadd.f32 0.0, %v3109
    %3111 = vmatmul.bf16.gmra.mxu0 %v1554
    %v3112 = vpop.f32.mrf.mxu0
    %v3113 = vadd.f32 0.0, %v3112
    %v3114 = vpop.f32.mrf.mxu0
    %v3115 = vadd.f32 0.0, %v3114
    %3116 = vmatmul.bf16.gmra.mxu0 %v1555
    %v3117 = vpop.f32.mrf.mxu0
    %v3118 = vadd.f32 0.0, %v3117
    %v3119 = vpop.f32.mrf.mxu0
    %v3120 = vadd.f32 0.0, %v3119
    %3121 = vmatmul.bf16.gmra.mxu0 %v1556
    %v3122 = vpop.f32.mrf.mxu0
    %v3123 = vadd.f32 0.0, %v3122
    %v3124 = vpop.f32.mrf.mxu0
    %v3125 = vadd.f32 0.0, %v3124
    %3126 = vmatmul.bf16.gmra.mxu0 %v1557
    %v3127 = vpop.f32.mrf.mxu0
    %v3128 = vadd.f32 0.0, %v3127
    %v3129 = vpop.f32.mrf.mxu0
    %v3130 = vadd.f32 0.0, %v3129
    %3131 = vmatmul.bf16.gmra.mxu0 %v1558
    %v3132 = vpop.f32.mrf.mxu0
    %v3133 = vadd.f32 0.0, %v3132
    %v3134 = vpop.f32.mrf.mxu0
    %v3135 = vadd.f32 0.0, %v3134
    %3136 = vmatmul.bf16.gmra.mxu0 %v1559
    %v3137 = vpop.f32.mrf.mxu0
    %v3138 = vadd.f32 0.0, %v3137
    %v3139 = vpop.f32.mrf.mxu0
    %v3140 = vadd.f32 0.0, %v3139
    %3141 = vmatmul.bf16.gmra.mxu0 %v1560
    %v3142 = vpop.f32.mrf.mxu0
    %v3143 = vadd.f32 0.0, %v3142
    %v3144 = vpop.f32.mrf.mxu0
    %v3145 = vadd.f32 0.0, %v3144
    %3146 = vmatmul.bf16.gmra.mxu0 %v1561
    %v3147 = vpop.f32.mrf.mxu0
    %v3148 = vadd.f32 0.0, %v3147
    %v3149 = vpop.f32.mrf.mxu0
    %v3150 = vadd.f32 0.0, %v3149
    %3151 = vmatmul.bf16.gmra.mxu0 %v1562
    %v3152 = vpop.f32.mrf.mxu0
    %v3153 = vadd.f32 0.0, %v3152
    %v3154 = vpop.f32.mrf.mxu0
    %v3155 = vadd.f32 0.0, %v3154
    %3156 = vmatmul.bf16.gmra.mxu0 %v1563
    %v3157 = vpop.f32.mrf.mxu0
    %v3158 = vadd.f32 0.0, %v3157
    %v3159 = vpop.f32.mrf.mxu0
    %v3160 = vadd.f32 0.0, %v3159
    %3161 = vmatmul.bf16.gmra.mxu0 %v1564
    %v3162 = vpop.f32.mrf.mxu0
    %v3163 = vadd.f32 0.0, %v3162
    %v3164 = vpop.f32.mrf.mxu0
    %v3165 = vadd.f32 0.0, %v3164
    %3166 = vmatmul.bf16.gmra.mxu0 %v1565
    %v3167 = vpop.f32.mrf.mxu0
    %v3168 = vadd.f32 0.0, %v3167
    %v3169 = vpop.f32.mrf.mxu0
    %v3170 = vadd.f32 0.0, %v3169
    %3171 = vmatmul.bf16.gmra.mxu0 %v2942
    %v3172 = vpop.f32.mrf.mxu0
    %v3173 = vadd.f32 0.0, %v3172
    %v3174 = vpop.f32.mrf.mxu0
    %v3175 = vadd.f32 0.0, %v3174
    %3176 = vdwg.mxu0
    %v3177 = vadd.f32 %v2877, %v3018
    %v3178 = vadd.f32 %v2878, %v3020
    %v3179 = vadd.f32 %v2879, %v3023
    %v3180 = vadd.f32 %v2880, %v3025
    %v3181 = vadd.f32 %v2881, %v3028
    %v3182 = vadd.f32 %v2882, %v3030
    %v3183 = vadd.f32 %v2883, %v3033
    %v3184 = vadd.f32 %v2884, %v3035
    %v3185 = vadd.f32 %v2885, %v3038
    %v3186 = vadd.f32 %v2886, %v3040
    %v3187 = vadd.f32 %v2887, %v3043
    %v3188 = vadd.f32 %v2888, %v3045
    %v3189 = vadd.f32 %v2889, %v3048
    %v3190 = vadd.f32 %v2890, %v3050
    %v3191 = vadd.f32 %v2891, %v3053
    %v3192 = vadd.f32 %v2892, %v3055
    %v3193 = vadd.f32 %v2893, %v3058
    %v3194 = vadd.f32 %v2894, %v3060
    %v3195 = vadd.f32 %v2895, %v3063
    %v3196 = vadd.f32 %v2896, %v3065
    %v3197 = vadd.f32 %v2897, %v3068
    %v3198 = vadd.f32 %v2898, %v3070
    %v3199 = vadd.f32 %v2899, %v3073
    %v3200 = vadd.f32 %v2900, %v3075
    %v3201 = vadd.f32 %v2901, %v3078
    %v3202 = vadd.f32 %v2902, %v3080
    %v3203 = vadd.f32 %v2903, %v3083
    %v3204 = vadd.f32 %v2904, %v3085
    %v3205 = vadd.f32 %v2905, %v3088
    %v3206 = vadd.f32 %v2906, %v3090
    %v3207 = vadd.f32 %v2907, %v3093
    %v3208 = vadd.f32 %v2908, %v3095
    %v3209 = vadd.f32 %v2909, %v3098
    %v3210 = vadd.f32 %v2910, %v3100
    %v3211 = vadd.f32 %v2911, %v3103
    %v3212 = vadd.f32 %v2912, %v3105
    %v3213 = vadd.f32 %v2913, %v3108
    %v3214 = vadd.f32 %v2914, %v3110
    %v3215 = vadd.f32 %v2915, %v3113
    %v3216 = vadd.f32 %v2916, %v3115
    %v3217 = vadd.f32 %v2917, %v3118
    %v3218 = vadd.f32 %v2918, %v3120
    %v3219 = vadd.f32 %v2919, %v3123
    %v3220 = vadd.f32 %v2920, %v3125
    %v3221 = vadd.f32 %v2921, %v3128
    %v3222 = vadd.f32 %v2922, %v3130
    %v3223 = vadd.f32 %v2923, %v3133
    %v3224 = vadd.f32 %v2924, %v3135
    %v3225 = vadd.f32 %v2925, %v3138
    %v3226 = vadd.f32 %v2926, %v3140
    %v3227 = vadd.f32 %v2927, %v3143
    %v3228 = vadd.f32 %v2928, %v3145
    %v3229 = vadd.f32 %v2929, %v3148
    %v3230 = vadd.f32 %v2930, %v3150
    %v3231 = vadd.f32 %v2931, %v3153
    %v3232 = vadd.f32 %v2932, %v3155
    %v3233 = vadd.f32 %v2933, %v3158
    %v3234 = vadd.f32 %v2934, %v3160
    %v3235 = vadd.f32 %v2935, %v3163
    %v3236 = vadd.f32 %v2936, %v3165
    %v3237 = vadd.f32 %v2937, %v3168
    %v3238 = vadd.f32 %v2938, %v3170
    %v3239 = vadd.f32 %v2939, %v3173
    %v3240 = vadd.f32 %v2940, %v3175
    %v3247 = vrot.slane %v1474, 1
    %v3248 = vrot.slane %v1475, 1
    %v3249 = vsel %vm1678, %v3247, %v3248
    %v3250 = vrot.slane %v1476, 1
    %v3251 = vsel %vm1678, %v3248, %v3250
    %v3252 = vrot.slane %v1528, 1
    %v3253 = vrot.slane %v1529, 1
    %v3254 = vsel %vm1678, %v3252, %v3253
    %v3255 = vrot.slane %v1530, 1
    %v3256 = vsel %vm1678, %v3253, %v3255
    %v3261 = vpack.c.bf16 %v3251, %v3249
    %v3262 = vpack.c.bf16 %v3256, %v3254
    %s3263 = scalar_lea.vmem [#allocation8], 256
    %v3264 = vld [vmem:[%s3263] sm:$0xf]
    %v3265 = vld [vmem:[%s3263 + $0x4] sm:$0xf]
    %v3266 = vld [vmem:[%s3263 + $0x8] sm:$0xf]
    %v3267 = vld [vmem:[%s3263 + $0xc] sm:$0xf]
    %v3268 = vld [vmem:[%s3263 + $0x10] sm:$0xf]
    %v3269 = vld [vmem:[%s3263 + $0x14] sm:$0xf]
    %v3270 = vld [vmem:[%s3263 + $0x18] sm:$0xf]
    %v3271 = vld [vmem:[%s3263 + $0x1c] sm:$0xf]
    %v3272 = vld [vmem:[%s3263 + $0x20] sm:$0xf]
    %v3273 = vld [vmem:[%s3263 + $0x24] sm:$0xf]
    %v3274 = vld [vmem:[%s3263 + $0x28] sm:$0xf]
    %v3275 = vld [vmem:[%s3263 + $0x2c] sm:$0xf]
    %v3276 = vld [vmem:[%s3263 + $0x30] sm:$0xf]
    %v3277 = vld [vmem:[%s3263 + $0x34] sm:$0xf]
    %v3278 = vld [vmem:[%s3263 + $0x38] sm:$0xf]
    %v3279 = vld [vmem:[%s3263 + $0x3c] sm:$0xf]
    %v3296 = vunpack.c.l.b16 %v3264
    %v3297 = vunpack.c.l.b16 %v3265
    %v3298 = vunpack.c.l.b16 %v3266
    %v3299 = vunpack.c.l.b16 %v3267
    %v3300 = vunpack.c.l.b16 %v3268
    %v3301 = vunpack.c.l.b16 %v3269
    %v3302 = vunpack.c.l.b16 %v3270
    %v3303 = vunpack.c.l.b16 %v3271
    %v3304 = vunpack.c.l.b16 %v3272
    %v3305 = vunpack.c.l.b16 %v3273
    %v3306 = vunpack.c.l.b16 %v3274
    %v3307 = vunpack.c.l.b16 %v3275
    %v3308 = vunpack.c.l.b16 %v3276
    %v3309 = vunpack.c.l.b16 %v3277
    %v3310 = vunpack.c.l.b16 %v3278
    %v3311 = vunpack.c.l.b16 %v3279
    %v3312 = vpack.c.b16 %v3297, %v3296
    %v3313 = vpack.c.b16 %v3299, %v3298
    %v3314 = vpack.c.b16 %v3301, %v3300
    %v3315 = vpack.c.b16 %v3303, %v3302
    %v3316 = vpack.c.b16 %v3305, %v3304
    %v3317 = vpack.c.b16 %v3307, %v3306
    %v3318 = vpack.c.b16 %v3309, %v3308
    %v3319 = vpack.c.b16 %v3311, %v3310
    %3328 = vmatpush.bf16.msra.mxu0 %v3319
    %3329 = vmatpush.bf16.msra.mxu0 %v3318
    %3330 = vmatpush.bf16.msra.mxu0 %v3317
    %3331 = vmatpush.bf16.msra.mxu0 %v3316
    %3332 = vmatpush.bf16.msra.mxu0 %v3315
    %3333 = vmatpush.bf16.msra.mxu0 %v3314
    %3334 = vmatpush.bf16.msra.mxu0 %v3313
    %3335 = vmatpush.bf16.msra.mxu0 %v3312
    %3336 = vmatmul.bf16.gmra.mxu0 %v1904
    %v3337 = vpop.f32.mrf.mxu0
    %v3338 = vadd.f32 0.0, %v3337
    %v3339 = vpop.f32.mrf.mxu0
    %v3340 = vadd.f32 0.0, %v3339
    %3341 = vmatmul.bf16.gmra.mxu0 %v1905
    %v3342 = vpop.f32.mrf.mxu0
    %v3343 = vadd.f32 0.0, %v3342
    %v3344 = vpop.f32.mrf.mxu0
    %v3345 = vadd.f32 0.0, %v3344
    %3346 = vmatmul.bf16.gmra.mxu0 %v1906
    %v3347 = vpop.f32.mrf.mxu0
    %v3348 = vadd.f32 0.0, %v3347
    %v3349 = vpop.f32.mrf.mxu0
    %v3350 = vadd.f32 0.0, %v3349
    %3351 = vmatmul.bf16.gmra.mxu0 %v1907
    %v3352 = vpop.f32.mrf.mxu0
    %v3353 = vadd.f32 0.0, %v3352
    %v3354 = vpop.f32.mrf.mxu0
    %v3355 = vadd.f32 0.0, %v3354
    %3356 = vmatmul.bf16.gmra.mxu0 %v1908
    %v3357 = vpop.f32.mrf.mxu0
    %v3358 = vadd.f32 0.0, %v3357
    %v3359 = vpop.f32.mrf.mxu0
    %v3360 = vadd.f32 0.0, %v3359
    %3361 = vmatmul.bf16.gmra.mxu0 %v1909
    %v3362 = vpop.f32.mrf.mxu0
    %v3363 = vadd.f32 0.0, %v3362
    %v3364 = vpop.f32.mrf.mxu0
    %v3365 = vadd.f32 0.0, %v3364
    %3366 = vmatmul.bf16.gmra.mxu0 %v1910
    %v3367 = vpop.f32.mrf.mxu0
    %v3368 = vadd.f32 0.0, %v3367
    %v3369 = vpop.f32.mrf.mxu0
    %v3370 = vadd.f32 0.0, %v3369
    %3371 = vmatmul.bf16.gmra.mxu0 %v1911
    %v3372 = vpop.f32.mrf.mxu0
    %v3373 = vadd.f32 0.0, %v3372
    %v3374 = vpop.f32.mrf.mxu0
    %v3375 = vadd.f32 0.0, %v3374
    %3376 = vmatmul.bf16.gmra.mxu0 %v1912
    %v3377 = vpop.f32.mrf.mxu0
    %v3378 = vadd.f32 0.0, %v3377
    %v3379 = vpop.f32.mrf.mxu0
    %v3380 = vadd.f32 0.0, %v3379
    %3381 = vmatmul.bf16.gmra.mxu0 %v1913
    %v3382 = vpop.f32.mrf.mxu0
    %v3383 = vadd.f32 0.0, %v3382
    %v3384 = vpop.f32.mrf.mxu0
    %v3385 = vadd.f32 0.0, %v3384
    %3386 = vmatmul.bf16.gmra.mxu0 %v1914
    %v3387 = vpop.f32.mrf.mxu0
    %v3388 = vadd.f32 0.0, %v3387
    %v3389 = vpop.f32.mrf.mxu0
    %v3390 = vadd.f32 0.0, %v3389
    %3391 = vmatmul.bf16.gmra.mxu0 %v1915
    %v3392 = vpop.f32.mrf.mxu0
    %v3393 = vadd.f32 0.0, %v3392
    %v3394 = vpop.f32.mrf.mxu0
    %v3395 = vadd.f32 0.0, %v3394
    %3396 = vmatmul.bf16.gmra.mxu0 %v1916
    %v3397 = vpop.f32.mrf.mxu0
    %v3398 = vadd.f32 0.0, %v3397
    %v3399 = vpop.f32.mrf.mxu0
    %v3400 = vadd.f32 0.0, %v3399
    %3401 = vmatmul.bf16.gmra.mxu0 %v1917
    %v3402 = vpop.f32.mrf.mxu0
    %v3403 = vadd.f32 0.0, %v3402
    %v3404 = vpop.f32.mrf.mxu0
    %v3405 = vadd.f32 0.0, %v3404
    %3406 = vmatmul.bf16.gmra.mxu0 %v1918
    %v3407 = vpop.f32.mrf.mxu0
    %v3408 = vadd.f32 0.0, %v3407
    %v3409 = vpop.f32.mrf.mxu0
    %v3410 = vadd.f32 0.0, %v3409
    %3411 = vmatmul.bf16.gmra.mxu0 %v3261
    %v3412 = vpop.f32.mrf.mxu0
    %v3413 = vadd.f32 0.0, %v3412
    %v3414 = vpop.f32.mrf.mxu0
    %v3415 = vadd.f32 0.0, %v3414
    %3416 = vmatmul.bf16.gmra.mxu0 %v1920
    %v3417 = vpop.f32.mrf.mxu0
    %v3418 = vadd.f32 0.0, %v3417
    %v3419 = vpop.f32.mrf.mxu0
    %v3420 = vadd.f32 0.0, %v3419
    %3421 = vmatmul.bf16.gmra.mxu0 %v1921
    %v3422 = vpop.f32.mrf.mxu0
    %v3423 = vadd.f32 0.0, %v3422
    %v3424 = vpop.f32.mrf.mxu0
    %v3425 = vadd.f32 0.0, %v3424
    %3426 = vmatmul.bf16.gmra.mxu0 %v1922
    %v3427 = vpop.f32.mrf.mxu0
    %v3428 = vadd.f32 0.0, %v3427
    %v3429 = vpop.f32.mrf.mxu0
    %v3430 = vadd.f32 0.0, %v3429
    %3431 = vmatmul.bf16.gmra.mxu0 %v1923
    %v3432 = vpop.f32.mrf.mxu0
    %v3433 = vadd.f32 0.0, %v3432
    %v3434 = vpop.f32.mrf.mxu0
    %v3435 = vadd.f32 0.0, %v3434
    %3436 = vmatmul.bf16.gmra.mxu0 %v1924
    %v3437 = vpop.f32.mrf.mxu0
    %v3438 = vadd.f32 0.0, %v3437
    %v3439 = vpop.f32.mrf.mxu0
    %v3440 = vadd.f32 0.0, %v3439
    %3441 = vmatmul.bf16.gmra.mxu0 %v1925
    %v3442 = vpop.f32.mrf.mxu0
    %v3443 = vadd.f32 0.0, %v3442
    %v3444 = vpop.f32.mrf.mxu0
    %v3445 = vadd.f32 0.0, %v3444
    %3446 = vmatmul.bf16.gmra.mxu0 %v1926
    %v3447 = vpop.f32.mrf.mxu0
    %v3448 = vadd.f32 0.0, %v3447
    %v3449 = vpop.f32.mrf.mxu0
    %v3450 = vadd.f32 0.0, %v3449
    %3451 = vmatmul.bf16.gmra.mxu0 %v1927
    %v3452 = vpop.f32.mrf.mxu0
    %v3453 = vadd.f32 0.0, %v3452
    %v3454 = vpop.f32.mrf.mxu0
    %v3455 = vadd.f32 0.0, %v3454
    %3456 = vmatmul.bf16.gmra.mxu0 %v1928
    %v3457 = vpop.f32.mrf.mxu0
    %v3458 = vadd.f32 0.0, %v3457
    %v3459 = vpop.f32.mrf.mxu0
    %v3460 = vadd.f32 0.0, %v3459
    %3461 = vmatmul.bf16.gmra.mxu0 %v1929
    %v3462 = vpop.f32.mrf.mxu0
    %v3463 = vadd.f32 0.0, %v3462
    %v3464 = vpop.f32.mrf.mxu0
    %v3465 = vadd.f32 0.0, %v3464
    %3466 = vmatmul.bf16.gmra.mxu0 %v1930
    %v3467 = vpop.f32.mrf.mxu0
    %v3468 = vadd.f32 0.0, %v3467
    %v3469 = vpop.f32.mrf.mxu0
    %v3470 = vadd.f32 0.0, %v3469
    %3471 = vmatmul.bf16.gmra.mxu0 %v1931
    %v3472 = vpop.f32.mrf.mxu0
    %v3473 = vadd.f32 0.0, %v3472
    %v3474 = vpop.f32.mrf.mxu0
    %v3475 = vadd.f32 0.0, %v3474
    %3476 = vmatmul.bf16.gmra.mxu0 %v1932
    %v3477 = vpop.f32.mrf.mxu0
    %v3478 = vadd.f32 0.0, %v3477
    %v3479 = vpop.f32.mrf.mxu0
    %v3480 = vadd.f32 0.0, %v3479
    %3481 = vmatmul.bf16.gmra.mxu0 %v1933
    %v3482 = vpop.f32.mrf.mxu0
    %v3483 = vadd.f32 0.0, %v3482
    %v3484 = vpop.f32.mrf.mxu0
    %v3485 = vadd.f32 0.0, %v3484
    %3486 = vmatmul.bf16.gmra.mxu0 %v1934
    %v3487 = vpop.f32.mrf.mxu0
    %v3488 = vadd.f32 0.0, %v3487
    %v3489 = vpop.f32.mrf.mxu0
    %v3490 = vadd.f32 0.0, %v3489
    %3491 = vmatmul.bf16.gmra.mxu0 %v3262
    %v3492 = vpop.f32.mrf.mxu0
    %v3493 = vadd.f32 0.0, %v3492
    %v3494 = vpop.f32.mrf.mxu0
    %v3495 = vadd.f32 0.0, %v3494
    %3496 = vdwg.mxu0
    %v3497 = vadd.f32 %v3177, %v3338
    %v3498 = vadd.f32 %v3178, %v3340
    %v3499 = vadd.f32 %v3179, %v3343
    %v3500 = vadd.f32 %v3180, %v3345
    %v3501 = vadd.f32 %v3181, %v3348
    %v3502 = vadd.f32 %v3182, %v3350
    %v3503 = vadd.f32 %v3183, %v3353
    %v3504 = vadd.f32 %v3184, %v3355
    %v3505 = vadd.f32 %v3185, %v3358
    %v3506 = vadd.f32 %v3186, %v3360
    %v3507 = vadd.f32 %v3187, %v3363
    %v3508 = vadd.f32 %v3188, %v3365
    %v3509 = vadd.f32 %v3189, %v3368
    %v3510 = vadd.f32 %v3190, %v3370
    %v3511 = vadd.f32 %v3191, %v3373
    %v3512 = vadd.f32 %v3192, %v3375
    %v3513 = vadd.f32 %v3193, %v3378
    %v3514 = vadd.f32 %v3194, %v3380
    %v3515 = vadd.f32 %v3195, %v3383
    %v3516 = vadd.f32 %v3196, %v3385
    %v3517 = vadd.f32 %v3197, %v3388
    %v3518 = vadd.f32 %v3198, %v3390
    %v3519 = vadd.f32 %v3199, %v3393
    %v3520 = vadd.f32 %v3200, %v3395
    %v3521 = vadd.f32 %v3201, %v3398
    %v3522 = vadd.f32 %v3202, %v3400
    %v3523 = vadd.f32 %v3203, %v3403
    %v3524 = vadd.f32 %v3204, %v3405
    %v3525 = vadd.f32 %v3205, %v3408
    %v3526 = vadd.f32 %v3206, %v3410
    %v3527 = vadd.f32 %v3207, %v3413
    %v3528 = vadd.f32 %v3208, %v3415
    %v3529 = vadd.f32 %v3209, %v3418
    %v3530 = vadd.f32 %v3210, %v3420
    %v3531 = vadd.f32 %v3211, %v3423
    %v3532 = vadd.f32 %v3212, %v3425
    %v3533 = vadd.f32 %v3213, %v3428
    %v3534 = vadd.f32 %v3214, %v3430
    %v3535 = vadd.f32 %v3215, %v3433
    %v3536 = vadd.f32 %v3216, %v3435
    %v3537 = vadd.f32 %v3217, %v3438
    %v3538 = vadd.f32 %v3218, %v3440
    %v3539 = vadd.f32 %v3219, %v3443
    %v3540 = vadd.f32 %v3220, %v3445
    %v3541 = vadd.f32 %v3221, %v3448
    %v3542 = vadd.f32 %v3222, %v3450
    %v3543 = vadd.f32 %v3223, %v3453
    %v3544 = vadd.f32 %v3224, %v3455
    %v3545 = vadd.f32 %v3225, %v3458
    %v3546 = vadd.f32 %v3226, %v3460
    %v3547 = vadd.f32 %v3227, %v3463
    %v3548 = vadd.f32 %v3228, %v3465
    %v3549 = vadd.f32 %v3229, %v3468
    %v3550 = vadd.f32 %v3230, %v3470
    %v3551 = vadd.f32 %v3231, %v3473
    %v3552 = vadd.f32 %v3232, %v3475
    %v3553 = vadd.f32 %v3233, %v3478
    %v3554 = vadd.f32 %v3234, %v3480
    %v3555 = vadd.f32 %v3235, %v3483
    %v3556 = vadd.f32 %v3236, %v3485
    %v3557 = vadd.f32 %v3237, %v3488
    %v3558 = vadd.f32 %v3238, %v3490
    %v3559 = vadd.f32 %v3239, %v3493
    %v3560 = vadd.f32 %v3240, %v3495
    %v3561 = vrot.slane %v1474, 2
    %v3562 = vrot.slane %v1475, 2
    %v3563 = vsel %vm2386, %v3561, %v3562
    %v3564 = vrot.slane %v1476, 2
    %v3565 = vsel %vm2386, %v3562, %v3564
    %v3566 = vrot.slane %v1528, 2
    %v3567 = vrot.slane %v1529, 2
    %v3568 = vsel %vm2386, %v3566, %v3567
    %v3569 = vrot.slane %v1530, 2
    %v3570 = vsel %vm2386, %v3567, %v3569
    %v3575 = vpack.c.bf16 %v3565, %v3563
    %v3576 = vpack.c.bf16 %v3570, %v3568
    %s3577 = scalar_lea.vmem [#allocation8], 320
    %v3578 = vld [vmem:[%s3577] sm:$0xf]
    %v3579 = vld [vmem:[%s3577 + $0x4] sm:$0xf]
    %v3580 = vld [vmem:[%s3577 + $0x8] sm:$0xf]
    %v3581 = vld [vmem:[%s3577 + $0xc] sm:$0xf]
    %v3582 = vld [vmem:[%s3577 + $0x10] sm:$0xf]
    %v3583 = vld [vmem:[%s3577 + $0x14] sm:$0xf]
    %v3584 = vld [vmem:[%s3577 + $0x18] sm:$0xf]
    %v3585 = vld [vmem:[%s3577 + $0x1c] sm:$0xf]
    %v3586 = vld [vmem:[%s3577 + $0x20] sm:$0xf]
    %v3587 = vld [vmem:[%s3577 + $0x24] sm:$0xf]
    %v3588 = vld [vmem:[%s3577 + $0x28] sm:$0xf]
    %v3589 = vld [vmem:[%s3577 + $0x2c] sm:$0xf]
    %v3590 = vld [vmem:[%s3577 + $0x30] sm:$0xf]
    %v3591 = vld [vmem:[%s3577 + $0x34] sm:$0xf]
    %v3592 = vld [vmem:[%s3577 + $0x38] sm:$0xf]
    %v3593 = vld [vmem:[%s3577 + $0x3c] sm:$0xf]
    %v3610 = vunpack.c.l.b16 %v3578
    %v3611 = vunpack.c.l.b16 %v3579
    %v3612 = vunpack.c.l.b16 %v3580
    %v3613 = vunpack.c.l.b16 %v3581
    %v3614 = vunpack.c.l.b16 %v3582
    %v3615 = vunpack.c.l.b16 %v3583
    %v3616 = vunpack.c.l.b16 %v3584
    %v3617 = vunpack.c.l.b16 %v3585
    %v3618 = vunpack.c.l.b16 %v3586
    %v3619 = vunpack.c.l.b16 %v3587
    %v3620 = vunpack.c.l.b16 %v3588
    %v3621 = vunpack.c.l.b16 %v3589
    %v3622 = vunpack.c.l.b16 %v3590
    %v3623 = vunpack.c.l.b16 %v3591
    %v3624 = vunpack.c.l.b16 %v3592
    %v3625 = vunpack.c.l.b16 %v3593
    %v3626 = vpack.c.b16 %v3611, %v3610
    %v3627 = vpack.c.b16 %v3613, %v3612
    %v3628 = vpack.c.b16 %v3615, %v3614
    %v3629 = vpack.c.b16 %v3617, %v3616
    %v3630 = vpack.c.b16 %v3619, %v3618
    %v3631 = vpack.c.b16 %v3621, %v3620
    %v3632 = vpack.c.b16 %v3623, %v3622
    %v3633 = vpack.c.b16 %v3625, %v3624
    %3642 = vmatpush.bf16.msra.mxu0 %v3633
    %3643 = vmatpush.bf16.msra.mxu0 %v3632
    %3644 = vmatpush.bf16.msra.mxu0 %v3631
    %3645 = vmatpush.bf16.msra.mxu0 %v3630
    %3646 = vmatpush.bf16.msra.mxu0 %v3629
    %3647 = vmatpush.bf16.msra.mxu0 %v3628
    %3648 = vmatpush.bf16.msra.mxu0 %v3627
    %3649 = vmatpush.bf16.msra.mxu0 %v3626
    %3650 = vmatmul.bf16.gmra.mxu0 %v2612
    %v3651 = vpop.f32.mrf.mxu0
    %v3652 = vadd.f32 0.0, %v3651
    %v3653 = vpop.f32.mrf.mxu0
    %v3654 = vadd.f32 0.0, %v3653
    %3655 = vmatmul.bf16.gmra.mxu0 %v2613
    %v3656 = vpop.f32.mrf.mxu0
    %v3657 = vadd.f32 0.0, %v3656
    %v3658 = vpop.f32.mrf.mxu0
    %v3659 = vadd.f32 0.0, %v3658
    %3660 = vmatmul.bf16.gmra.mxu0 %v2614
    %v3661 = vpop.f32.mrf.mxu0
    %v3662 = vadd.f32 0.0, %v3661
    %v3663 = vpop.f32.mrf.mxu0
    %v3664 = vadd.f32 0.0, %v3663
    %3665 = vmatmul.bf16.gmra.mxu0 %v2615
    %v3666 = vpop.f32.mrf.mxu0
    %v3667 = vadd.f32 0.0, %v3666
    %v3668 = vpop.f32.mrf.mxu0
    %v3669 = vadd.f32 0.0, %v3668
    %3670 = vmatmul.bf16.gmra.mxu0 %v2616
    %v3671 = vpop.f32.mrf.mxu0
    %v3672 = vadd.f32 0.0, %v3671
    %v3673 = vpop.f32.mrf.mxu0
    %v3674 = vadd.f32 0.0, %v3673
    %3675 = vmatmul.bf16.gmra.mxu0 %v2617
    %v3676 = vpop.f32.mrf.mxu0
    %v3677 = vadd.f32 0.0, %v3676
    %v3678 = vpop.f32.mrf.mxu0
    %v3679 = vadd.f32 0.0, %v3678
    %3680 = vmatmul.bf16.gmra.mxu0 %v2618
    %v3681 = vpop.f32.mrf.mxu0
    %v3682 = vadd.f32 0.0, %v3681
    %v3683 = vpop.f32.mrf.mxu0
    %v3684 = vadd.f32 0.0, %v3683
    %3685 = vmatmul.bf16.gmra.mxu0 %v2619
    %v3686 = vpop.f32.mrf.mxu0
    %v3687 = vadd.f32 0.0, %v3686
    %v3688 = vpop.f32.mrf.mxu0
    %v3689 = vadd.f32 0.0, %v3688
    %3690 = vmatmul.bf16.gmra.mxu0 %v2620
    %v3691 = vpop.f32.mrf.mxu0
    %v3692 = vadd.f32 0.0, %v3691
    %v3693 = vpop.f32.mrf.mxu0
    %v3694 = vadd.f32 0.0, %v3693
    %3695 = vmatmul.bf16.gmra.mxu0 %v2621
    %v3696 = vpop.f32.mrf.mxu0
    %v3697 = vadd.f32 0.0, %v3696
    %v3698 = vpop.f32.mrf.mxu0
    %v3699 = vadd.f32 0.0, %v3698
    %3700 = vmatmul.bf16.gmra.mxu0 %v2622
    %v3701 = vpop.f32.mrf.mxu0
    %v3702 = vadd.f32 0.0, %v3701
    %v3703 = vpop.f32.mrf.mxu0
    %v3704 = vadd.f32 0.0, %v3703
    %3705 = vmatmul.bf16.gmra.mxu0 %v2623
    %v3706 = vpop.f32.mrf.mxu0
    %v3707 = vadd.f32 0.0, %v3706
    %v3708 = vpop.f32.mrf.mxu0
    %v3709 = vadd.f32 0.0, %v3708
    %3710 = vmatmul.bf16.gmra.mxu0 %v2624
    %v3711 = vpop.f32.mrf.mxu0
    %v3712 = vadd.f32 0.0, %v3711
    %v3713 = vpop.f32.mrf.mxu0
    %v3714 = vadd.f32 0.0, %v3713
    %3715 = vmatmul.bf16.gmra.mxu0 %v2625
    %v3716 = vpop.f32.mrf.mxu0
    %v3717 = vadd.f32 0.0, %v3716
    %v3718 = vpop.f32.mrf.mxu0
    %v3719 = vadd.f32 0.0, %v3718
    %3720 = vmatmul.bf16.gmra.mxu0 %v2626
    %v3721 = vpop.f32.mrf.mxu0
    %v3722 = vadd.f32 0.0, %v3721
    %v3723 = vpop.f32.mrf.mxu0
    %v3724 = vadd.f32 0.0, %v3723
    %3725 = vmatmul.bf16.gmra.mxu0 %v3575
    %v3726 = vpop.f32.mrf.mxu0
    %v3727 = vadd.f32 0.0, %v3726
    %v3728 = vpop.f32.mrf.mxu0
    %v3729 = vadd.f32 0.0, %v3728
    %3730 = vmatmul.bf16.gmra.mxu0 %v2628
    %v3731 = vpop.f32.mrf.mxu0
    %v3732 = vadd.f32 0.0, %v3731
    %v3733 = vpop.f32.mrf.mxu0
    %v3734 = vadd.f32 0.0, %v3733
    %3735 = vmatmul.bf16.gmra.mxu0 %v2629
    %v3736 = vpop.f32.mrf.mxu0
    %v3737 = vadd.f32 0.0, %v3736
    %v3738 = vpop.f32.mrf.mxu0
    %v3739 = vadd.f32 0.0, %v3738
    %3740 = vmatmul.bf16.gmra.mxu0 %v2630
    %v3741 = vpop.f32.mrf.mxu0
    %v3742 = vadd.f32 0.0, %v3741
    %v3743 = vpop.f32.mrf.mxu0
    %v3744 = vadd.f32 0.0, %v3743
    %3745 = vmatmul.bf16.gmra.mxu0 %v2631
    %v3746 = vpop.f32.mrf.mxu0
    %v3747 = vadd.f32 0.0, %v3746
    %v3748 = vpop.f32.mrf.mxu0
    %v3749 = vadd.f32 0.0, %v3748
    %3750 = vmatmul.bf16.gmra.mxu0 %v2632
    %v3751 = vpop.f32.mrf.mxu0
    %v3752 = vadd.f32 0.0, %v3751
    %v3753 = vpop.f32.mrf.mxu0
    %v3754 = vadd.f32 0.0, %v3753
    %3755 = vmatmul.bf16.gmra.mxu0 %v2633
    %v3756 = vpop.f32.mrf.mxu0
    %v3757 = vadd.f32 0.0, %v3756
    %v3758 = vpop.f32.mrf.mxu0
    %v3759 = vadd.f32 0.0, %v3758
    %3760 = vmatmul.bf16.gmra.mxu0 %v2634
    %v3761 = vpop.f32.mrf.mxu0
    %v3762 = vadd.f32 0.0, %v3761
    %v3763 = vpop.f32.mrf.mxu0
    %v3764 = vadd.f32 0.0, %v3763
    %3765 = vmatmul.bf16.gmra.mxu0 %v2635
    %v3766 = vpop.f32.mrf.mxu0
    %v3767 = vadd.f32 0.0, %v3766
    %v3768 = vpop.f32.mrf.mxu0
    %v3769 = vadd.f32 0.0, %v3768
    %3770 = vmatmul.bf16.gmra.mxu0 %v2636
    %v3771 = vpop.f32.mrf.mxu0
    %v3772 = vadd.f32 0.0, %v3771
    %v3773 = vpop.f32.mrf.mxu0
    %v3774 = vadd.f32 0.0, %v3773
    %3775 = vmatmul.bf16.gmra.mxu0 %v2637
    %v3776 = vpop.f32.mrf.mxu0
    %v3777 = vadd.f32 0.0, %v3776
    %v3778 = vpop.f32.mrf.mxu0
    %v3779 = vadd.f32 0.0, %v3778
    %3780 = vmatmul.bf16.gmra.mxu0 %v2638
    %v3781 = vpop.f32.mrf.mxu0
    %v3782 = vadd.f32 0.0, %v3781
    %v3783 = vpop.f32.mrf.mxu0
    %v3784 = vadd.f32 0.0, %v3783
    %3785 = vmatmul.bf16.gmra.mxu0 %v2639
    %v3786 = vpop.f32.mrf.mxu0
    %v3787 = vadd.f32 0.0, %v3786
    %v3788 = vpop.f32.mrf.mxu0
    %v3789 = vadd.f32 0.0, %v3788
    %3790 = vmatmul.bf16.gmra.mxu0 %v2640
    %v3791 = vpop.f32.mrf.mxu0
    %v3792 = vadd.f32 0.0, %v3791
    %v3793 = vpop.f32.mrf.mxu0
    %v3794 = vadd.f32 0.0, %v3793
    %3795 = vmatmul.bf16.gmra.mxu0 %v2641
    %v3796 = vpop.f32.mrf.mxu0
    %v3797 = vadd.f32 0.0, %v3796
    %v3798 = vpop.f32.mrf.mxu0
    %v3799 = vadd.f32 0.0, %v3798
    %3800 = vmatmul.bf16.gmra.mxu0 %v2642
    %v3801 = vpop.f32.mrf.mxu0
    %v3802 = vadd.f32 0.0, %v3801
    %v3803 = vpop.f32.mrf.mxu0
    %v3804 = vadd.f32 0.0, %v3803
    %3805 = vmatmul.bf16.gmra.mxu0 %v3576
    %v3806 = vpop.f32.mrf.mxu0
    %v3807 = vadd.f32 0.0, %v3806
    %v3808 = vpop.f32.mrf.mxu0
    %v3809 = vadd.f32 0.0, %v3808
    %3810 = vdwg.mxu0
    %v3811 = vadd.f32 %v3497, %v3652
    %v3812 = vadd.f32 %v3498, %v3654
    %v3813 = vadd.f32 %v3499, %v3657
    %v3814 = vadd.f32 %v3500, %v3659
    %v3815 = vadd.f32 %v3501, %v3662
    %v3816 = vadd.f32 %v3502, %v3664
    %v3817 = vadd.f32 %v3503, %v3667
    %v3818 = vadd.f32 %v3504, %v3669
    %v3819 = vadd.f32 %v3505, %v3672
    %v3820 = vadd.f32 %v3506, %v3674
    %v3821 = vadd.f32 %v3507, %v3677
    %v3822 = vadd.f32 %v3508, %v3679
    %v3823 = vadd.f32 %v3509, %v3682
    %v3824 = vadd.f32 %v3510, %v3684
    %v3825 = vadd.f32 %v3511, %v3687
    %v3826 = vadd.f32 %v3512, %v3689
    %v3827 = vadd.f32 %v3513, %v3692
    %v3828 = vadd.f32 %v3514, %v3694
    %v3829 = vadd.f32 %v3515, %v3697
    %v3830 = vadd.f32 %v3516, %v3699
    %v3831 = vadd.f32 %v3517, %v3702
    %v3832 = vadd.f32 %v3518, %v3704
    %v3833 = vadd.f32 %v3519, %v3707
    %v3834 = vadd.f32 %v3520, %v3709
    %v3835 = vadd.f32 %v3521, %v3712
    %v3836 = vadd.f32 %v3522, %v3714
    %v3837 = vadd.f32 %v3523, %v3717
    %v3838 = vadd.f32 %v3524, %v3719
    %v3839 = vadd.f32 %v3525, %v3722
    %v3840 = vadd.f32 %v3526, %v3724
    %v3841 = vadd.f32 %v3527, %v3727
    %v3842 = vadd.f32 %v3528, %v3729
    %v3843 = vadd.f32 %v3529, %v3732
    %v3844 = vadd.f32 %v3530, %v3734
    %v3845 = vadd.f32 %v3531, %v3737
    %v3846 = vadd.f32 %v3532, %v3739
    %v3847 = vadd.f32 %v3533, %v3742
    %v3848 = vadd.f32 %v3534, %v3744
    %v3849 = vadd.f32 %v3535, %v3747
    %v3850 = vadd.f32 %v3536, %v3749
    %v3851 = vadd.f32 %v3537, %v3752
    %v3852 = vadd.f32 %v3538, %v3754
    %v3853 = vadd.f32 %v3539, %v3757
    %v3854 = vadd.f32 %v3540, %v3759
    %v3855 = vadd.f32 %v3541, %v3762
    %v3856 = vadd.f32 %v3542, %v3764
    %v3857 = vadd.f32 %v3543, %v3767
    %v3858 = vadd.f32 %v3544, %v3769
    %v3859 = vadd.f32 %v3545, %v3772
    %v3860 = vadd.f32 %v3546, %v3774
    %v3861 = vadd.f32 %v3547, %v3777
    %v3862 = vadd.f32 %v3548, %v3779
    %v3863 = vadd.f32 %v3549, %v3782
    %v3864 = vadd.f32 %v3550, %v3784
    %v3865 = vadd.f32 %v3551, %v3787
    %v3866 = vadd.f32 %v3552, %v3789
    %v3867 = vadd.f32 %v3553, %v3792
    %v3868 = vadd.f32 %v3554, %v3794
    %v3869 = vadd.f32 %v3555, %v3797
    %v3870 = vadd.f32 %v3556, %v3799
    %v3871 = vadd.f32 %v3557, %v3802
    %v3872 = vadd.f32 %v3558, %v3804
    %v3873 = vadd.f32 %v3559, %v3807
    %v3874 = vadd.f32 %v3560, %v3809
    %v3875 = vpack.c.bf16 %v1478, %v1477
    %v3876 = vpack.c.bf16 %v1532, %v1531
    %s3877 = scalar_lea.vmem [#allocation8], 384
    %v3878 = vld [vmem:[%s3877] sm:$0xf]
    %v3879 = vld [vmem:[%s3877 + $0x4] sm:$0xf]
    %v3880 = vld [vmem:[%s3877 + $0x8] sm:$0xf]
    %v3881 = vld [vmem:[%s3877 + $0xc] sm:$0xf]
    %v3882 = vld [vmem:[%s3877 + $0x10] sm:$0xf]
    %v3883 = vld [vmem:[%s3877 + $0x14] sm:$0xf]
    %v3884 = vld [vmem:[%s3877 + $0x18] sm:$0xf]
    %v3885 = vld [vmem:[%s3877 + $0x1c] sm:$0xf]
    %v3886 = vld [vmem:[%s3877 + $0x20] sm:$0xf]
    %v3887 = vld [vmem:[%s3877 + $0x24] sm:$0xf]
    %v3888 = vld [vmem:[%s3877 + $0x28] sm:$0xf]
    %v3889 = vld [vmem:[%s3877 + $0x2c] sm:$0xf]
    %v3890 = vld [vmem:[%s3877 + $0x30] sm:$0xf]
    %v3891 = vld [vmem:[%s3877 + $0x34] sm:$0xf]
    %v3892 = vld [vmem:[%s3877 + $0x38] sm:$0xf]
    %v3893 = vld [vmem:[%s3877 + $0x3c] sm:$0xf]
    %v3910 = vunpack.c.l.b16 %v3878
    %v3911 = vunpack.c.l.b16 %v3879
    %v3912 = vunpack.c.l.b16 %v3880
    %v3913 = vunpack.c.l.b16 %v3881
    %v3914 = vunpack.c.l.b16 %v3882
    %v3915 = vunpack.c.l.b16 %v3883
    %v3916 = vunpack.c.l.b16 %v3884
    %v3917 = vunpack.c.l.b16 %v3885
    %v3918 = vunpack.c.l.b16 %v3886
    %v3919 = vunpack.c.l.b16 %v3887
    %v3920 = vunpack.c.l.b16 %v3888
    %v3921 = vunpack.c.l.b16 %v3889
    %v3922 = vunpack.c.l.b16 %v3890
    %v3923 = vunpack.c.l.b16 %v3891
    %v3924 = vunpack.c.l.b16 %v3892
    %v3925 = vunpack.c.l.b16 %v3893
    %v3926 = vpack.c.b16 %v3911, %v3910
    %v3927 = vpack.c.b16 %v3913, %v3912
    %v3928 = vpack.c.b16 %v3915, %v3914
    %v3929 = vpack.c.b16 %v3917, %v3916
    %v3930 = vpack.c.b16 %v3919, %v3918
    %v3931 = vpack.c.b16 %v3921, %v3920
    %v3932 = vpack.c.b16 %v3923, %v3922
    %v3933 = vpack.c.b16 %v3925, %v3924
    %3942 = vmatpush.bf16.msra.mxu0 %v3933
    %3943 = vmatpush.bf16.msra.mxu0 %v3932
    %3944 = vmatpush.bf16.msra.mxu0 %v3931
    %3945 = vmatpush.bf16.msra.mxu0 %v3930
    %3946 = vmatpush.bf16.msra.mxu0 %v3929
    %3947 = vmatpush.bf16.msra.mxu0 %v3928
    %3948 = vmatpush.bf16.msra.mxu0 %v3927
    %3949 = vmatpush.bf16.msra.mxu0 %v3926
    %3950 = vmatmul.bf16.gmra.mxu0 %v1536
    %v3951 = vpop.f32.mrf.mxu0
    %v3952 = vadd.f32 0.0, %v3951
    %v3953 = vpop.f32.mrf.mxu0
    %v3954 = vadd.f32 0.0, %v3953
    %3955 = vmatmul.bf16.gmra.mxu0 %v1537
    %v3956 = vpop.f32.mrf.mxu0
    %v3957 = vadd.f32 0.0, %v3956
    %v3958 = vpop.f32.mrf.mxu0
    %v3959 = vadd.f32 0.0, %v3958
    %3960 = vmatmul.bf16.gmra.mxu0 %v1538
    %v3961 = vpop.f32.mrf.mxu0
    %v3962 = vadd.f32 0.0, %v3961
    %v3963 = vpop.f32.mrf.mxu0
    %v3964 = vadd.f32 0.0, %v3963
    %3965 = vmatmul.bf16.gmra.mxu0 %v1539
    %v3966 = vpop.f32.mrf.mxu0
    %v3967 = vadd.f32 0.0, %v3966
    %v3968 = vpop.f32.mrf.mxu0
    %v3969 = vadd.f32 0.0, %v3968
    %3970 = vmatmul.bf16.gmra.mxu0 %v1540
    %v3971 = vpop.f32.mrf.mxu0
    %v3972 = vadd.f32 0.0, %v3971
    %v3973 = vpop.f32.mrf.mxu0
    %v3974 = vadd.f32 0.0, %v3973
    %3975 = vmatmul.bf16.gmra.mxu0 %v1541
    %v3976 = vpop.f32.mrf.mxu0
    %v3977 = vadd.f32 0.0, %v3976
    %v3978 = vpop.f32.mrf.mxu0
    %v3979 = vadd.f32 0.0, %v3978
    %3980 = vmatmul.bf16.gmra.mxu0 %v1542
    %v3981 = vpop.f32.mrf.mxu0
    %v3982 = vadd.f32 0.0, %v3981
    %v3983 = vpop.f32.mrf.mxu0
    %v3984 = vadd.f32 0.0, %v3983
    %3985 = vmatmul.bf16.gmra.mxu0 %v1543
    %v3986 = vpop.f32.mrf.mxu0
    %v3987 = vadd.f32 0.0, %v3986
    %v3988 = vpop.f32.mrf.mxu0
    %v3989 = vadd.f32 0.0, %v3988
    %3990 = vmatmul.bf16.gmra.mxu0 %v1544
    %v3991 = vpop.f32.mrf.mxu0
    %v3992 = vadd.f32 0.0, %v3991
    %v3993 = vpop.f32.mrf.mxu0
    %v3994 = vadd.f32 0.0, %v3993
    %3995 = vmatmul.bf16.gmra.mxu0 %v1545
    %v3996 = vpop.f32.mrf.mxu0
    %v3997 = vadd.f32 0.0, %v3996
    %v3998 = vpop.f32.mrf.mxu0
    %v3999 = vadd.f32 0.0, %v3998
    %4000 = vmatmul.bf16.gmra.mxu0 %v1546
    %v4001 = vpop.f32.mrf.mxu0
    %v4002 = vadd.f32 0.0, %v4001
    %v4003 = vpop.f32.mrf.mxu0
    %v4004 = vadd.f32 0.0, %v4003
    %4005 = vmatmul.bf16.gmra.mxu0 %v1547
    %v4006 = vpop.f32.mrf.mxu0
    %v4007 = vadd.f32 0.0, %v4006
    %v4008 = vpop.f32.mrf.mxu0
    %v4009 = vadd.f32 0.0, %v4008
    %4010 = vmatmul.bf16.gmra.mxu0 %v1548
    %v4011 = vpop.f32.mrf.mxu0
    %v4012 = vadd.f32 0.0, %v4011
    %v4013 = vpop.f32.mrf.mxu0
    %v4014 = vadd.f32 0.0, %v4013
    %4015 = vmatmul.bf16.gmra.mxu0 %v1549
    %v4016 = vpop.f32.mrf.mxu0
    %v4017 = vadd.f32 0.0, %v4016
    %v4018 = vpop.f32.mrf.mxu0
    %v4019 = vadd.f32 0.0, %v4018
    %4020 = vmatmul.bf16.gmra.mxu0 %v2941
    %v4021 = vpop.f32.mrf.mxu0
    %v4022 = vadd.f32 0.0, %v4021
    %v4023 = vpop.f32.mrf.mxu0
    %v4024 = vadd.f32 0.0, %v4023
    %4025 = vmatmul.bf16.gmra.mxu0 %v3875
    %v4026 = vpop.f32.mrf.mxu0
    %v4027 = vadd.f32 0.0, %v4026
    %v4028 = vpop.f32.mrf.mxu0
    %v4029 = vadd.f32 0.0, %v4028
    %4030 = vmatmul.bf16.gmra.mxu0 %v1552
    %v4031 = vpop.f32.mrf.mxu0
    %v4032 = vadd.f32 0.0, %v4031
    %v4033 = vpop.f32.mrf.mxu0
    %v4034 = vadd.f32 0.0, %v4033
    %4035 = vmatmul.bf16.gmra.mxu0 %v1553
    %v4036 = vpop.f32.mrf.mxu0
    %v4037 = vadd.f32 0.0, %v4036
    %v4038 = vpop.f32.mrf.mxu0
    %v4039 = vadd.f32 0.0, %v4038
    %4040 = vmatmul.bf16.gmra.mxu0 %v1554
    %v4041 = vpop.f32.mrf.mxu0
    %v4042 = vadd.f32 0.0, %v4041
    %v4043 = vpop.f32.mrf.mxu0
    %v4044 = vadd.f32 0.0, %v4043
    %4045 = vmatmul.bf16.gmra.mxu0 %v1555
    %v4046 = vpop.f32.mrf.mxu0
    %v4047 = vadd.f32 0.0, %v4046
    %v4048 = vpop.f32.mrf.mxu0
    %v4049 = vadd.f32 0.0, %v4048
    %4050 = vmatmul.bf16.gmra.mxu0 %v1556
    %v4051 = vpop.f32.mrf.mxu0
    %v4052 = vadd.f32 0.0, %v4051
    %v4053 = vpop.f32.mrf.mxu0
    %v4054 = vadd.f32 0.0, %v4053
    %4055 = vmatmul.bf16.gmra.mxu0 %v1557
    %v4056 = vpop.f32.mrf.mxu0
    %v4057 = vadd.f32 0.0, %v4056
    %v4058 = vpop.f32.mrf.mxu0
    %v4059 = vadd.f32 0.0, %v4058
    %4060 = vmatmul.bf16.gmra.mxu0 %v1558
    %v4061 = vpop.f32.mrf.mxu0
    %v4062 = vadd.f32 0.0, %v4061
    %v4063 = vpop.f32.mrf.mxu0
    %v4064 = vadd.f32 0.0, %v4063
    %4065 = vmatmul.bf16.gmra.mxu0 %v1559
    %v4066 = vpop.f32.mrf.mxu0
    %v4067 = vadd.f32 0.0, %v4066
    %v4068 = vpop.f32.mrf.mxu0
    %v4069 = vadd.f32 0.0, %v4068
    %4070 = vmatmul.bf16.gmra.mxu0 %v1560
    %v4071 = vpop.f32.mrf.mxu0
    %v4072 = vadd.f32 0.0, %v4071
    %v4073 = vpop.f32.mrf.mxu0
    %v4074 = vadd.f32 0.0, %v4073
    %4075 = vmatmul.bf16.gmra.mxu0 %v1561
    %v4076 = vpop.f32.mrf.mxu0
    %v4077 = vadd.f32 0.0, %v4076
    %v4078 = vpop.f32.mrf.mxu0
    %v4079 = vadd.f32 0.0, %v4078
    %4080 = vmatmul.bf16.gmra.mxu0 %v1562
    %v4081 = vpop.f32.mrf.mxu0
    %v4082 = vadd.f32 0.0, %v4081
    %v4083 = vpop.f32.mrf.mxu0
    %v4084 = vadd.f32 0.0, %v4083
    %4085 = vmatmul.bf16.gmra.mxu0 %v1563
    %v4086 = vpop.f32.mrf.mxu0
    %v4087 = vadd.f32 0.0, %v4086
    %v4088 = vpop.f32.mrf.mxu0
    %v4089 = vadd.f32 0.0, %v4088
    %4090 = vmatmul.bf16.gmra.mxu0 %v1564
    %v4091 = vpop.f32.mrf.mxu0
    %v4092 = vadd.f32 0.0, %v4091
    %v4093 = vpop.f32.mrf.mxu0
    %v4094 = vadd.f32 0.0, %v4093
    %4095 = vmatmul.bf16.gmra.mxu0 %v1565
    %v4096 = vpop.f32.mrf.mxu0
    %v4097 = vadd.f32 0.0, %v4096
    %v4098 = vpop.f32.mrf.mxu0
    %v4099 = vadd.f32 0.0, %v4098
    %4100 = vmatmul.bf16.gmra.mxu0 %v2942
    %v4101 = vpop.f32.mrf.mxu0
    %v4102 = vadd.f32 0.0, %v4101
    %v4103 = vpop.f32.mrf.mxu0
    %v4104 = vadd.f32 0.0, %v4103
    %4105 = vmatmul.bf16.gmra.mxu0 %v3876
    %v4106 = vpop.f32.mrf.mxu0
    %v4107 = vadd.f32 0.0, %v4106
    %v4108 = vpop.f32.mrf.mxu0
    %v4109 = vadd.f32 0.0, %v4108
    %4110 = vdwg.mxu0
    %v4111 = vadd.f32 %v3811, %v3952
    %v4112 = vadd.f32 %v3812, %v3954
    %v4113 = vadd.f32 %v3813, %v3957
    %v4114 = vadd.f32 %v3814, %v3959
    %v4115 = vadd.f32 %v3815, %v3962
    %v4116 = vadd.f32 %v3816, %v3964
    %v4117 = vadd.f32 %v3817, %v3967
    %v4118 = vadd.f32 %v3818, %v3969
    %v4119 = vadd.f32 %v3819, %v3972
    %v4120 = vadd.f32 %v3820, %v3974
    %v4121 = vadd.f32 %v3821, %v3977
    %v4122 = vadd.f32 %v3822, %v3979
    %v4123 = vadd.f32 %v3823, %v3982
    %v4124 = vadd.f32 %v3824, %v3984
    %v4125 = vadd.f32 %v3825, %v3987
    %v4126 = vadd.f32 %v3826, %v3989
    %v4127 = vadd.f32 %v3827, %v3992
    %v4128 = vadd.f32 %v3828, %v3994
    %v4129 = vadd.f32 %v3829, %v3997
    %v4130 = vadd.f32 %v3830, %v3999
    %v4131 = vadd.f32 %v3831, %v4002
    %v4132 = vadd.f32 %v3832, %v4004
    %v4133 = vadd.f32 %v3833, %v4007
    %v4134 = vadd.f32 %v3834, %v4009
    %v4135 = vadd.f32 %v3835, %v4012
    %v4136 = vadd.f32 %v3836, %v4014
    %v4137 = vadd.f32 %v3837, %v4017
    %v4138 = vadd.f32 %v3838, %v4019
    %v4139 = vadd.f32 %v3839, %v4022
    %v4140 = vadd.f32 %v3840, %v4024
    %v4141 = vadd.f32 %v3841, %v4027
    %v4142 = vadd.f32 %v3842, %v4029
    %v4143 = vadd.f32 %v3843, %v4032
    %v4144 = vadd.f32 %v3844, %v4034
    %v4145 = vadd.f32 %v3845, %v4037
    %v4146 = vadd.f32 %v3846, %v4039
    %v4147 = vadd.f32 %v3847, %v4042
    %v4148 = vadd.f32 %v3848, %v4044
    %v4149 = vadd.f32 %v3849, %v4047
    %v4150 = vadd.f32 %v3850, %v4049
    %v4151 = vadd.f32 %v3851, %v4052
    %v4152 = vadd.f32 %v3852, %v4054
    %v4153 = vadd.f32 %v3853, %v4057
    %v4154 = vadd.f32 %v3854, %v4059
    %v4155 = vadd.f32 %v3855, %v4062
    %v4156 = vadd.f32 %v3856, %v4064
    %v4157 = vadd.f32 %v3857, %v4067
    %v4158 = vadd.f32 %v3858, %v4069
    %v4159 = vadd.f32 %v3859, %v4072
    %v4160 = vadd.f32 %v3860, %v4074
    %v4161 = vadd.f32 %v3861, %v4077
    %v4162 = vadd.f32 %v3862, %v4079
    %v4163 = vadd.f32 %v3863, %v4082
    %v4164 = vadd.f32 %v3864, %v4084
    %v4165 = vadd.f32 %v3865, %v4087
    %v4166 = vadd.f32 %v3866, %v4089
    %v4167 = vadd.f32 %v3867, %v4092
    %v4168 = vadd.f32 %v3868, %v4094
    %v4169 = vadd.f32 %v3869, %v4097
    %v4170 = vadd.f32 %v3870, %v4099
    %v4171 = vadd.f32 %v3871, %v4102
    %v4172 = vadd.f32 %v3872, %v4104
    %v4173 = vadd.f32 %v3873, %v4107
    %v4174 = vadd.f32 %v3874, %v4109
    %v4181 = vrot.slane %v1477, 1
    %v4182 = vrot.slane %v1478, 1
    %v4183 = vsel %vm1678, %v4181, %v4182
    %v4184 = vrot.slane %v1479, 1
    %v4185 = vsel %vm1678, %v4182, %v4184
    %v4186 = vrot.slane %v1531, 1
    %v4187 = vrot.slane %v1532, 1
    %v4188 = vsel %vm1678, %v4186, %v4187
    %v4189 = vrot.slane %v1533, 1
    %v4190 = vsel %vm1678, %v4187, %v4189
    %v4195 = vpack.c.bf16 %v4185, %v4183
    %v4196 = vpack.c.bf16 %v4190, %v4188
    %s4197 = scalar_lea.vmem [#allocation8], 448
    %v4198 = vld [vmem:[%s4197] sm:$0xf]
    %v4199 = vld [vmem:[%s4197 + $0x4] sm:$0xf]
    %v4200 = vld [vmem:[%s4197 + $0x8] sm:$0xf]
    %v4201 = vld [vmem:[%s4197 + $0xc] sm:$0xf]
    %v4202 = vld [vmem:[%s4197 + $0x10] sm:$0xf]
    %v4203 = vld [vmem:[%s4197 + $0x14] sm:$0xf]
    %v4204 = vld [vmem:[%s4197 + $0x18] sm:$0xf]
    %v4205 = vld [vmem:[%s4197 + $0x1c] sm:$0xf]
    %v4206 = vld [vmem:[%s4197 + $0x20] sm:$0xf]
    %v4207 = vld [vmem:[%s4197 + $0x24] sm:$0xf]
    %v4208 = vld [vmem:[%s4197 + $0x28] sm:$0xf]
    %v4209 = vld [vmem:[%s4197 + $0x2c] sm:$0xf]
    %v4210 = vld [vmem:[%s4197 + $0x30] sm:$0xf]
    %v4211 = vld [vmem:[%s4197 + $0x34] sm:$0xf]
    %v4212 = vld [vmem:[%s4197 + $0x38] sm:$0xf]
    %v4213 = vld [vmem:[%s4197 + $0x3c] sm:$0xf]
    %v4230 = vunpack.c.l.b16 %v4198
    %v4231 = vunpack.c.l.b16 %v4199
    %v4232 = vunpack.c.l.b16 %v4200
    %v4233 = vunpack.c.l.b16 %v4201
    %v4234 = vunpack.c.l.b16 %v4202
    %v4235 = vunpack.c.l.b16 %v4203
    %v4236 = vunpack.c.l.b16 %v4204
    %v4237 = vunpack.c.l.b16 %v4205
    %v4238 = vunpack.c.l.b16 %v4206
    %v4239 = vunpack.c.l.b16 %v4207
    %v4240 = vunpack.c.l.b16 %v4208
    %v4241 = vunpack.c.l.b16 %v4209
    %v4242 = vunpack.c.l.b16 %v4210
    %v4243 = vunpack.c.l.b16 %v4211
    %v4244 = vunpack.c.l.b16 %v4212
    %v4245 = vunpack.c.l.b16 %v4213
    %v4246 = vpack.c.b16 %v4231, %v4230
    %v4247 = vpack.c.b16 %v4233, %v4232
    %v4248 = vpack.c.b16 %v4235, %v4234
    %v4249 = vpack.c.b16 %v4237, %v4236
    %v4250 = vpack.c.b16 %v4239, %v4238
    %v4251 = vpack.c.b16 %v4241, %v4240
    %v4252 = vpack.c.b16 %v4243, %v4242
    %v4253 = vpack.c.b16 %v4245, %v4244
    %4262 = vmatpush.bf16.msra.mxu0 %v4253
    %4263 = vmatpush.bf16.msra.mxu0 %v4252
    %4264 = vmatpush.bf16.msra.mxu0 %v4251
    %4265 = vmatpush.bf16.msra.mxu0 %v4250
    %4266 = vmatpush.bf16.msra.mxu0 %v4249
    %4267 = vmatpush.bf16.msra.mxu0 %v4248
    %4268 = vmatpush.bf16.msra.mxu0 %v4247
    %4269 = vmatpush.bf16.msra.mxu0 %v4246
    %4270 = vmatmul.bf16.gmra.mxu0 %v1905
    %v4271 = vpop.f32.mrf.mxu0
    %v4272 = vadd.f32 0.0, %v4271
    %v4273 = vpop.f32.mrf.mxu0
    %v4274 = vadd.f32 0.0, %v4273
    %4275 = vmatmul.bf16.gmra.mxu0 %v1906
    %v4276 = vpop.f32.mrf.mxu0
    %v4277 = vadd.f32 0.0, %v4276
    %v4278 = vpop.f32.mrf.mxu0
    %v4279 = vadd.f32 0.0, %v4278
    %4280 = vmatmul.bf16.gmra.mxu0 %v1907
    %v4281 = vpop.f32.mrf.mxu0
    %v4282 = vadd.f32 0.0, %v4281
    %v4283 = vpop.f32.mrf.mxu0
    %v4284 = vadd.f32 0.0, %v4283
    %4285 = vmatmul.bf16.gmra.mxu0 %v1908
    %v4286 = vpop.f32.mrf.mxu0
    %v4287 = vadd.f32 0.0, %v4286
    %v4288 = vpop.f32.mrf.mxu0
    %v4289 = vadd.f32 0.0, %v4288
    %4290 = vmatmul.bf16.gmra.mxu0 %v1909
    %v4291 = vpop.f32.mrf.mxu0
    %v4292 = vadd.f32 0.0, %v4291
    %v4293 = vpop.f32.mrf.mxu0
    %v4294 = vadd.f32 0.0, %v4293
    %4295 = vmatmul.bf16.gmra.mxu0 %v1910
    %v4296 = vpop.f32.mrf.mxu0
    %v4297 = vadd.f32 0.0, %v4296
    %v4298 = vpop.f32.mrf.mxu0
    %v4299 = vadd.f32 0.0, %v4298
    %4300 = vmatmul.bf16.gmra.mxu0 %v1911
    %v4301 = vpop.f32.mrf.mxu0
    %v4302 = vadd.f32 0.0, %v4301
    %v4303 = vpop.f32.mrf.mxu0
    %v4304 = vadd.f32 0.0, %v4303
    %4305 = vmatmul.bf16.gmra.mxu0 %v1912
    %v4306 = vpop.f32.mrf.mxu0
    %v4307 = vadd.f32 0.0, %v4306
    %v4308 = vpop.f32.mrf.mxu0
    %v4309 = vadd.f32 0.0, %v4308
    %4310 = vmatmul.bf16.gmra.mxu0 %v1913
    %v4311 = vpop.f32.mrf.mxu0
    %v4312 = vadd.f32 0.0, %v4311
    %v4313 = vpop.f32.mrf.mxu0
    %v4314 = vadd.f32 0.0, %v4313
    %4315 = vmatmul.bf16.gmra.mxu0 %v1914
    %v4316 = vpop.f32.mrf.mxu0
    %v4317 = vadd.f32 0.0, %v4316
    %v4318 = vpop.f32.mrf.mxu0
    %v4319 = vadd.f32 0.0, %v4318
    %4320 = vmatmul.bf16.gmra.mxu0 %v1915
    %v4321 = vpop.f32.mrf.mxu0
    %v4322 = vadd.f32 0.0, %v4321
    %v4323 = vpop.f32.mrf.mxu0
    %v4324 = vadd.f32 0.0, %v4323
    %4325 = vmatmul.bf16.gmra.mxu0 %v1916
    %v4326 = vpop.f32.mrf.mxu0
    %v4327 = vadd.f32 0.0, %v4326
    %v4328 = vpop.f32.mrf.mxu0
    %v4329 = vadd.f32 0.0, %v4328
    %4330 = vmatmul.bf16.gmra.mxu0 %v1917
    %v4331 = vpop.f32.mrf.mxu0
    %v4332 = vadd.f32 0.0, %v4331
    %v4333 = vpop.f32.mrf.mxu0
    %v4334 = vadd.f32 0.0, %v4333
    %4335 = vmatmul.bf16.gmra.mxu0 %v1918
    %v4336 = vpop.f32.mrf.mxu0
    %v4337 = vadd.f32 0.0, %v4336
    %v4338 = vpop.f32.mrf.mxu0
    %v4339 = vadd.f32 0.0, %v4338
    %4340 = vmatmul.bf16.gmra.mxu0 %v3261
    %v4341 = vpop.f32.mrf.mxu0
    %v4342 = vadd.f32 0.0, %v4341
    %v4343 = vpop.f32.mrf.mxu0
    %v4344 = vadd.f32 0.0, %v4343
    %4345 = vmatmul.bf16.gmra.mxu0 %v4195
    %v4346 = vpop.f32.mrf.mxu0
    %v4347 = vadd.f32 0.0, %v4346
    %v4348 = vpop.f32.mrf.mxu0
    %v4349 = vadd.f32 0.0, %v4348
    %4350 = vmatmul.bf16.gmra.mxu0 %v1921
    %v4351 = vpop.f32.mrf.mxu0
    %v4352 = vadd.f32 0.0, %v4351
    %v4353 = vpop.f32.mrf.mxu0
    %v4354 = vadd.f32 0.0, %v4353
    %4355 = vmatmul.bf16.gmra.mxu0 %v1922
    %v4356 = vpop.f32.mrf.mxu0
    %v4357 = vadd.f32 0.0, %v4356
    %v4358 = vpop.f32.mrf.mxu0
    %v4359 = vadd.f32 0.0, %v4358
    %4360 = vmatmul.bf16.gmra.mxu0 %v1923
    %v4361 = vpop.f32.mrf.mxu0
    %v4362 = vadd.f32 0.0, %v4361
    %v4363 = vpop.f32.mrf.mxu0
    %v4364 = vadd.f32 0.0, %v4363
    %4365 = vmatmul.bf16.gmra.mxu0 %v1924
    %v4366 = vpop.f32.mrf.mxu0
    %v4367 = vadd.f32 0.0, %v4366
    %v4368 = vpop.f32.mrf.mxu0
    %v4369 = vadd.f32 0.0, %v4368
    %4370 = vmatmul.bf16.gmra.mxu0 %v1925
    %v4371 = vpop.f32.mrf.mxu0
    %v4372 = vadd.f32 0.0, %v4371
    %v4373 = vpop.f32.mrf.mxu0
    %v4374 = vadd.f32 0.0, %v4373
    %4375 = vmatmul.bf16.gmra.mxu0 %v1926
    %v4376 = vpop.f32.mrf.mxu0
    %v4377 = vadd.f32 0.0, %v4376
    %v4378 = vpop.f32.mrf.mxu0
    %v4379 = vadd.f32 0.0, %v4378
    %4380 = vmatmul.bf16.gmra.mxu0 %v1927
    %v4381 = vpop.f32.mrf.mxu0
    %v4382 = vadd.f32 0.0, %v4381
    %v4383 = vpop.f32.mrf.mxu0
    %v4384 = vadd.f32 0.0, %v4383
    %4385 = vmatmul.bf16.gmra.mxu0 %v1928
    %v4386 = vpop.f32.mrf.mxu0
    %v4387 = vadd.f32 0.0, %v4386
    %v4388 = vpop.f32.mrf.mxu0
    %v4389 = vadd.f32 0.0, %v4388
    %4390 = vmatmul.bf16.gmra.mxu0 %v1929
    %v4391 = vpop.f32.mrf.mxu0
    %v4392 = vadd.f32 0.0, %v4391
    %v4393 = vpop.f32.mrf.mxu0
    %v4394 = vadd.f32 0.0, %v4393
    %4395 = vmatmul.bf16.gmra.mxu0 %v1930
    %v4396 = vpop.f32.mrf.mxu0
    %v4397 = vadd.f32 0.0, %v4396
    %v4398 = vpop.f32.mrf.mxu0
    %v4399 = vadd.f32 0.0, %v4398
    %4400 = vmatmul.bf16.gmra.mxu0 %v1931
    %v4401 = vpop.f32.mrf.mxu0
    %v4402 = vadd.f32 0.0, %v4401
    %v4403 = vpop.f32.mrf.mxu0
    %v4404 = vadd.f32 0.0, %v4403
    %4405 = vmatmul.bf16.gmra.mxu0 %v1932
    %v4406 = vpop.f32.mrf.mxu0
    %v4407 = vadd.f32 0.0, %v4406
    %v4408 = vpop.f32.mrf.mxu0
    %v4409 = vadd.f32 0.0, %v4408
    %4410 = vmatmul.bf16.gmra.mxu0 %v1933
    %v4411 = vpop.f32.mrf.mxu0
    %v4412 = vadd.f32 0.0, %v4411
    %v4413 = vpop.f32.mrf.mxu0
    %v4414 = vadd.f32 0.0, %v4413
    %4415 = vmatmul.bf16.gmra.mxu0 %v1934
    %v4416 = vpop.f32.mrf.mxu0
    %v4417 = vadd.f32 0.0, %v4416
    %v4418 = vpop.f32.mrf.mxu0
    %v4419 = vadd.f32 0.0, %v4418
    %4420 = vmatmul.bf16.gmra.mxu0 %v3262
    %v4421 = vpop.f32.mrf.mxu0
    %v4422 = vadd.f32 0.0, %v4421
    %v4423 = vpop.f32.mrf.mxu0
    %v4424 = vadd.f32 0.0, %v4423
    %4425 = vmatmul.bf16.gmra.mxu0 %v4196
    %v4426 = vpop.f32.mrf.mxu0
    %v4427 = vadd.f32 0.0, %v4426
    %v4428 = vpop.f32.mrf.mxu0
    %v4429 = vadd.f32 0.0, %v4428
    %4430 = vdwg.mxu0
    %v4431 = vadd.f32 %v4111, %v4272
    %v4432 = vadd.f32 %v4112, %v4274
    %v4433 = vadd.f32 %v4113, %v4277
    %v4434 = vadd.f32 %v4114, %v4279
    %v4435 = vadd.f32 %v4115, %v4282
    %v4436 = vadd.f32 %v4116, %v4284
    %v4437 = vadd.f32 %v4117, %v4287
    %v4438 = vadd.f32 %v4118, %v4289
    %v4439 = vadd.f32 %v4119, %v4292
    %v4440 = vadd.f32 %v4120, %v4294
    %v4441 = vadd.f32 %v4121, %v4297
    %v4442 = vadd.f32 %v4122, %v4299
    %v4443 = vadd.f32 %v4123, %v4302
    %v4444 = vadd.f32 %v4124, %v4304
    %v4445 = vadd.f32 %v4125, %v4307
    %v4446 = vadd.f32 %v4126, %v4309
    %v4447 = vadd.f32 %v4127, %v4312
    %v4448 = vadd.f32 %v4128, %v4314
    %v4449 = vadd.f32 %v4129, %v4317
    %v4450 = vadd.f32 %v4130, %v4319
    %v4451 = vadd.f32 %v4131, %v4322
    %v4452 = vadd.f32 %v4132, %v4324
    %v4453 = vadd.f32 %v4133, %v4327
    %v4454 = vadd.f32 %v4134, %v4329
    %v4455 = vadd.f32 %v4135, %v4332
    %v4456 = vadd.f32 %v4136, %v4334
    %v4457 = vadd.f32 %v4137, %v4337
    %v4458 = vadd.f32 %v4138, %v4339
    %v4459 = vadd.f32 %v4139, %v4342
    %v4460 = vadd.f32 %v4140, %v4344
    %v4461 = vadd.f32 %v4141, %v4347
    %v4462 = vadd.f32 %v4142, %v4349
    %v4463 = vadd.f32 %v4143, %v4352
    %v4464 = vadd.f32 %v4144, %v4354
    %v4465 = vadd.f32 %v4145, %v4357
    %v4466 = vadd.f32 %v4146, %v4359
    %v4467 = vadd.f32 %v4147, %v4362
    %v4468 = vadd.f32 %v4148, %v4364
    %v4469 = vadd.f32 %v4149, %v4367
    %v4470 = vadd.f32 %v4150, %v4369
    %v4471 = vadd.f32 %v4151, %v4372
    %v4472 = vadd.f32 %v4152, %v4374
    %v4473 = vadd.f32 %v4153, %v4377
    %v4474 = vadd.f32 %v4154, %v4379
    %v4475 = vadd.f32 %v4155, %v4382
    %v4476 = vadd.f32 %v4156, %v4384
    %v4477 = vadd.f32 %v4157, %v4387
    %v4478 = vadd.f32 %v4158, %v4389
    %v4479 = vadd.f32 %v4159, %v4392
    %v4480 = vadd.f32 %v4160, %v4394
    %v4481 = vadd.f32 %v4161, %v4397
    %v4482 = vadd.f32 %v4162, %v4399
    %v4483 = vadd.f32 %v4163, %v4402
    %v4484 = vadd.f32 %v4164, %v4404
    %v4485 = vadd.f32 %v4165, %v4407
    %v4486 = vadd.f32 %v4166, %v4409
    %v4487 = vadd.f32 %v4167, %v4412
    %v4488 = vadd.f32 %v4168, %v4414
    %v4489 = vadd.f32 %v4169, %v4417
    %v4490 = vadd.f32 %v4170, %v4419
    %v4491 = vadd.f32 %v4171, %v4422
    %v4492 = vadd.f32 %v4172, %v4424
    %v4493 = vadd.f32 %v4173, %v4427
    %v4494 = vadd.f32 %v4174, %v4429
    %v4495 = vrot.slane %v1477, 2
    %v4496 = vrot.slane %v1478, 2
    %v4497 = vsel %vm2386, %v4495, %v4496
    %v4498 = vrot.slane %v1479, 2
    %v4499 = vsel %vm2386, %v4496, %v4498
    %v4500 = vrot.slane %v1531, 2
    %v4501 = vrot.slane %v1532, 2
    %v4502 = vsel %vm2386, %v4500, %v4501
    %v4503 = vrot.slane %v1533, 2
    %v4504 = vsel %vm2386, %v4501, %v4503
    %v4509 = vpack.c.bf16 %v4499, %v4497
    %v4510 = vpack.c.bf16 %v4504, %v4502
    %s4511 = scalar_lea.vmem [#allocation8], 512
    %v4512 = vld [vmem:[%s4511] sm:$0xf]
    %v4513 = vld [vmem:[%s4511 + $0x4] sm:$0xf]
    %v4514 = vld [vmem:[%s4511 + $0x8] sm:$0xf]
    %v4515 = vld [vmem:[%s4511 + $0xc] sm:$0xf]
    %v4516 = vld [vmem:[%s4511 + $0x10] sm:$0xf]
    %v4517 = vld [vmem:[%s4511 + $0x14] sm:$0xf]
    %v4518 = vld [vmem:[%s4511 + $0x18] sm:$0xf]
    %v4519 = vld [vmem:[%s4511 + $0x1c] sm:$0xf]
    %v4520 = vld [vmem:[%s4511 + $0x20] sm:$0xf]
    %v4521 = vld [vmem:[%s4511 + $0x24] sm:$0xf]
    %v4522 = vld [vmem:[%s4511 + $0x28] sm:$0xf]
    %v4523 = vld [vmem:[%s4511 + $0x2c] sm:$0xf]
    %v4524 = vld [vmem:[%s4511 + $0x30] sm:$0xf]
    %v4525 = vld [vmem:[%s4511 + $0x34] sm:$0xf]
    %v4526 = vld [vmem:[%s4511 + $0x38] sm:$0xf]
    %v4527 = vld [vmem:[%s4511 + $0x3c] sm:$0xf]
    %v4544 = vunpack.c.l.b16 %v4512
    %v4545 = vunpack.c.l.b16 %v4513
    %v4546 = vunpack.c.l.b16 %v4514
    %v4547 = vunpack.c.l.b16 %v4515
    %v4548 = vunpack.c.l.b16 %v4516
    %v4549 = vunpack.c.l.b16 %v4517
    %v4550 = vunpack.c.l.b16 %v4518
    %v4551 = vunpack.c.l.b16 %v4519
    %v4552 = vunpack.c.l.b16 %v4520
    %v4553 = vunpack.c.l.b16 %v4521
    %v4554 = vunpack.c.l.b16 %v4522
    %v4555 = vunpack.c.l.b16 %v4523
    %v4556 = vunpack.c.l.b16 %v4524
    %v4557 = vunpack.c.l.b16 %v4525
    %v4558 = vunpack.c.l.b16 %v4526
    %v4559 = vunpack.c.l.b16 %v4527
    %v4560 = vpack.c.b16 %v4545, %v4544
    %v4561 = vpack.c.b16 %v4547, %v4546
    %v4562 = vpack.c.b16 %v4549, %v4548
    %v4563 = vpack.c.b16 %v4551, %v4550
    %v4564 = vpack.c.b16 %v4553, %v4552
    %v4565 = vpack.c.b16 %v4555, %v4554
    %v4566 = vpack.c.b16 %v4557, %v4556
    %v4567 = vpack.c.b16 %v4559, %v4558
    %4576 = vmatpush.bf16.msra.mxu0 %v4567
    %4577 = vmatpush.bf16.msra.mxu0 %v4566
    %4578 = vmatpush.bf16.msra.mxu0 %v4565
    %4579 = vmatpush.bf16.msra.mxu0 %v4564
    %4580 = vmatpush.bf16.msra.mxu0 %v4563
    %4581 = vmatpush.bf16.msra.mxu0 %v4562
    %4582 = vmatpush.bf16.msra.mxu0 %v4561
    %4583 = vmatpush.bf16.msra.mxu0 %v4560
    %4584 = vmatmul.bf16.gmra.mxu0 %v2613
    %v4585 = vpop.f32.mrf.mxu0
    %v4586 = vadd.f32 0.0, %v4585
    %v4587 = vpop.f32.mrf.mxu0
    %v4588 = vadd.f32 0.0, %v4587
    %4589 = vmatmul.bf16.gmra.mxu0 %v2614
    %v4590 = vpop.f32.mrf.mxu0
    %v4591 = vadd.f32 0.0, %v4590
    %v4592 = vpop.f32.mrf.mxu0
    %v4593 = vadd.f32 0.0, %v4592
    %4594 = vmatmul.bf16.gmra.mxu0 %v2615
    %v4595 = vpop.f32.mrf.mxu0
    %v4596 = vadd.f32 0.0, %v4595
    %v4597 = vpop.f32.mrf.mxu0
    %v4598 = vadd.f32 0.0, %v4597
    %4599 = vmatmul.bf16.gmra.mxu0 %v2616
    %v4600 = vpop.f32.mrf.mxu0
    %v4601 = vadd.f32 0.0, %v4600
    %v4602 = vpop.f32.mrf.mxu0
    %v4603 = vadd.f32 0.0, %v4602
    %4604 = vmatmul.bf16.gmra.mxu0 %v2617
    %v4605 = vpop.f32.mrf.mxu0
    %v4606 = vadd.f32 0.0, %v4605
    %v4607 = vpop.f32.mrf.mxu0
    %v4608 = vadd.f32 0.0, %v4607
    %4609 = vmatmul.bf16.gmra.mxu0 %v2618
    %v4610 = vpop.f32.mrf.mxu0
    %v4611 = vadd.f32 0.0, %v4610
    %v4612 = vpop.f32.mrf.mxu0
    %v4613 = vadd.f32 0.0, %v4612
    %4614 = vmatmul.bf16.gmra.mxu0 %v2619
    %v4615 = vpop.f32.mrf.mxu0
    %v4616 = vadd.f32 0.0, %v4615
    %v4617 = vpop.f32.mrf.mxu0
    %v4618 = vadd.f32 0.0, %v4617
    %4619 = vmatmul.bf16.gmra.mxu0 %v2620
    %v4620 = vpop.f32.mrf.mxu0
    %v4621 = vadd.f32 0.0, %v4620
    %v4622 = vpop.f32.mrf.mxu0
    %v4623 = vadd.f32 0.0, %v4622
    %4624 = vmatmul.bf16.gmra.mxu0 %v2621
    %v4625 = vpop.f32.mrf.mxu0
    %v4626 = vadd.f32 0.0, %v4625
    %v4627 = vpop.f32.mrf.mxu0
    %v4628 = vadd.f32 0.0, %v4627
    %4629 = vmatmul.bf16.gmra.mxu0 %v2622
    %v4630 = vpop.f32.mrf.mxu0
    %v4631 = vadd.f32 0.0, %v4630
    %v4632 = vpop.f32.mrf.mxu0
    %v4633 = vadd.f32 0.0, %v4632
    %4634 = vmatmul.bf16.gmra.mxu0 %v2623
    %v4635 = vpop.f32.mrf.mxu0
    %v4636 = vadd.f32 0.0, %v4635
    %v4637 = vpop.f32.mrf.mxu0
    %v4638 = vadd.f32 0.0, %v4637
    %4639 = vmatmul.bf16.gmra.mxu0 %v2624
    %v4640 = vpop.f32.mrf.mxu0
    %v4641 = vadd.f32 0.0, %v4640
    %v4642 = vpop.f32.mrf.mxu0
    %v4643 = vadd.f32 0.0, %v4642
    %4644 = vmatmul.bf16.gmra.mxu0 %v2625
    %v4645 = vpop.f32.mrf.mxu0
    %v4646 = vadd.f32 0.0, %v4645
    %v4647 = vpop.f32.mrf.mxu0
    %v4648 = vadd.f32 0.0, %v4647
    %4649 = vmatmul.bf16.gmra.mxu0 %v2626
    %v4650 = vpop.f32.mrf.mxu0
    %v4651 = vadd.f32 0.0, %v4650
    %v4652 = vpop.f32.mrf.mxu0
    %v4653 = vadd.f32 0.0, %v4652
    %4654 = vmatmul.bf16.gmra.mxu0 %v3575
    %v4655 = vpop.f32.mrf.mxu0
    %v4656 = vadd.f32 0.0, %v4655
    %v4657 = vpop.f32.mrf.mxu0
    %v4658 = vadd.f32 0.0, %v4657
    %4659 = vmatmul.bf16.gmra.mxu0 %v4509
    %v4660 = vpop.f32.mrf.mxu0
    %v4661 = vadd.f32 0.0, %v4660
    %v4662 = vpop.f32.mrf.mxu0
    %v4663 = vadd.f32 0.0, %v4662
    %4664 = vmatmul.bf16.gmra.mxu0 %v2629
    %v4665 = vpop.f32.mrf.mxu0
    %v4666 = vadd.f32 0.0, %v4665
    %v4667 = vpop.f32.mrf.mxu0
    %v4668 = vadd.f32 0.0, %v4667
    %4669 = vmatmul.bf16.gmra.mxu0 %v2630
    %v4670 = vpop.f32.mrf.mxu0
    %v4671 = vadd.f32 0.0, %v4670
    %v4672 = vpop.f32.mrf.mxu0
    %v4673 = vadd.f32 0.0, %v4672
    %4674 = vmatmul.bf16.gmra.mxu0 %v2631
    %v4675 = vpop.f32.mrf.mxu0
    %v4676 = vadd.f32 0.0, %v4675
    %v4677 = vpop.f32.mrf.mxu0
    %v4678 = vadd.f32 0.0, %v4677
    %4679 = vmatmul.bf16.gmra.mxu0 %v2632
    %v4680 = vpop.f32.mrf.mxu0
    %v4681 = vadd.f32 0.0, %v4680
    %v4682 = vpop.f32.mrf.mxu0
    %v4683 = vadd.f32 0.0, %v4682
    %4684 = vmatmul.bf16.gmra.mxu0 %v2633
    %v4685 = vpop.f32.mrf.mxu0
    %v4686 = vadd.f32 0.0, %v4685
    %v4687 = vpop.f32.mrf.mxu0
    %v4688 = vadd.f32 0.0, %v4687
    %4689 = vmatmul.bf16.gmra.mxu0 %v2634
    %v4690 = vpop.f32.mrf.mxu0
    %v4691 = vadd.f32 0.0, %v4690
    %v4692 = vpop.f32.mrf.mxu0
    %v4693 = vadd.f32 0.0, %v4692
    %4694 = vmatmul.bf16.gmra.mxu0 %v2635
    %v4695 = vpop.f32.mrf.mxu0
    %v4696 = vadd.f32 0.0, %v4695
    %v4697 = vpop.f32.mrf.mxu0
    %v4698 = vadd.f32 0.0, %v4697
    %4699 = vmatmul.bf16.gmra.mxu0 %v2636
    %v4700 = vpop.f32.mrf.mxu0
    %v4701 = vadd.f32 0.0, %v4700
    %v4702 = vpop.f32.mrf.mxu0
    %v4703 = vadd.f32 0.0, %v4702
    %4704 = vmatmul.bf16.gmra.mxu0 %v2637
    %v4705 = vpop.f32.mrf.mxu0
    %v4706 = vadd.f32 0.0, %v4705
    %v4707 = vpop.f32.mrf.mxu0
    %v4708 = vadd.f32 0.0, %v4707
    %4709 = vmatmul.bf16.gmra.mxu0 %v2638
    %v4710 = vpop.f32.mrf.mxu0
    %v4711 = vadd.f32 0.0, %v4710
    %v4712 = vpop.f32.mrf.mxu0
    %v4713 = vadd.f32 0.0, %v4712
    %4714 = vmatmul.bf16.gmra.mxu0 %v2639
    %v4715 = vpop.f32.mrf.mxu0
    %v4716 = vadd.f32 0.0, %v4715
    %v4717 = vpop.f32.mrf.mxu0
    %v4718 = vadd.f32 0.0, %v4717
    %4719 = vmatmul.bf16.gmra.mxu0 %v2640
    %v4720 = vpop.f32.mrf.mxu0
    %v4721 = vadd.f32 0.0, %v4720
    %v4722 = vpop.f32.mrf.mxu0
    %v4723 = vadd.f32 0.0, %v4722
    %4724 = vmatmul.bf16.gmra.mxu0 %v2641
    %v4725 = vpop.f32.mrf.mxu0
    %v4726 = vadd.f32 0.0, %v4725
    %v4727 = vpop.f32.mrf.mxu0
    %v4728 = vadd.f32 0.0, %v4727
    %4729 = vmatmul.bf16.gmra.mxu0 %v2642
    %v4730 = vpop.f32.mrf.mxu0
    %v4731 = vadd.f32 0.0, %v4730
    %v4732 = vpop.f32.mrf.mxu0
    %v4733 = vadd.f32 0.0, %v4732
    %4734 = vmatmul.bf16.gmra.mxu0 %v3576
    %v4735 = vpop.f32.mrf.mxu0
    %v4736 = vadd.f32 0.0, %v4735
    %v4737 = vpop.f32.mrf.mxu0
    %v4738 = vadd.f32 0.0, %v4737
    %4739 = vmatmul.bf16.gmra.mxu0 %v4510
    %v4740 = vpop.f32.mrf.mxu0
    %v4741 = vadd.f32 0.0, %v4740
    %v4742 = vpop.f32.mrf.mxu0
    %v4743 = vadd.f32 0.0, %v4742
    %4744 = vdwg.mxu0
    %v4745 = vadd.f32 %v4431, %v4586
    %v4746 = vadd.f32 %v4432, %v4588
    %v4747 = vadd.f32 %v4433, %v4591
    %v4748 = vadd.f32 %v4434, %v4593
    %v4749 = vadd.f32 %v4435, %v4596
    %v4750 = vadd.f32 %v4436, %v4598
    %v4751 = vadd.f32 %v4437, %v4601
    %v4752 = vadd.f32 %v4438, %v4603
    %v4753 = vadd.f32 %v4439, %v4606
    %v4754 = vadd.f32 %v4440, %v4608
    %v4755 = vadd.f32 %v4441, %v4611
    %v4756 = vadd.f32 %v4442, %v4613
    %v4757 = vadd.f32 %v4443, %v4616
    %v4758 = vadd.f32 %v4444, %v4618
    %v4759 = vadd.f32 %v4445, %v4621
    %v4760 = vadd.f32 %v4446, %v4623
    %v4761 = vadd.f32 %v4447, %v4626
    %v4762 = vadd.f32 %v4448, %v4628
    %v4763 = vadd.f32 %v4449, %v4631
    %v4764 = vadd.f32 %v4450, %v4633
    %v4765 = vadd.f32 %v4451, %v4636
    %v4766 = vadd.f32 %v4452, %v4638
    %v4767 = vadd.f32 %v4453, %v4641
    %v4768 = vadd.f32 %v4454, %v4643
    %v4769 = vadd.f32 %v4455, %v4646
    %v4770 = vadd.f32 %v4456, %v4648
    %v4771 = vadd.f32 %v4457, %v4651
    %v4772 = vadd.f32 %v4458, %v4653
    %v4773 = vadd.f32 %v4459, %v4656
    %v4774 = vadd.f32 %v4460, %v4658
    %v4775 = vadd.f32 %v4461, %v4661
    %v4776 = vadd.f32 %v4462, %v4663
    %v4777 = vadd.f32 %v4463, %v4666
    %v4778 = vadd.f32 %v4464, %v4668
    %v4779 = vadd.f32 %v4465, %v4671
    %v4780 = vadd.f32 %v4466, %v4673
    %v4781 = vadd.f32 %v4467, %v4676
    %v4782 = vadd.f32 %v4468, %v4678
    %v4783 = vadd.f32 %v4469, %v4681
    %v4784 = vadd.f32 %v4470, %v4683
    %v4785 = vadd.f32 %v4471, %v4686
    %v4786 = vadd.f32 %v4472, %v4688
    %v4787 = vadd.f32 %v4473, %v4691
    %v4788 = vadd.f32 %v4474, %v4693
    %v4789 = vadd.f32 %v4475, %v4696
    %v4790 = vadd.f32 %v4476, %v4698
    %v4791 = vadd.f32 %v4477, %v4701
    %v4792 = vadd.f32 %v4478, %v4703
    %v4793 = vadd.f32 %v4479, %v4706
    %v4794 = vadd.f32 %v4480, %v4708
    %v4795 = vadd.f32 %v4481, %v4711
    %v4796 = vadd.f32 %v4482, %v4713
    %v4797 = vadd.f32 %v4483, %v4716
    %v4798 = vadd.f32 %v4484, %v4718
    %v4799 = vadd.f32 %v4485, %v4721
    %v4800 = vadd.f32 %v4486, %v4723
    %v4801 = vadd.f32 %v4487, %v4726
    %v4802 = vadd.f32 %v4488, %v4728
    %v4803 = vadd.f32 %v4489, %v4731
    %v4804 = vadd.f32 %v4490, %v4733
    %v4805 = vadd.f32 %v4491, %v4736
    %v4806 = vadd.f32 %v4492, %v4738
    %v4807 = vadd.f32 %v4493, %v4741
    %v4808 = vadd.f32 %v4494, %v4743
    %v4809 = vadd.f32 %v4745, %v4746
    %v4810 = vadd.f32 %v4809, %v4747
    %v4811 = vadd.f32 %v4810, %v4748
    %v4812 = vadd.f32 %v4811, %v4749
    %v4813 = vadd.f32 %v4812, %v4750
    %v4814 = vadd.f32 %v4813, %v4751
    %v4815 = vadd.f32 %v4814, %v4752
    %v4816 = vadd.f32 %v4815, %v4753
    %v4817 = vadd.f32 %v4816, %v4754
    %v4818 = vadd.f32 %v4817, %v4755
    %v4819 = vadd.f32 %v4818, %v4756
    %v4820 = vadd.f32 %v4819, %v4757
    %v4821 = vadd.f32 %v4820, %v4758
    %v4822 = vadd.f32 %v4821, %v4759
    %v4823 = vadd.f32 %v4822, %v4760
    %v4824 = vadd.f32 %v4823, %v4761
    %v4825 = vadd.f32 %v4824, %v4762
    %v4826 = vadd.f32 %v4825, %v4763
    %v4827 = vadd.f32 %v4826, %v4764
    %v4828 = vadd.f32 %v4827, %v4765
    %v4829 = vadd.f32 %v4828, %v4766
    %v4830 = vadd.f32 %v4829, %v4767
    %v4831 = vadd.f32 %v4830, %v4768
    %v4832 = vadd.f32 %v4831, %v4769
    %v4833 = vadd.f32 %v4832, %v4770
    %v4834 = vadd.f32 %v4833, %v4771
    %v4835 = vadd.f32 %v4834, %v4772
    %v4836 = vadd.f32 %v4835, %v4773
    %v4837 = vadd.f32 %v4836, %v4774
    %v4838 = vadd.f32 %v4837, %v4775
    %v4839 = vadd.f32 %v4838, %v4776
    %v4840 = vadd.f32 %v4839, %v4777
    %v4841 = vadd.f32 %v4840, %v4778
    %v4842 = vadd.f32 %v4841, %v4779
    %v4843 = vadd.f32 %v4842, %v4780
    %v4844 = vadd.f32 %v4843, %v4781
    %v4845 = vadd.f32 %v4844, %v4782
    %v4846 = vadd.f32 %v4845, %v4783
    %v4847 = vadd.f32 %v4846, %v4784
    %v4848 = vadd.f32 %v4847, %v4785
    %v4849 = vadd.f32 %v4848, %v4786
    %v4850 = vadd.f32 %v4849, %v4787
    %v4851 = vadd.f32 %v4850, %v4788
    %v4852 = vadd.f32 %v4851, %v4789
    %v4853 = vadd.f32 %v4852, %v4790
    %v4854 = vadd.f32 %v4853, %v4791
    %v4855 = vadd.f32 %v4854, %v4792
    %v4856 = vadd.f32 %v4855, %v4793
    %v4857 = vadd.f32 %v4856, %v4794
    %v4858 = vadd.f32 %v4857, %v4795
    %v4859 = vadd.f32 %v4858, %v4796
    %v4860 = vadd.f32 %v4859, %v4797
    %v4861 = vadd.f32 %v4860, %v4798
    %v4862 = vadd.f32 %v4861, %v4799
    %v4863 = vadd.f32 %v4862, %v4800
    %v4864 = vadd.f32 %v4863, %v4801
    %v4865 = vadd.f32 %v4864, %v4802
    %v4866 = vadd.f32 %v4865, %v4803
    %v4867 = vadd.f32 %v4866, %v4804
    %v4868 = vadd.f32 %v4867, %v4805
    %v4869 = vadd.f32 %v4868, %v4806
    %v4870 = vadd.f32 %v4869, %v4807
    %v4871 = vadd.f32 %v4870, %v4808
    %v4872 = vrot.slane %v4871, 4
    %v4873 = vadd.f32 %v4871, %v4872
    %v4874 = vrot.slane %v4873, 2
    %v4875 = vadd.f32 %v4873, %v4874
    %v4876 = vrot.slane %v4875, 1
    %v4877 = vadd.f32 %v4875, %v4876
    %v4878 = vmul.f32 %v4877, 0.001953125
    %v4879 = vmul.f32 %v4745, %v4745
    %v4880 = vmul.f32 %v4746, %v4746
    %v4881 = vmul.f32 %v4747, %v4747
    %v4882 = vmul.f32 %v4748, %v4748
    %v4883 = vmul.f32 %v4749, %v4749
    %v4884 = vmul.f32 %v4750, %v4750
    %v4885 = vmul.f32 %v4751, %v4751
    %v4886 = vmul.f32 %v4752, %v4752
    %v4887 = vmul.f32 %v4753, %v4753
    %v4888 = vmul.f32 %v4754, %v4754
    %v4889 = vmul.f32 %v4755, %v4755
    %v4890 = vmul.f32 %v4756, %v4756
    %v4891 = vmul.f32 %v4757, %v4757
    %v4892 = vmul.f32 %v4758, %v4758
    %v4893 = vmul.f32 %v4759, %v4759
    %v4894 = vmul.f32 %v4760, %v4760
    %v4895 = vmul.f32 %v4761, %v4761
    %v4896 = vmul.f32 %v4762, %v4762
    %v4897 = vmul.f32 %v4763, %v4763
    %v4898 = vmul.f32 %v4764, %v4764
    %v4899 = vmul.f32 %v4765, %v4765
    %v4900 = vmul.f32 %v4766, %v4766
    %v4901 = vmul.f32 %v4767, %v4767
    %v4902 = vmul.f32 %v4768, %v4768
    %v4903 = vmul.f32 %v4769, %v4769
    %v4904 = vmul.f32 %v4770, %v4770
    %v4905 = vmul.f32 %v4771, %v4771
    %v4906 = vmul.f32 %v4772, %v4772
    %v4907 = vmul.f32 %v4773, %v4773
    %v4908 = vmul.f32 %v4774, %v4774
    %v4909 = vmul.f32 %v4775, %v4775
    %v4910 = vmul.f32 %v4776, %v4776
    %v4911 = vmul.f32 %v4777, %v4777
    %v4912 = vmul.f32 %v4778, %v4778
    %v4913 = vmul.f32 %v4779, %v4779
    %v4914 = vmul.f32 %v4780, %v4780
    %v4915 = vmul.f32 %v4781, %v4781
    %v4916 = vmul.f32 %v4782, %v4782
    %v4917 = vmul.f32 %v4783, %v4783
    %v4918 = vmul.f32 %v4784, %v4784
    %v4919 = vmul.f32 %v4785, %v4785
    %v4920 = vmul.f32 %v4786, %v4786
    %v4921 = vmul.f32 %v4787, %v4787
    %v4922 = vmul.f32 %v4788, %v4788
    %v4923 = vmul.f32 %v4789, %v4789
    %v4924 = vmul.f32 %v4790, %v4790
    %v4925 = vmul.f32 %v4791, %v4791
    %v4926 = vmul.f32 %v4792, %v4792
    %v4927 = vmul.f32 %v4793, %v4793
    %v4928 = vmul.f32 %v4794, %v4794
    %v4929 = vmul.f32 %v4795, %v4795
    %v4930 = vmul.f32 %v4796, %v4796
    %v4931 = vmul.f32 %v4797, %v4797
    %v4932 = vmul.f32 %v4798, %v4798
    %v4933 = vmul.f32 %v4799, %v4799
    %v4934 = vmul.f32 %v4800, %v4800
    %v4935 = vmul.f32 %v4801, %v4801
    %v4936 = vmul.f32 %v4802, %v4802
    %v4937 = vmul.f32 %v4803, %v4803
    %v4938 = vmul.f32 %v4804, %v4804
    %v4939 = vmul.f32 %v4805, %v4805
    %v4940 = vmul.f32 %v4806, %v4806
    %v4941 = vmul.f32 %v4807, %v4807
    %v4942 = vmul.f32 %v4808, %v4808
    %v4943 = vadd.f32 %v4879, %v4880
    %v4944 = vadd.f32 %v4943, %v4881
    %v4945 = vadd.f32 %v4944, %v4882
    %v4946 = vadd.f32 %v4945, %v4883
    %v4947 = vadd.f32 %v4946, %v4884
    %v4948 = vadd.f32 %v4947, %v4885
    %v4949 = vadd.f32 %v4948, %v4886
    %v4950 = vadd.f32 %v4949, %v4887
    %v4951 = vadd.f32 %v4950, %v4888
    %v4952 = vadd.f32 %v4951, %v4889
    %v4953 = vadd.f32 %v4952, %v4890
    %v4954 = vadd.f32 %v4953, %v4891
    %v4955 = vadd.f32 %v4954, %v4892
    %v4956 = vadd.f32 %v4955, %v4893
    %v4957 = vadd.f32 %v4956, %v4894
    %v4958 = vadd.f32 %v4957, %v4895
    %v4959 = vadd.f32 %v4958, %v4896
    %v4960 = vadd.f32 %v4959, %v4897
    %v4961 = vadd.f32 %v4960, %v4898
    %v4962 = vadd.f32 %v4961, %v4899
    %v4963 = vadd.f32 %v4962, %v4900
    %v4964 = vadd.f32 %v4963, %v4901
    %v4965 = vadd.f32 %v4964, %v4902
    %v4966 = vadd.f32 %v4965, %v4903
    %v4967 = vadd.f32 %v4966, %v4904
    %v4968 = vadd.f32 %v4967, %v4905
    %v4969 = vadd.f32 %v4968, %v4906
    %v4970 = vadd.f32 %v4969, %v4907
    %v4971 = vadd.f32 %v4970, %v4908
    %v4972 = vadd.f32 %v4971, %v4909
    %v4973 = vadd.f32 %v4972, %v4910
    %v4974 = vadd.f32 %v4973, %v4911
    %v4975 = vadd.f32 %v4974, %v4912
    %v4976 = vadd.f32 %v4975, %v4913
    %v4977 = vadd.f32 %v4976, %v4914
    %v4978 = vadd.f32 %v4977, %v4915
    %v4979 = vadd.f32 %v4978, %v4916
    %v4980 = vadd.f32 %v4979, %v4917
    %v4981 = vadd.f32 %v4980, %v4918
    %v4982 = vadd.f32 %v4981, %v4919
    %v4983 = vadd.f32 %v4982, %v4920
    %v4984 = vadd.f32 %v4983, %v4921
    %v4985 = vadd.f32 %v4984, %v4922
    %v4986 = vadd.f32 %v4985, %v4923
    %v4987 = vadd.f32 %v4986, %v4924
    %v4988 = vadd.f32 %v4987, %v4925
    %v4989 = vadd.f32 %v4988, %v4926
    %v4990 = vadd.f32 %v4989, %v4927
    %v4991 = vadd.f32 %v4990, %v4928
    %v4992 = vadd.f32 %v4991, %v4929
    %v4993 = vadd.f32 %v4992, %v4930
    %v4994 = vadd.f32 %v4993, %v4931
    %v4995 = vadd.f32 %v4994, %v4932
    %v4996 = vadd.f32 %v4995, %v4933
    %v4997 = vadd.f32 %v4996, %v4934
    %v4998 = vadd.f32 %v4997, %v4935
    %v4999 = vadd.f32 %v4998, %v4936
    %v5000 = vadd.f32 %v4999, %v4937
    %v5001 = vadd.f32 %v5000, %v4938
    %v5002 = vadd.f32 %v5001, %v4939
    %v5003 = vadd.f32 %v5002, %v4940
    %v5004 = vadd.f32 %v5003, %v4941
    %v5005 = vadd.f32 %v5004, %v4942
    %v5006 = vrot.slane %v5005, 4
    %v5007 = vadd.f32 %v5005, %v5006
    %v5008 = vrot.slane %v5007, 2
    %v5009 = vadd.f32 %v5007, %v5008
    %v5010 = vrot.slane %v5009, 1
    %v5011 = vadd.f32 %v5009, %v5010
    %v5012 = vmul.f32 %v5011, 0.001953125
    %v5013 = vmul.f32 %v4878, %v4878
    %v5014 = vsub.f32 %v5012, %v5013
    %v5015 = vmax.f32 %v5014, 0.0
    %v5016 = vadd.f32 %v5015, 1e-05
    %v5017 = vrsqrt.pop %v5016
    %v5018 = vmul.f32 %v5017, %v5016
    %v5019 = vmul.f32 %v5018, %v5017
    %v5020 = vmul.f32 0.5, %v5019
    %v5021 = vsub.f32 1.5, %v5020
    %v5022 = vmul.f32 %v5017, %v5021
    %vm5023 = vweird.f32 %v5016
    %vm5024 = vweird.f32 %v5017
    %vm5025 = vmor %vm5023, %vm5024
    %v5026 = vsel %vm5025, %v5017, %v5022
    %v5027 = vmul.f32 %v79, %v5026
    %v5028 = vmul.f32 %v5027, %v4878
    %v5030 = vrot.slane %v5028, 7
    %v5032 = vsub.f32 %v79, %v5030
    %v5033 = vperm.slane %v5027, 2
    %v5034 = vmul.f32 %v4745, %v5033
    %v5035 = vmul.f32 %v4746, %v5033
    %v5036 = vmul.f32 %v4747, %v5033
    %v5037 = vmul.f32 %v4748, %v5033
    %v5038 = vmul.f32 %v4749, %v5033
    %v5039 = vmul.f32 %v4750, %v5033
    %v5040 = vmul.f32 %v4751, %v5033
    %v5041 = vmul.f32 %v4752, %v5033
    %v5042 = vmul.f32 %v4753, %v5033
    %v5043 = vmul.f32 %v4754, %v5033
    %v5044 = vmul.f32 %v4755, %v5033
    %v5045 = vmul.f32 %v4756, %v5033
    %v5046 = vmul.f32 %v4757, %v5033
    %v5047 = vmul.f32 %v4758, %v5033
    %v5048 = vmul.f32 %v4759, %v5033
    %v5049 = vmul.f32 %v4760, %v5033
    %v5050 = vmul.f32 %v4761, %v5033
    %v5051 = vmul.f32 %v4762, %v5033
    %v5052 = vmul.f32 %v4763, %v5033
    %v5053 = vmul.f32 %v4764, %v5033
    %v5054 = vmul.f32 %v4765, %v5033
    %v5055 = vmul.f32 %v4766, %v5033
    %v5056 = vmul.f32 %v4767, %v5033
    %v5057 = vmul.f32 %v4768, %v5033
    %v5058 = vmul.f32 %v4769, %v5033
    %v5059 = vmul.f32 %v4770, %v5033
    %v5060 = vmul.f32 %v4771, %v5033
    %v5061 = vmul.f32 %v4772, %v5033
    %v5062 = vmul.f32 %v4773, %v5033
    %v5063 = vmul.f32 %v4774, %v5033
    %v5064 = vmul.f32 %v4775, %v5033
    %v5065 = vmul.f32 %v4776, %v5033
    %v5066 = vmul.f32 %v4777, %v5033
    %v5067 = vmul.f32 %v4778, %v5033
    %v5068 = vmul.f32 %v4779, %v5033
    %v5069 = vmul.f32 %v4780, %v5033
    %v5070 = vmul.f32 %v4781, %v5033
    %v5071 = vmul.f32 %v4782, %v5033
    %v5072 = vmul.f32 %v4783, %v5033
    %v5073 = vmul.f32 %v4784, %v5033
    %v5074 = vmul.f32 %v4785, %v5033
    %v5075 = vmul.f32 %v4786, %v5033
    %v5076 = vmul.f32 %v4787, %v5033
    %v5077 = vmul.f32 %v4788, %v5033
    %v5078 = vmul.f32 %v4789, %v5033
    %v5079 = vmul.f32 %v4790, %v5033
    %v5080 = vmul.f32 %v4791, %v5033
    %v5081 = vmul.f32 %v4792, %v5033
    %v5082 = vmul.f32 %v4793, %v5033
    %v5083 = vmul.f32 %v4794, %v5033
    %v5084 = vmul.f32 %v4795, %v5033
    %v5085 = vmul.f32 %v4796, %v5033
    %v5086 = vmul.f32 %v4797, %v5033
    %v5087 = vmul.f32 %v4798, %v5033
    %v5088 = vmul.f32 %v4799, %v5033
    %v5089 = vmul.f32 %v4800, %v5033
    %v5090 = vmul.f32 %v4801, %v5033
    %v5091 = vmul.f32 %v4802, %v5033
    %v5092 = vmul.f32 %v4803, %v5033
    %v5093 = vmul.f32 %v4804, %v5033
    %v5094 = vmul.f32 %v4805, %v5033
    %v5095 = vmul.f32 %v4806, %v5033
    %v5096 = vmul.f32 %v4807, %v5033
    %v5097 = vmul.f32 %v4808, %v5033
    %v5098 = vperm.slane %v5032, 3
    %v5099 = vadd.f32 %v5034, %v5098
    %v5100 = vadd.f32 %v5035, %v5098
    %v5101 = vadd.f32 %v5036, %v5098
    %v5102 = vadd.f32 %v5037, %v5098
    %v5103 = vadd.f32 %v5038, %v5098
    %v5104 = vadd.f32 %v5039, %v5098
    %v5105 = vadd.f32 %v5040, %v5098
    %v5106 = vadd.f32 %v5041, %v5098
    %v5107 = vadd.f32 %v5042, %v5098
    %v5108 = vadd.f32 %v5043, %v5098
    %v5109 = vadd.f32 %v5044, %v5098
    %v5110 = vadd.f32 %v5045, %v5098
    %v5111 = vadd.f32 %v5046, %v5098
    %v5112 = vadd.f32 %v5047, %v5098
    %v5113 = vadd.f32 %v5048, %v5098
    %v5114 = vadd.f32 %v5049, %v5098
    %v5115 = vadd.f32 %v5050, %v5098
    %v5116 = vadd.f32 %v5051, %v5098
    %v5117 = vadd.f32 %v5052, %v5098
    %v5118 = vadd.f32 %v5053, %v5098
    %v5119 = vadd.f32 %v5054, %v5098
    %v5120 = vadd.f32 %v5055, %v5098
    %v5121 = vadd.f32 %v5056, %v5098
    %v5122 = vadd.f32 %v5057, %v5098
    %v5123 = vadd.f32 %v5058, %v5098
    %v5124 = vadd.f32 %v5059, %v5098
    %v5125 = vadd.f32 %v5060, %v5098
    %v5126 = vadd.f32 %v5061, %v5098
    %v5127 = vadd.f32 %v5062, %v5098
    %v5128 = vadd.f32 %v5063, %v5098
    %v5129 = vadd.f32 %v5064, %v5098
    %v5130 = vadd.f32 %v5065, %v5098
    %v5131 = vadd.f32 %v5066, %v5098
    %v5132 = vadd.f32 %v5067, %v5098
    %v5133 = vadd.f32 %v5068, %v5098
    %v5134 = vadd.f32 %v5069, %v5098
    %v5135 = vadd.f32 %v5070, %v5098
    %v5136 = vadd.f32 %v5071, %v5098
    %v5137 = vadd.f32 %v5072, %v5098
    %v5138 = vadd.f32 %v5073, %v5098
    %v5139 = vadd.f32 %v5074, %v5098
    %v5140 = vadd.f32 %v5075, %v5098
    %v5141 = vadd.f32 %v5076, %v5098
    %v5142 = vadd.f32 %v5077, %v5098
    %v5143 = vadd.f32 %v5078, %v5098
    %v5144 = vadd.f32 %v5079, %v5098
    %v5145 = vadd.f32 %v5080, %v5098
    %v5146 = vadd.f32 %v5081, %v5098
    %v5147 = vadd.f32 %v5082, %v5098
    %v5148 = vadd.f32 %v5083, %v5098
    %v5149 = vadd.f32 %v5084, %v5098
    %v5150 = vadd.f32 %v5085, %v5098
    %v5151 = vadd.f32 %v5086, %v5098
    %v5152 = vadd.f32 %v5087, %v5098
    %v5153 = vadd.f32 %v5088, %v5098
    %v5154 = vadd.f32 %v5089, %v5098
    %v5155 = vadd.f32 %v5090, %v5098
    %v5156 = vadd.f32 %v5091, %v5098
    %v5157 = vadd.f32 %v5092, %v5098
    %v5158 = vadd.f32 %v5093, %v5098
    %v5159 = vadd.f32 %v5094, %v5098
    %v5160 = vadd.f32 %v5095, %v5098
    %v5161 = vadd.f32 %v5096, %v5098
    %v5162 = vadd.f32 %v5097, %v5098
    %v5163 = vadd.f32 %v5099, %v771
    %v5164 = vadd.f32 %v5100, %v772
    %v5165 = vadd.f32 %v5101, %v773
    %v5166 = vadd.f32 %v5102, %v774
    %v5167 = vadd.f32 %v5103, %v775
    %v5168 = vadd.f32 %v5104, %v776
    %v5169 = vadd.f32 %v5105, %v777
    %v5170 = vadd.f32 %v5106, %v778
    %v5171 = vadd.f32 %v5107, %v779
    %v5172 = vadd.f32 %v5108, %v780
    %v5173 = vadd.f32 %v5109, %v781
    %v5174 = vadd.f32 %v5110, %v782
    %v5175 = vadd.f32 %v5111, %v783
    %v5176 = vadd.f32 %v5112, %v784
    %v5177 = vadd.f32 %v5113, %v785
    %v5178 = vadd.f32 %v5114, %v786
    %v5179 = vadd.f32 %v5115, %v787
    %v5180 = vadd.f32 %v5116, %v788
    %v5181 = vadd.f32 %v5117, %v789
    %v5182 = vadd.f32 %v5118, %v790
    %v5183 = vadd.f32 %v5119, %v791
    %v5184 = vadd.f32 %v5120, %v792
    %v5185 = vadd.f32 %v5121, %v793
    %v5186 = vadd.f32 %v5122, %v794
    %v5187 = vadd.f32 %v5123, %v795
    %v5188 = vadd.f32 %v5124, %v796
    %v5189 = vadd.f32 %v5125, %v797
    %v5190 = vadd.f32 %v5126, %v798
    %v5191 = vadd.f32 %v5127, %v799
    %v5192 = vadd.f32 %v5128, %v800
    %v5193 = vadd.f32 %v5129, %v801
    %v5194 = vadd.f32 %v5130, %v802
    %v5195 = vadd.f32 %v5131, %v803
    %v5196 = vadd.f32 %v5132, %v804
    %v5197 = vadd.f32 %v5133, %v805
    %v5198 = vadd.f32 %v5134, %v806
    %v5199 = vadd.f32 %v5135, %v807
    %v5200 = vadd.f32 %v5136, %v808
    %v5201 = vadd.f32 %v5137, %v809
    %v5202 = vadd.f32 %v5138, %v810
    %v5203 = vadd.f32 %v5139, %v811
    %v5204 = vadd.f32 %v5140, %v812
    %v5205 = vadd.f32 %v5141, %v813
    %v5206 = vadd.f32 %v5142, %v814
    %v5207 = vadd.f32 %v5143, %v815
    %v5208 = vadd.f32 %v5144, %v816
    %v5209 = vadd.f32 %v5145, %v817
    %v5210 = vadd.f32 %v5146, %v818
    %v5211 = vadd.f32 %v5147, %v819
    %v5212 = vadd.f32 %v5148, %v820
    %v5213 = vadd.f32 %v5149, %v821
    %v5214 = vadd.f32 %v5150, %v822
    %v5215 = vadd.f32 %v5151, %v823
    %v5216 = vadd.f32 %v5152, %v824
    %v5217 = vadd.f32 %v5153, %v825
    %v5218 = vadd.f32 %v5154, %v826
    %v5219 = vadd.f32 %v5155, %v827
    %v5220 = vadd.f32 %v5156, %v828
    %v5221 = vadd.f32 %v5157, %v829
    %v5222 = vadd.f32 %v5158, %v830
    %v5223 = vadd.f32 %v5159, %v831
    %v5224 = vadd.f32 %v5160, %v832
    %v5225 = vadd.f32 %v5161, %v833
    %v5226 = vadd.f32 %v5162, %v834
    %v5227 = vmax.f32 %v5163, 0.0
    %v5228 = vmax.f32 %v5164, 0.0
    %v5229 = vmax.f32 %v5165, 0.0
    %v5230 = vmax.f32 %v5166, 0.0
    %v5231 = vmax.f32 %v5167, 0.0
    %v5232 = vmax.f32 %v5168, 0.0
    %v5233 = vmax.f32 %v5169, 0.0
    %v5234 = vmax.f32 %v5170, 0.0
    %v5235 = vmax.f32 %v5171, 0.0
    %v5236 = vmax.f32 %v5172, 0.0
    %v5237 = vmax.f32 %v5173, 0.0
    %v5238 = vmax.f32 %v5174, 0.0
    %v5239 = vmax.f32 %v5175, 0.0
    %v5240 = vmax.f32 %v5176, 0.0
    %v5241 = vmax.f32 %v5177, 0.0
    %v5242 = vmax.f32 %v5178, 0.0
    %v5243 = vmax.f32 %v5179, 0.0
    %v5244 = vmax.f32 %v5180, 0.0
    %v5245 = vmax.f32 %v5181, 0.0
    %v5246 = vmax.f32 %v5182, 0.0
    %v5247 = vmax.f32 %v5183, 0.0
    %v5248 = vmax.f32 %v5184, 0.0
    %v5249 = vmax.f32 %v5185, 0.0
    %v5250 = vmax.f32 %v5186, 0.0
    %v5251 = vmax.f32 %v5187, 0.0
    %v5252 = vmax.f32 %v5188, 0.0
    %v5253 = vmax.f32 %v5189, 0.0
    %v5254 = vmax.f32 %v5190, 0.0
    %v5255 = vmax.f32 %v5191, 0.0
    %v5256 = vmax.f32 %v5192, 0.0
    %v5257 = vmax.f32 %v5193, 0.0
    %v5258 = vmax.f32 %v5194, 0.0
    %v5259 = vmax.f32 %v5195, 0.0
    %v5260 = vmax.f32 %v5196, 0.0
    %v5261 = vmax.f32 %v5197, 0.0
    %v5262 = vmax.f32 %v5198, 0.0
    %v5263 = vmax.f32 %v5199, 0.0
    %v5264 = vmax.f32 %v5200, 0.0
    %v5265 = vmax.f32 %v5201, 0.0
    %v5266 = vmax.f32 %v5202, 0.0
    %v5267 = vmax.f32 %v5203, 0.0
    %v5268 = vmax.f32 %v5204, 0.0
    %v5269 = vmax.f32 %v5205, 0.0
    %v5270 = vmax.f32 %v5206, 0.0
    %v5271 = vmax.f32 %v5207, 0.0
    %v5272 = vmax.f32 %v5208, 0.0
    %v5273 = vmax.f32 %v5209, 0.0
    %v5274 = vmax.f32 %v5210, 0.0
    %v5275 = vmax.f32 %v5211, 0.0
    %v5276 = vmax.f32 %v5212, 0.0
    %v5277 = vmax.f32 %v5213, 0.0
    %v5278 = vmax.f32 %v5214, 0.0
    %v5279 = vmax.f32 %v5215, 0.0
    %v5280 = vmax.f32 %v5216, 0.0
    %v5281 = vmax.f32 %v5217, 0.0
    %v5282 = vmax.f32 %v5218, 0.0
    %v5283 = vmax.f32 %v5219, 0.0
    %v5284 = vmax.f32 %v5220, 0.0
    %v5285 = vmax.f32 %v5221, 0.0
    %v5286 = vmax.f32 %v5222, 0.0
    %v5287 = vmax.f32 %v5223, 0.0
    %v5288 = vmax.f32 %v5224, 0.0
    %v5289 = vmax.f32 %v5225, 0.0
    %v5290 = vmax.f32 %v5226, 0.0
    %5291 = vst [vmem:[#allocation11] sm:$0xff] %v5227
    %5292 = vst [vmem:[#allocation11 + $0x8] sm:$0xff] %v5228
    %5293 = vst [vmem:[#allocation11 + $0x10] sm:$0xff] %v5229
    %5294 = vst [vmem:[#allocation11 + $0x18] sm:$0xff] %v5230
    %5295 = vst [vmem:[#allocation11 + $0x20] sm:$0xff] %v5231
    %5296 = vst [vmem:[#allocation11 + $0x28] sm:$0xff] %v5232
    %5297 = vst [vmem:[#allocation11 + $0x30] sm:$0xff] %v5233
    %5298 = vst [vmem:[#allocation11 + $0x38] sm:$0xff] %v5234
    %5299 = vst [vmem:[#allocation11 + $0x40] sm:$0xff] %v5235
    %5300 = vst [vmem:[#allocation11 + $0x48] sm:$0xff] %v5236
    %5301 = vst [vmem:[#allocation11 + $0x50] sm:$0xff] %v5237
    %5302 = vst [vmem:[#allocation11 + $0x58] sm:$0xff] %v5238
    %5303 = vst [vmem:[#allocation11 + $0x60] sm:$0xff] %v5239
    %5304 = vst [vmem:[#allocation11 + $0x68] sm:$0xff] %v5240
    %5305 = vst [vmem:[#allocation11 + $0x70] sm:$0xff] %v5241
    %5306 = vst [vmem:[#allocation11 + $0x78] sm:$0xff] %v5242
    %5307 = vst [vmem:[#allocation11 + $0x80] sm:$0xff] %v5243
    %5308 = vst [vmem:[#allocation11 + $0x88] sm:$0xff] %v5244
    %5309 = vst [vmem:[#allocation11 + $0x90] sm:$0xff] %v5245
    %5310 = vst [vmem:[#allocation11 + $0x98] sm:$0xff] %v5246
    %5311 = vst [vmem:[#allocation11 + $0xa0] sm:$0xff] %v5247
    %5312 = vst [vmem:[#allocation11 + $0xa8] sm:$0xff] %v5248
    %5313 = vst [vmem:[#allocation11 + $0xb0] sm:$0xff] %v5249
    %5314 = vst [vmem:[#allocation11 + $0xb8] sm:$0xff] %v5250
    %5315 = vst [vmem:[#allocation11 + $0xc0] sm:$0xff] %v5251
    %5316 = vst [vmem:[#allocation11 + $0xc8] sm:$0xff] %v5252
    %5317 = vst [vmem:[#allocation11 + $0xd0] sm:$0xff] %v5253
    %5318 = vst [vmem:[#allocation11 + $0xd8] sm:$0xff] %v5254
    %5319 = vst [vmem:[#allocation11 + $0xe0] sm:$0xff] %v5255
    %5320 = vst [vmem:[#allocation11 + $0xe8] sm:$0xff] %v5256
    %5321 = vst [vmem:[#allocation11 + $0xf0] sm:$0xff] %v5257
    %5322 = vst [vmem:[#allocation11 + $0xf8] sm:$0xff] %v5258
    %5323 = vst [vmem:[#allocation11 + $0x100] sm:$0xff] %v5259
    %5324 = vst [vmem:[#allocation11 + $0x108] sm:$0xff] %v5260
    %5325 = vst [vmem:[#allocation11 + $0x110] sm:$0xff] %v5261
    %5326 = vst [vmem:[#allocation11 + $0x118] sm:$0xff] %v5262
    %5327 = vst [vmem:[#allocation11 + $0x120] sm:$0xff] %v5263
    %5328 = vst [vmem:[#allocation11 + $0x128] sm:$0xff] %v5264
    %5329 = vst [vmem:[#allocation11 + $0x130] sm:$0xff] %v5265
    %5330 = vst [vmem:[#allocation11 + $0x138] sm:$0xff] %v5266
    %5331 = vst [vmem:[#allocation11 + $0x140] sm:$0xff] %v5267
    %5332 = vst [vmem:[#allocation11 + $0x148] sm:$0xff] %v5268
    %5333 = vst [vmem:[#allocation11 + $0x150] sm:$0xff] %v5269
    %5334 = vst [vmem:[#allocation11 + $0x158] sm:$0xff] %v5270
    %5335 = vst [vmem:[#allocation11 + $0x160] sm:$0xff] %v5271
    %5336 = vst [vmem:[#allocation11 + $0x168] sm:$0xff] %v5272
    %5337 = vst [vmem:[#allocation11 + $0x170] sm:$0xff] %v5273
    %5338 = vst [vmem:[#allocation11 + $0x178] sm:$0xff] %v5274
    %5339 = vst [vmem:[#allocation11 + $0x180] sm:$0xff] %v5275
    %5340 = vst [vmem:[#allocation11 + $0x188] sm:$0xff] %v5276
    %5341 = vst [vmem:[#allocation11 + $0x190] sm:$0xff] %v5277
    %5342 = vst [vmem:[#allocation11 + $0x198] sm:$0xff] %v5278
    %5343 = vst [vmem:[#allocation11 + $0x1a0] sm:$0xff] %v5279
    %5344 = vst [vmem:[#allocation11 + $0x1a8] sm:$0xff] %v5280
    %5345 = vst [vmem:[#allocation11 + $0x1b0] sm:$0xff] %v5281
    %5346 = vst [vmem:[#allocation11 + $0x1b8] sm:$0xff] %v5282
    %5347 = vst [vmem:[#allocation11 + $0x1c0] sm:$0xff] %v5283
    %5348 = vst [vmem:[#allocation11 + $0x1c8] sm:$0xff] %v5284
    %5349 = vst [vmem:[#allocation11 + $0x1d0] sm:$0xff] %v5285
    %5350 = vst [vmem:[#allocation11 + $0x1d8] sm:$0xff] %v5286
    %5351 = vst [vmem:[#allocation11 + $0x1e0] sm:$0xff] %v5287
    %5352 = vst [vmem:[#allocation11 + $0x1e8] sm:$0xff] %v5288
    %5353 = vst [vmem:[#allocation11 + $0x1f0] sm:$0xff] %v5289
    %5354 = vst [vmem:[#allocation11 + $0x1f8] sm:$0xff] %v5290
    // Predicated region
    $region34: #{tpu_custom_call.1} parent=1 // pred_check
      _
    $region35: #{tpu_custom_call.1} parent=1 // pred_check_branch
      %5356 = sbr.rel (0) target = $region37
    $region36: #{tpu_custom_call.1} parent=1 // pred_region
      %5358 = vsyncadd [#allocation5], 0
      %s5359 = sshll.u32 [#allocation11], 4
      %s5360 = int_to_ptr.vmem [resolvable:$true] %s5359
      %s5361 = sshll.u32 %s4, 4
      %s5362 = int_to_ptr.hbm [resolvable:$true] %s5361
      %5367 = dma.vmem_to_hbm [thread:$0]  %s5360, 8192, %s5362, [#allocation5], 128, 128, 8
    $region37: #{tpu_custom_call.1} parent=1 // pred_fallthru
      _
    // Predicated region
    $region38: #{tpu_custom_call.1} parent=1 // pred_check
      _
    $region39: #{tpu_custom_call.1} parent=1 // pred_check_branch
      %5369 = sbr.rel (0) target = $region41
    $region40: #{tpu_custom_call.1} parent=1 // pred_region
      %5371 = dma.done [#allocation5], 8192
    $region41: #{tpu_custom_call.1} parent=1 // pred_fallthru
      _
    %5372 = vsyncpa [#allocation4], 1
    %5373 = vsyncpa [#allocation7], 1
    %5374 = vsyncpa [#allocation10], 1
    %5375 = vsyncpa [#allocation5], 1

</llo_original>
